<compile_context>
chip_gen: v7x
topology: tpu7x:2x2x1
jax: 0.10.0
libtpu: 0.0.40
codegen_flags: <defaults>
</compile_context>

<pallas_src>
import math

import numpy as np
import jax
import jax.numpy as jnp
from jax import lax
from jax.experimental import pallas as pl
from jax.experimental.pallas import tpu as pltpu

SELU_ALPHA = 1.6732632423543772
SELU_LAMBDA = 1.0507009873554805
BN_EPS = 1e-5
K_PAD = 128          # num_classes padded to one full 128-lane vreg row


def _selu(y):
    # exp(min(y,0)) keeps the untaken positive branch finite.
    return SELU_LAMBDA * jnp.where(
        y > 0.0, y, SELU_ALPHA * (jnp.exp(jnp.minimum(y, 0.0)) - 1.0))


# ----------------------------------------------------------------------------
# Fused Pallas kernel: all blocks + bilinear fuse, everything VMEM-resident.
# ----------------------------------------------------------------------------
def _make_kernel(cin0, cout0, s0, fuse_flags, k_pad):
    """Ref layout (all VMEM except w0, which is SMEM):
         x (B, cin0*s0) f32 | m_aug (B, M+1) f32 | w0 (cin0, cout0) f32 SMEM |
         c0row (1, (M+1)*k_pad) f32 |
         block 0 : shift f32 [, gmat bf16, gbias f32, fuse2 bf16]
         block i>0: wbig bf16, shift f32 [, gmat bf16, gbias f32, fuse2 bf16]
         out (B, k_pad) f32
    """
    num_blocks = len(fuse_flags)

    def kernel(*refs):
        x_ref, m_ref, w0_ref, c0_ref = refs[:4]
        out_ref = refs[-1]
        rest = refs[4:-1]

        m_aug = m_ref[...]                               # (B, M+1) f32
        n_meta = m_aug.shape[-1]

        # Bilinear accumulator over flattened (meta, padded-class) lanes.
        # Feature 0 is the constant 1, so its fuse row seeds the accumulator.
        t = c0_ref[...]                                  # (1, n_meta*k_pad)

        idx = 0
        # ---- block 0: 1x1 conv applied structurally (BN scale pre-folded) --
        shift0 = rest[idx]; idx += 1
        x = x_ref[...]                                   # (B, cin0*s0) f32
        cols = []
        for o in range(cout0):                           # cin*cout scalar FMAs
            acc = w0_ref[0, o] * x[:, 0:s0]
            for c in range(1, cin0):
                acc = acc + w0_ref[c, o] * x[:, c * s0:(c + 1) * s0]
            cols.append(acc)
        y = jnp.concatenate(cols, axis=-1) + shift0[...]
        y = _selu(y)
        if fuse_flags[0]:
            gmat, gbias, fw2 = rest[idx:idx + 3]; idx += 3
            f = jnp.dot(y.astype(jnp.bfloat16), gmat[...],
                        preferred_element_type=jnp.float32) + gbias[...]
            t = t + jnp.dot(f.astype(jnp.bfloat16), fw2[...],
                            preferred_element_type=jnp.float32)

        # ---- blocks 1..depth: depthwise conv as a lane-dense bf16 matmul ---
        for i in range(1, num_blocks):                   # static unroll
            wbig, shift = rest[idx], rest[idx + 1]; idx += 2
            y = jnp.dot(y.astype(jnp.bfloat16), wbig[...],
                        preferred_element_type=jnp.float32) + shift[...]
            y = _selu(y)
            if fuse_flags[i]:
                gmat, gbias, fw2 = rest[idx:idx + 3]; idx += 3
                f = jnp.dot(y.astype(jnp.bfloat16), gmat[...],
                            preferred_element_type=jnp.float32) + gbias[...]
                t = t + jnp.dot(f.astype(jnp.bfloat16), fw2[...],
                                preferred_element_type=jnp.float32)
            # dropout(p=0 / eval) == identity: y carries to the next block.

        # ---- meta contraction: out[b,k] = sum_j m[b,j] * t[b, j*k_pad + k] -
        acc = m_aug[:, 0:1] * t[:, 0:k_pad]
        for j in range(1, n_meta):                       # M+1 is tiny, static
            acc = acc + m_aug[:, j:j + 1] * t[:, j * k_pad:(j + 1) * k_pad]
        out_ref[...] = acc

    return kernel


def hradnet_forward(packed, x, m):
    """Run the fused HRadNet forward pass (one pallas_call)."""
    B = x.shape[0]
    x_flat = x.reshape(B, -1).astype(jnp.float32)
    m_aug = jnp.concatenate(
        [jnp.ones((B, 1), jnp.float32), m.reshape(B, -1).astype(jnp.float32)],
        axis=1)

    vmem = pl.BlockSpec(memory_space=pltpu.MemorySpace.VMEM)
    smem = pl.BlockSpec(memory_space=pltpu.MemorySpace.SMEM)

    inputs = [x_flat, m_aug, packed["w0"], packed["c0row"]]
    in_specs = [vmem, vmem, smem, vmem]
    fuse_flags = []
    for i, blk in enumerate(packed["blocks"]):
        if i > 0:
            inputs.append(blk["wbig"]); in_specs.append(vmem)
        inputs.append(blk["shift"]); in_specs.append(vmem)
        fuse_flags.append(blk["fuse"])
        if blk["fuse"]:
            inputs += [blk["gmat"], blk["gbias"], blk["fuse2"]]
            in_specs += [vmem, vmem, vmem]

    kernel = _make_kernel(packed["cin0"], packed["cout0"], packed["s0"],
                          tuple(fuse_flags), K_PAD)

    # VMEM budget derived from packed operand sizes (weights live once in
    # VMEM; activations are tiny).  Fail loudly before blowing v7x's 64 MiB.
    operand_bytes = sum(int(np.prod(a.shape)) * a.dtype.itemsize
                        for a in inputs)
    act_bytes = 8 * B * packed["max_width"] * 4
    vmem_limit = int(2 * operand_bytes + act_bytes + (8 << 20))
    assert vmem_limit <= (56 << 20), (
        f"packed operands ({operand_bytes / 2**20:.1f} MiB) exceed the v7x "
        "VMEM budget; reduce size or shard the weights")

    out = pl.pallas_call(
        kernel,
        in_specs=in_specs,
        out_specs=vmem,
        out_shape=jax.ShapeDtypeStruct((B, K_PAD), jnp.float32),
        compiler_params=pltpu.CompilerParams(vmem_limit_bytes=vmem_limit),
    )(*inputs)
    return out[:, :packed["num_classes"]]


# ----------------------------------------------------------------------------
# Init-time packing: convs -> structural / dense maps, BN folding, fuse slabs.
# ----------------------------------------------------------------------------
def _roundup(x, mult):
    return ((x + mult - 1) // mult) * mult


def _depthwise_conv_to_dense(w, cin, hin, win):
    """w: (Cout, 1, 7, 7), stride 2, pad 3, groups=cin.
    Returns (cin*hin*win, cout*hout*wout) dense map."""
    w = np.asarray(w, np.float32)
    cout = w.shape[0]
    mult = cout // cin
    hout, wout = hin // 2, win // 2
    big = np.zeros((cin * hin * win, cout * hout * wout), np.float32)
    for o in range(cout):
        c = o // mult
        for oh in range(hout):
            for ow in range(wout):
                col = (o * hout + oh) * wout + ow
                for kh in range(7):
                    ih = 2 * oh + kh - 3
                    if ih < 0 or ih >= hin:
                        continue
                    for kw in range(7):
                        iw = 2 * ow + kw - 3
                        if iw < 0 or iw >= win:
                            continue
                        big[(c * hin + ih) * win + iw, col] = w[o, 0, kh, kw]
    return big


def _fuse_slice_to_cols(fw_slice, k_pad):
    """fw_slice: (K, width, M+1) -> (width, (M+1)*k_pad), class axis padded."""
    K, width, m1 = fw_slice.shape
    out = np.zeros((width, m1 * k_pad), np.float32)
    for j in range(m1):
        out[:, j * k_pad:j * k_pad + K] = fw_slice[:, :, j].T
    return out


def pack_params(tp, size, in_channels):
    """Pack torch-like parameters into the kernel's precomputed operands."""
    fuse_w = np.asarray(tp["fuse_w"], np.float32)       # (K, F, M+1)
    K, _, m1 = fuse_w.shape
    layers = set(tp["layers"])

    blocks_packed = []
    h = w = size
    cin = in_channels
    offset = 1                                          # feature 0 == constant 1
    prev_width = None                                   # padded width of prev y
    max_width = 0
    w0_packed = None
    for i, blk in enumerate(tp["blocks"]):
        conv_w = np.asarray(blk["conv_w"], np.float32)
        cout = conv_w.shape[0]
        inv_std = 1.0 / np.sqrt(np.asarray(blk["bn_var"], np.float32) + BN_EPS)
        scale_c = np.asarray(blk["bn_gamma"], np.float32) * inv_std
        shift_c = ((np.asarray(blk["conv_b"], np.float32)
                    - np.asarray(blk["bn_mean"], np.float32)) * scale_c
                   + np.asarray(blk["bn_beta"], np.float32))

        entry = dict(fuse=(i in layers))
        if i == 0:
            hout, wout = h, w
            sout = hout * wout
            width = cout * sout
            width_pad = width            # per-channel slabs are lane aligned
            # scale-folded 1x1 weights: (Cin, Cout) scalars for SMEM.
            w0_packed = jnp.asarray(conv_w[:, :, 0, 0].T * scale_c[None, :],
                                    jnp.float32)
        else:
            hout, wout = h // 2, w // 2
            sout = hout * wout
            width = cout * sout
            width_pad = _roundup(width, 128)
            wbig = _depthwise_conv_to_dense(conv_w, cin, h, w)
            wbig = wbig * np.repeat(scale_c, sout)[None, :]   # fold BN scale
            wbig_p = np.zeros((prev_width, width_pad), np.float32)
            wbig_p[:wbig.shape[0], :width] = wbig
            # TODO(synk): block-1's dense depthwise map could be replaced by
            # 49 pltpu.roll + mask FMAs to cut its HBM bytes further.
            entry["wbig"] = jnp.asarray(wbig_p, jnp.bfloat16)

        shift_row = np.zeros((1, width_pad), np.float32)
        shift_row[0, :width] = np.repeat(shift_c, sout)
        entry["shift"] = jnp.asarray(shift_row)

        if entry["fuse"]:
            gw = np.asarray(blk["g_w"], np.float32)           # (L, sout)
            L = gw.shape[0]
            gmat = np.zeros((width_pad, cout * L), np.float32)
            for o in range(cout):
                gmat[o * sout:(o + 1) * sout, o * L:(o + 1) * L] = gw.T
            entry["gmat"] = jnp.asarray(gmat, jnp.bfloat16)
            entry["gbias"] = jnp.asarray(
                np.tile(np.asarray(blk["g_b"], np.float32), cout)[None, :])
            fw_slice = fuse_w[:, offset:offset + cout * L, :]  # (K,cout*L,M+1)
            entry["fuse2"] = jnp.asarray(_fuse_slice_to_cols(fw_slice, K_PAD),
                                         jnp.bfloat16)
            offset += cout * L

        blocks_packed.append(entry)
        max_width = max(max_width, width_pad)
        prev_width = width_pad
        cin = cout
        h, w = hout, wout

    c0row = np.zeros((1, m1 * K_PAD), np.float32)
    for j in range(m1):
        c0row[0, j * K_PAD:j * K_PAD + K] = fuse_w[:, 0, j]

    cout0 = np.asarray(tp["blocks"][0]["conv_w"]).shape[0]
    return dict(blocks=blocks_packed, c0row=jnp.asarray(c0row), w0=w0_packed,
                num_classes=K, cin0=in_channels, cout0=int(cout0),
                s0=size * size, max_width=max_width)


# ----------------------------------------------------------------------------
# Torch-faithful parameter construction and pure-JAX reference.
# ----------------------------------------------------------------------------
def init_torch_like_params(key, size, meta_size, num_classes, in_channels,
                           linear_scale=1):
    depth = int(math.log2(size & -size))
    scale = size // (size & -size)
    channels = [2 ** (i + 2) for i in range(depth + 1)]
    blocks = []
    cin = in_channels
    for i in range(depth + 1):
        cout = channels[i]
        key, k1, k2, k3, k4, k5, k6, k7, k8 = jax.random.split(key, 9)
        if i == 0:
            w = jax.random.normal(k1, (cout, cin, 1, 1), jnp.float32)
            gsize = size
        else:
            w = jax.random.normal(k1, (cout, 1, 7, 7), jnp.float32)
            gsize = (2 ** (depth - i)) * scale
        w = w * math.sqrt(1.0 / w.size)
        blocks.append(dict(
            conv_w=w,
            conv_b=0.1 * jax.random.normal(k2, (cout,), jnp.float32),
            bn_gamma=jax.random.uniform(k3, (cout,), jnp.float32, 0.5, 1.5),
            bn_beta=0.1 * jax.random.normal(k4, (cout,), jnp.float32),
            bn_mean=0.1 * jax.random.normal(k5, (cout,), jnp.float32),
            bn_var=jax.random.uniform(k6, (cout,), jnp.float32, 0.5, 1.5),
            g_w=jax.random.uniform(k7, (linear_scale, gsize * gsize),
                                   jnp.float32, -1.0 / gsize, 1.0 / gsize),
            g_b=jax.random.uniform(k8, (linear_scale,), jnp.float32,
                                   -1.0 / gsize, 1.0 / gsize)))
        cin = cout
    layers = list(range(depth + 1))
    out_features = sum(channels[i] for i in layers) * linear_scale + 1
    key, kf = jax.random.split(key)
    bound = 1.0 / math.sqrt(out_features)
    fuse_w = jax.random.uniform(kf, (num_classes, out_features, meta_size + 1),
                                jnp.float32, -bound, bound)
    return dict(blocks=blocks, layers=layers, fuse_w=fuse_w, channels=channels)


def reference_forward(tp, x, m):
    """Pure-JAX reference mirroring the PyTorch ops (eval mode, f32)."""
    B = x.shape[0]
    hi = lax.Precision.HIGHEST
    feats = [jnp.ones((B, 1), jnp.float32)]
    for i, blk in enumerate(tp["blocks"]):
        w = blk["conv_w"]
        cin = x.shape[1]
        if i == 0:
            y = lax.conv_general_dilated(
                x, w, (1, 1), ((0, 0), (0, 0)),
                dimension_numbers=("NCHW", "OIHW", "NCHW"), precision=hi)
        else:
            y = lax.conv_general_dilated(
                x, w, (2, 2), ((3, 3), (3, 3)),
                dimension_numbers=("NCHW", "OIHW", "NCHW"),
                feature_group_count=cin, precision=hi)
        y = y + blk["conv_b"][None, :, None, None]
        inv = 1.0 / jnp.sqrt(blk["bn_var"] + BN_EPS)
        y = (y - blk["bn_mean"][None, :, None, None]) * inv[None, :, None, None]
        y = y * blk["bn_gamma"][None, :, None, None] + blk["bn_beta"][None, :, None, None]
        y = jax.nn.selu(y)
        yf = y.reshape(B, y.shape[1], -1)
        f = jnp.einsum("bcs,ls->bcl", yf, blk["g_w"], precision=hi)
        f = f + blk["g_b"][None, None, :]
        x = y                                            # dropout(p=0) == identity
        if i in tp["layers"]:
            feats.append(f.reshape(B, -1))
    features = jnp.concatenate(feats, axis=1)
    mm = jnp.concatenate([jnp.ones((B, 1), jnp.float32), m.reshape(B, -1)], axis=1)
    return jnp.einsum("bi,kij,bj->bk", features, tp["fuse_w"], mm, precision=hi)


# ----------------------------------------------------------------------------
if __name__ == "__main__":
    key = jax.random.PRNGKey(0)
    kx, km, kp = jax.random.split(key, 3)

    size, meta_size, num_classes, in_channels, batch = 16, 3, 5, 4, 2
    x = jax.random.normal(kx, (batch, in_channels, size, size), jnp.float32)
    meta = jax.random.normal(km, (batch, meta_size), jnp.float32)

    torch_params = init_torch_like_params(kp, size, meta_size, num_classes,
                                          in_channels)
    packed = pack_params(torch_params, size, in_channels)

    out = hradnet_forward(packed, x, meta)
    out = jax.block_until_ready(out)
    assert out.shape == (batch, num_classes)

    ref = reference_forward(torch_params, x, meta)
    # bf16 weights on the MXU path -> relaxed tolerance (the f32 variant of
    # this kernel was validated at 1e-5 previously).
    np.testing.assert_allclose(np.asarray(out), np.asarray(ref),
                               rtol=5e-2, atol=5e-2)

    print("KERNEL_OK")
</pallas_src>

<mosaic_0001>
module attributes {stable_mosaic.version = 11 : i64} {
  func.func @kernel(%arg0: memref<2x1024xf32, #tpu.memory_space<vmem>>, %arg1: memref<2x4xf32, #tpu.memory_space<vmem>>, %arg2: memref<4x4xf32, #tpu.memory_space<smem>>, %arg3: memref<1x512xf32, #tpu.memory_space<vmem>>, %arg4: memref<1x1024xf32, #tpu.memory_space<vmem>>, %arg5: memref<1024x4xbf16, #tpu.memory_space<vmem>>, %arg6: memref<1x4xf32, #tpu.memory_space<vmem>>, %arg7: memref<4x512xbf16, #tpu.memory_space<vmem>>, %arg8: memref<1024x512xbf16, #tpu.memory_space<vmem>>, %arg9: memref<1x512xf32, #tpu.memory_space<vmem>>, %arg10: memref<512x8xbf16, #tpu.memory_space<vmem>>, %arg11: memref<1x8xf32, #tpu.memory_space<vmem>>, %arg12: memref<8x512xbf16, #tpu.memory_space<vmem>>, %arg13: memref<512x256xbf16, #tpu.memory_space<vmem>>, %arg14: memref<1x256xf32, #tpu.memory_space<vmem>>, %arg15: memref<256x16xbf16, #tpu.memory_space<vmem>>, %arg16: memref<1x16xf32, #tpu.memory_space<vmem>>, %arg17: memref<16x512xbf16, #tpu.memory_space<vmem>>, %arg18: memref<256x128xbf16, #tpu.memory_space<vmem>>, %arg19: memref<1x128xf32, #tpu.memory_space<vmem>>, %arg20: memref<128x32xbf16, #tpu.memory_space<vmem>>, %arg21: memref<1x32xf32, #tpu.memory_space<vmem>>, %arg22: memref<32x512xbf16, #tpu.memory_space<vmem>>, %arg23: memref<128x128xbf16, #tpu.memory_space<vmem>>, %arg24: memref<1x128xf32, #tpu.memory_space<vmem>>, %arg25: memref<128x64xbf16, #tpu.memory_space<vmem>>, %arg26: memref<1x64xf32, #tpu.memory_space<vmem>>, %arg27: memref<64x512xbf16, #tpu.memory_space<vmem>>, %arg28: memref<2x128xf32, #tpu.memory_space<vmem>>) attributes {dimension_semantics = [], scalar_prefetch = 0 : i64, scratch_operands = 0 : i64, tpu.core_type = #tpu.core_type<tc>} {
    %c0 = arith.constant 0 : index
    %c0_0 = arith.constant 0 : index
    %0 = vector.load %arg1[%c0, %c0_0] : memref<2x4xf32, #tpu.memory_space<vmem>>, vector<2x4xf32>
    %c0_1 = arith.constant 0 : index
    %c0_2 = arith.constant 0 : index
    %1 = vector.load %arg3[%c0_1, %c0_2] : memref<1x512xf32, #tpu.memory_space<vmem>>, vector<1x512xf32>
    %c0_3 = arith.constant 0 : index
    %c0_4 = arith.constant 0 : index
    %2 = vector.load %arg0[%c0_3, %c0_4] : memref<2x1024xf32, #tpu.memory_space<vmem>>, vector<2x1024xf32>
    %c0_5 = arith.constant 0 : index
    %c0_6 = arith.constant 0 : index
    %3 = memref.load %arg2[%c0_5, %c0_6] : memref<4x4xf32, #tpu.memory_space<smem>>
    %4 = vector.extract_strided_slice %2 {offsets = [0, 0], sizes = [2, 256], strides = [1, 1]} : vector<2x1024xf32> to vector<2x256xf32>
    %5 = vector.broadcast %3 : f32 to vector<2x256xf32>
    %6 = arith.mulf %5, %4 : vector<2x256xf32>
    %c1 = arith.constant 1 : index
    %c0_7 = arith.constant 0 : index
    %7 = memref.load %arg2[%c1, %c0_7] : memref<4x4xf32, #tpu.memory_space<smem>>
    %8 = vector.extract_strided_slice %2 {offsets = [0, 256], sizes = [2, 256], strides = [1, 1]} : vector<2x1024xf32> to vector<2x256xf32>
    %9 = vector.broadcast %7 : f32 to vector<2x256xf32>
    %10 = arith.mulf %9, %8 : vector<2x256xf32>
    %11 = arith.addf %6, %10 : vector<2x256xf32>
    %c2 = arith.constant 2 : index
    %c0_8 = arith.constant 0 : index
    %12 = memref.load %arg2[%c2, %c0_8] : memref<4x4xf32, #tpu.memory_space<smem>>
    %13 = vector.extract_strided_slice %2 {offsets = [0, 512], sizes = [2, 256], strides = [1, 1]} : vector<2x1024xf32> to vector<2x256xf32>
    %14 = vector.broadcast %12 : f32 to vector<2x256xf32>
    %15 = arith.mulf %14, %13 : vector<2x256xf32>
    %16 = arith.addf %11, %15 : vector<2x256xf32>
    %c3 = arith.constant 3 : index
    %c0_9 = arith.constant 0 : index
    %17 = memref.load %arg2[%c3, %c0_9] : memref<4x4xf32, #tpu.memory_space<smem>>
    %18 = vector.extract_strided_slice %2 {offsets = [0, 768], sizes = [2, 256], strides = [1, 1]} : vector<2x1024xf32> to vector<2x256xf32>
    %19 = vector.broadcast %17 : f32 to vector<2x256xf32>
    %20 = arith.mulf %19, %18 : vector<2x256xf32>
    %21 = arith.addf %16, %20 : vector<2x256xf32>
    %c0_10 = arith.constant 0 : index
    %c1_11 = arith.constant 1 : index
    %22 = memref.load %arg2[%c0_10, %c1_11] : memref<4x4xf32, #tpu.memory_space<smem>>
    %23 = vector.extract_strided_slice %2 {offsets = [0, 0], sizes = [2, 256], strides = [1, 1]} : vector<2x1024xf32> to vector<2x256xf32>
    %24 = vector.broadcast %22 : f32 to vector<2x256xf32>
    %25 = arith.mulf %24, %23 : vector<2x256xf32>
    %c1_12 = arith.constant 1 : index
    %c1_13 = arith.constant 1 : index
    %26 = memref.load %arg2[%c1_12, %c1_13] : memref<4x4xf32, #tpu.memory_space<smem>>
    %27 = vector.extract_strided_slice %2 {offsets = [0, 256], sizes = [2, 256], strides = [1, 1]} : vector<2x1024xf32> to vector<2x256xf32>
    %28 = vector.broadcast %26 : f32 to vector<2x256xf32>
    %29 = arith.mulf %28, %27 : vector<2x256xf32>
    %30 = arith.addf %25, %29 : vector<2x256xf32>
    %c2_14 = arith.constant 2 : index
    %c1_15 = arith.constant 1 : index
    %31 = memref.load %arg2[%c2_14, %c1_15] : memref<4x4xf32, #tpu.memory_space<smem>>
    %32 = vector.extract_strided_slice %2 {offsets = [0, 512], sizes = [2, 256], strides = [1, 1]} : vector<2x1024xf32> to vector<2x256xf32>
    %33 = vector.broadcast %31 : f32 to vector<2x256xf32>
    %34 = arith.mulf %33, %32 : vector<2x256xf32>
    %35 = arith.addf %30, %34 : vector<2x256xf32>
    %c3_16 = arith.constant 3 : index
    %c1_17 = arith.constant 1 : index
    %36 = memref.load %arg2[%c3_16, %c1_17] : memref<4x4xf32, #tpu.memory_space<smem>>
    %37 = vector.extract_strided_slice %2 {offsets = [0, 768], sizes = [2, 256], strides = [1, 1]} : vector<2x1024xf32> to vector<2x256xf32>
    %38 = vector.broadcast %36 : f32 to vector<2x256xf32>
    %39 = arith.mulf %38, %37 : vector<2x256xf32>
    %40 = arith.addf %35, %39 : vector<2x256xf32>
    %c0_18 = arith.constant 0 : index
    %c2_19 = arith.constant 2 : index
    %41 = memref.load %arg2[%c0_18, %c2_19] : memref<4x4xf32, #tpu.memory_space<smem>>
    %42 = vector.extract_strided_slice %2 {offsets = [0, 0], sizes = [2, 256], strides = [1, 1]} : vector<2x1024xf32> to vector<2x256xf32>
    %43 = vector.broadcast %41 : f32 to vector<2x256xf32>
    %44 = arith.mulf %43, %42 : vector<2x256xf32>
    %c1_20 = arith.constant 1 : index
    %c2_21 = arith.constant 2 : index
    %45 = memref.load %arg2[%c1_20, %c2_21] : memref<4x4xf32, #tpu.memory_space<smem>>
    %46 = vector.extract_strided_slice %2 {offsets = [0, 256], sizes = [2, 256], strides = [1, 1]} : vector<2x1024xf32> to vector<2x256xf32>
    %47 = vector.broadcast %45 : f32 to vector<2x256xf32>
    %48 = arith.mulf %47, %46 : vector<2x256xf32>
    %49 = arith.addf %44, %48 : vector<2x256xf32>
    %c2_22 = arith.constant 2 : index
    %c2_23 = arith.constant 2 : index
    %50 = memref.load %arg2[%c2_22, %c2_23] : memref<4x4xf32, #tpu.memory_space<smem>>
    %51 = vector.extract_strided_slice %2 {offsets = [0, 512], sizes = [2, 256], strides = [1, 1]} : vector<2x1024xf32> to vector<2x256xf32>
    %52 = vector.broadcast %50 : f32 to vector<2x256xf32>
    %53 = arith.mulf %52, %51 : vector<2x256xf32>
    %54 = arith.addf %49, %53 : vector<2x256xf32>
    %c3_24 = arith.constant 3 : index
    %c2_25 = arith.constant 2 : index
    %55 = memref.load %arg2[%c3_24, %c2_25] : memref<4x4xf32, #tpu.memory_space<smem>>
    %56 = vector.extract_strided_slice %2 {offsets = [0, 768], sizes = [2, 256], strides = [1, 1]} : vector<2x1024xf32> to vector<2x256xf32>
    %57 = vector.broadcast %55 : f32 to vector<2x256xf32>
    %58 = arith.mulf %57, %56 : vector<2x256xf32>
    %59 = arith.addf %54, %58 : vector<2x256xf32>
    %c0_26 = arith.constant 0 : index
    %c3_27 = arith.constant 3 : index
    %60 = memref.load %arg2[%c0_26, %c3_27] : memref<4x4xf32, #tpu.memory_space<smem>>
    %61 = vector.extract_strided_slice %2 {offsets = [0, 0], sizes = [2, 256], strides = [1, 1]} : vector<2x1024xf32> to vector<2x256xf32>
    %62 = vector.broadcast %60 : f32 to vector<2x256xf32>
    %63 = arith.mulf %62, %61 : vector<2x256xf32>
    %c1_28 = arith.constant 1 : index
    %c3_29 = arith.constant 3 : index
    %64 = memref.load %arg2[%c1_28, %c3_29] : memref<4x4xf32, #tpu.memory_space<smem>>
    %65 = vector.extract_strided_slice %2 {offsets = [0, 256], sizes = [2, 256], strides = [1, 1]} : vector<2x1024xf32> to vector<2x256xf32>
    %66 = vector.broadcast %64 : f32 to vector<2x256xf32>
    %67 = arith.mulf %66, %65 : vector<2x256xf32>
    %68 = arith.addf %63, %67 : vector<2x256xf32>
    %c2_30 = arith.constant 2 : index
    %c3_31 = arith.constant 3 : index
    %69 = memref.load %arg2[%c2_30, %c3_31] : memref<4x4xf32, #tpu.memory_space<smem>>
    %70 = vector.extract_strided_slice %2 {offsets = [0, 512], sizes = [2, 256], strides = [1, 1]} : vector<2x1024xf32> to vector<2x256xf32>
    %71 = vector.broadcast %69 : f32 to vector<2x256xf32>
    %72 = arith.mulf %71, %70 : vector<2x256xf32>
    %73 = arith.addf %68, %72 : vector<2x256xf32>
    %c3_32 = arith.constant 3 : index
    %c3_33 = arith.constant 3 : index
    %74 = memref.load %arg2[%c3_32, %c3_33] : memref<4x4xf32, #tpu.memory_space<smem>>
    %75 = vector.extract_strided_slice %2 {offsets = [0, 768], sizes = [2, 256], strides = [1, 1]} : vector<2x1024xf32> to vector<2x256xf32>
    %76 = vector.broadcast %74 : f32 to vector<2x256xf32>
    %77 = arith.mulf %76, %75 : vector<2x256xf32>
    %78 = arith.addf %73, %77 : vector<2x256xf32>
    %79 = tpu.concatenate %21, %40, %59, %78 in 1 : vector<2x256xf32>, vector<2x256xf32>, vector<2x256xf32>, vector<2x256xf32> -> vector<2x1024xf32>
    %c0_34 = arith.constant 0 : index
    %c0_35 = arith.constant 0 : index
    %80 = vector.load %arg4[%c0_34, %c0_35] : memref<1x1024xf32, #tpu.memory_space<vmem>>, vector<1x1024xf32>
    %81 = vector.broadcast %80 : vector<1x1024xf32> to vector<2x1024xf32>
    %82 = arith.addf %79, %81 : vector<2x1024xf32>
    %cst = arith.constant 0.000000e+00 : f32
    %83 = vector.broadcast %cst : f32 to vector<2x1024xf32>
    %84 = arith.cmpf ogt, %82, %83 : vector<2x1024xf32>
    %cst_36 = arith.constant 0.000000e+00 : f32
    %85 = vector.broadcast %cst_36 : f32 to vector<2x1024xf32>
    %86 = arith.minimumf %82, %85 : vector<2x1024xf32>
    %87 = math.exp %86 : vector<2x1024xf32>
    %cst_37 = arith.constant 1.000000e+00 : f32
    %88 = vector.broadcast %cst_37 : f32 to vector<2x1024xf32>
    %89 = arith.subf %87, %88 : vector<2x1024xf32>
    %cst_38 = arith.constant 1.67326319 : f32
    %90 = vector.broadcast %cst_38 : f32 to vector<2x1024xf32>
    %91 = arith.mulf %90, %89 : vector<2x1024xf32>
    %92 = arith.select %84, %82, %91 : vector<2x1024xi1>, vector<2x1024xf32>
    %cst_39 = arith.constant 1.05070102 : f32
    %93 = vector.broadcast %cst_39 : f32 to vector<2x1024xf32>
    %94 = arith.mulf %93, %92 : vector<2x1024xf32>
    %95 = arith.truncf %94 : vector<2x1024xf32> to vector<2x1024xbf16>
    %c0_40 = arith.constant 0 : index
    %c0_41 = arith.constant 0 : index
    %96 = vector.load %arg5[%c0_40, %c0_41] : memref<1024x4xbf16, #tpu.memory_space<vmem>>, vector<1024x4xbf16>
    %cst_42 = arith.constant dense<0.000000e+00> : vector<2x4xf32>
    %97 = tpu.matmul %95, %96, %cst_42 {dimension_numbers = #tpu.dot_dimension_numbers<[1], [0], [0], [1], [0, 0, 1, 1], [], []>} : vector<2x1024xbf16>, vector<1024x4xbf16>, vector<2x4xf32> -> vector<2x4xf32>
    %c0_43 = arith.constant 0 : index
    %c0_44 = arith.constant 0 : index
    %98 = vector.load %arg6[%c0_43, %c0_44] : memref<1x4xf32, #tpu.memory_space<vmem>>, vector<1x4xf32>
    %99 = vector.broadcast %98 : vector<1x4xf32> to vector<2x4xf32>
    %100 = arith.addf %97, %99 : vector<2x4xf32>
    %101 = arith.truncf %100 : vector<2x4xf32> to vector<2x4xbf16>
    %c0_45 = arith.constant 0 : index
    %c0_46 = arith.constant 0 : index
    %102 = vector.load %arg7[%c0_45, %c0_46] : memref<4x512xbf16, #tpu.memory_space<vmem>>, vector<4x512xbf16>
    %cst_47 = arith.constant dense<0.000000e+00> : vector<2x512xf32>
    %103 = tpu.matmul %101, %102, %cst_47 {dimension_numbers = #tpu.dot_dimension_numbers<[1], [0], [0], [1], [0, 0, 1, 1], [], []>} : vector<2x4xbf16>, vector<4x512xbf16>, vector<2x512xf32> -> vector<2x512xf32>
    %104 = vector.broadcast %1 : vector<1x512xf32> to vector<2x512xf32>
    %105 = arith.addf %104, %103 : vector<2x512xf32>
    %106 = arith.truncf %94 : vector<2x1024xf32> to vector<2x1024xbf16>
    %c0_48 = arith.constant 0 : index
    %c0_49 = arith.constant 0 : index
    %107 = vector.load %arg8[%c0_48, %c0_49] : memref<1024x512xbf16, #tpu.memory_space<vmem>>, vector<1024x512xbf16>
    %cst_50 = arith.constant dense<0.000000e+00> : vector<2x512xf32>
    %108 = tpu.matmul %106, %107, %cst_50 {dimension_numbers = #tpu.dot_dimension_numbers<[1], [0], [0], [1], [0, 0, 1, 1], [], []>} : vector<2x1024xbf16>, vector<1024x512xbf16>, vector<2x512xf32> -> vector<2x512xf32>
    %c0_51 = arith.constant 0 : index
    %c0_52 = arith.constant 0 : index
    %109 = vector.load %arg9[%c0_51, %c0_52] : memref<1x512xf32, #tpu.memory_space<vmem>>, vector<1x512xf32>
    %110 = vector.broadcast %109 : vector<1x512xf32> to vector<2x512xf32>
    %111 = arith.addf %108, %110 : vector<2x512xf32>
    %cst_53 = arith.constant 0.000000e+00 : f32
    %112 = vector.broadcast %cst_53 : f32 to vector<2x512xf32>
    %113 = arith.cmpf ogt, %111, %112 : vector<2x512xf32>
    %cst_54 = arith.constant 0.000000e+00 : f32
    %114 = vector.broadcast %cst_54 : f32 to vector<2x512xf32>
    %115 = arith.minimumf %111, %114 : vector<2x512xf32>
    %116 = math.exp %115 : vector<2x512xf32>
    %cst_55 = arith.constant 1.000000e+00 : f32
    %117 = vector.broadcast %cst_55 : f32 to vector<2x512xf32>
    %118 = arith.subf %116, %117 : vector<2x512xf32>
    %cst_56 = arith.constant 1.67326319 : f32
    %119 = vector.broadcast %cst_56 : f32 to vector<2x512xf32>
    %120 = arith.mulf %119, %118 : vector<2x512xf32>
    %121 = arith.select %113, %111, %120 : vector<2x512xi1>, vector<2x512xf32>
    %cst_57 = arith.constant 1.05070102 : f32
    %122 = vector.broadcast %cst_57 : f32 to vector<2x512xf32>
    %123 = arith.mulf %122, %121 : vector<2x512xf32>
    %124 = arith.truncf %123 : vector<2x512xf32> to vector<2x512xbf16>
    %c0_58 = arith.constant 0 : index
    %c0_59 = arith.constant 0 : index
    %125 = vector.load %arg10[%c0_58, %c0_59] : memref<512x8xbf16, #tpu.memory_space<vmem>>, vector<512x8xbf16>
    %cst_60 = arith.constant dense<0.000000e+00> : vector<2x8xf32>
    %126 = tpu.matmul %124, %125, %cst_60 {dimension_numbers = #tpu.dot_dimension_numbers<[1], [0], [0], [1], [0, 0, 1, 1], [], []>} : vector<2x512xbf16>, vector<512x8xbf16>, vector<2x8xf32> -> vector<2x8xf32>
    %c0_61 = arith.constant 0 : index
    %c0_62 = arith.constant 0 : index
    %127 = vector.load %arg11[%c0_61, %c0_62] : memref<1x8xf32, #tpu.memory_space<vmem>>, vector<1x8xf32>
    %128 = vector.broadcast %127 : vector<1x8xf32> to vector<2x8xf32>
    %129 = arith.addf %126, %128 : vector<2x8xf32>
    %130 = arith.truncf %129 : vector<2x8xf32> to vector<2x8xbf16>
    %c0_63 = arith.constant 0 : index
    %c0_64 = arith.constant 0 : index
    %131 = vector.load %arg12[%c0_63, %c0_64] : memref<8x512xbf16, #tpu.memory_space<vmem>>, vector<8x512xbf16>
    %cst_65 = arith.constant dense<0.000000e+00> : vector<2x512xf32>
    %132 = tpu.matmul %130, %131, %cst_65 {dimension_numbers = #tpu.dot_dimension_numbers<[1], [0], [0], [1], [0, 0, 1, 1], [], []>} : vector<2x8xbf16>, vector<8x512xbf16>, vector<2x512xf32> -> vector<2x512xf32>
    %133 = arith.addf %105, %132 : vector<2x512xf32>
    %134 = arith.truncf %123 : vector<2x512xf32> to vector<2x512xbf16>
    %c0_66 = arith.constant 0 : index
    %c0_67 = arith.constant 0 : index
    %135 = vector.load %arg13[%c0_66, %c0_67] : memref<512x256xbf16, #tpu.memory_space<vmem>>, vector<512x256xbf16>
    %cst_68 = arith.constant dense<0.000000e+00> : vector<2x256xf32>
    %136 = tpu.matmul %134, %135, %cst_68 {dimension_numbers = #tpu.dot_dimension_numbers<[1], [0], [0], [1], [0, 0, 1, 1], [], []>} : vector<2x512xbf16>, vector<512x256xbf16>, vector<2x256xf32> -> vector<2x256xf32>
    %c0_69 = arith.constant 0 : index
    %c0_70 = arith.constant 0 : index
    %137 = vector.load %arg14[%c0_69, %c0_70] : memref<1x256xf32, #tpu.memory_space<vmem>>, vector<1x256xf32>
    %138 = vector.broadcast %137 : vector<1x256xf32> to vector<2x256xf32>
    %139 = arith.addf %136, %138 : vector<2x256xf32>
    %cst_71 = arith.constant 0.000000e+00 : f32
    %140 = vector.broadcast %cst_71 : f32 to vector<2x256xf32>
    %141 = arith.cmpf ogt, %139, %140 : vector<2x256xf32>
    %cst_72 = arith.constant 0.000000e+00 : f32
    %142 = vector.broadcast %cst_72 : f32 to vector<2x256xf32>
    %143 = arith.minimumf %139, %142 : vector<2x256xf32>
    %144 = math.exp %143 : vector<2x256xf32>
    %cst_73 = arith.constant 1.000000e+00 : f32
    %145 = vector.broadcast %cst_73 : f32 to vector<2x256xf32>
    %146 = arith.subf %144, %145 : vector<2x256xf32>
    %cst_74 = arith.constant 1.67326319 : f32
    %147 = vector.broadcast %cst_74 : f32 to vector<2x256xf32>
    %148 = arith.mulf %147, %146 : vector<2x256xf32>
    %149 = arith.select %141, %139, %148 : vector<2x256xi1>, vector<2x256xf32>
    %cst_75 = arith.constant 1.05070102 : f32
    %150 = vector.broadcast %cst_75 : f32 to vector<2x256xf32>
    %151 = arith.mulf %150, %149 : vector<2x256xf32>
    %152 = arith.truncf %151 : vector<2x256xf32> to vector<2x256xbf16>
    %c0_76 = arith.constant 0 : index
    %c0_77 = arith.constant 0 : index
    %153 = vector.load %arg15[%c0_76, %c0_77] : memref<256x16xbf16, #tpu.memory_space<vmem>>, vector<256x16xbf16>
    %cst_78 = arith.constant dense<0.000000e+00> : vector<2x16xf32>
    %154 = tpu.matmul %152, %153, %cst_78 {dimension_numbers = #tpu.dot_dimension_numbers<[1], [0], [0], [1], [0, 0, 1, 1], [], []>} : vector<2x256xbf16>, vector<256x16xbf16>, vector<2x16xf32> -> vector<2x16xf32>
    %c0_79 = arith.constant 0 : index
    %c0_80 = arith.constant 0 : index
    %155 = vector.load %arg16[%c0_79, %c0_80] : memref<1x16xf32, #tpu.memory_space<vmem>>, vector<1x16xf32>
    %156 = vector.broadcast %155 : vector<1x16xf32> to vector<2x16xf32>
    %157 = arith.addf %154, %156 : vector<2x16xf32>
    %158 = arith.truncf %157 : vector<2x16xf32> to vector<2x16xbf16>
    %c0_81 = arith.constant 0 : index
    %c0_82 = arith.constant 0 : index
    %159 = vector.load %arg17[%c0_81, %c0_82] : memref<16x512xbf16, #tpu.memory_space<vmem>>, vector<16x512xbf16>
    %cst_83 = arith.constant dense<0.000000e+00> : vector<2x512xf32>
    %160 = tpu.matmul %158, %159, %cst_83 {dimension_numbers = #tpu.dot_dimension_numbers<[1], [0], [0], [1], [0, 0, 1, 1], [], []>} : vector<2x16xbf16>, vector<16x512xbf16>, vector<2x512xf32> -> vector<2x512xf32>
    %161 = arith.addf %133, %160 : vector<2x512xf32>
    %162 = arith.truncf %151 : vector<2x256xf32> to vector<2x256xbf16>
    %c0_84 = arith.constant 0 : index
    %c0_85 = arith.constant 0 : index
    %163 = vector.load %arg18[%c0_84, %c0_85] : memref<256x128xbf16, #tpu.memory_space<vmem>>, vector<256x128xbf16>
    %cst_86 = arith.constant dense<0.000000e+00> : vector<2x128xf32>
    %164 = tpu.matmul %162, %163, %cst_86 {dimension_numbers = #tpu.dot_dimension_numbers<[1], [0], [0], [1], [0, 0, 1, 1], [], []>} : vector<2x256xbf16>, vector<256x128xbf16>, vector<2x128xf32> -> vector<2x128xf32>
    %c0_87 = arith.constant 0 : index
    %c0_88 = arith.constant 0 : index
    %165 = vector.load %arg19[%c0_87, %c0_88] : memref<1x128xf32, #tpu.memory_space<vmem>>, vector<1x128xf32>
    %166 = vector.broadcast %165 : vector<1x128xf32> to vector<2x128xf32>
    %167 = arith.addf %164, %166 : vector<2x128xf32>
    %cst_89 = arith.constant 0.000000e+00 : f32
    %168 = vector.broadcast %cst_89 : f32 to vector<2x128xf32>
    %169 = arith.cmpf ogt, %167, %168 : vector<2x128xf32>
    %cst_90 = arith.constant 0.000000e+00 : f32
    %170 = vector.broadcast %cst_90 : f32 to vector<2x128xf32>
    %171 = arith.minimumf %167, %170 : vector<2x128xf32>
    %172 = math.exp %171 : vector<2x128xf32>
    %cst_91 = arith.constant 1.000000e+00 : f32
    %173 = vector.broadcast %cst_91 : f32 to vector<2x128xf32>
    %174 = arith.subf %172, %173 : vector<2x128xf32>
    %cst_92 = arith.constant 1.67326319 : f32
    %175 = vector.broadcast %cst_92 : f32 to vector<2x128xf32>
    %176 = arith.mulf %175, %174 : vector<2x128xf32>
    %177 = arith.select %169, %167, %176 : vector<2x128xi1>, vector<2x128xf32>
    %cst_93 = arith.constant 1.05070102 : f32
    %178 = vector.broadcast %cst_93 : f32 to vector<2x128xf32>
    %179 = arith.mulf %178, %177 : vector<2x128xf32>
    %180 = arith.truncf %179 : vector<2x128xf32> to vector<2x128xbf16>
    %c0_94 = arith.constant 0 : index
    %c0_95 = arith.constant 0 : index
    %181 = vector.load %arg20[%c0_94, %c0_95] : memref<128x32xbf16, #tpu.memory_space<vmem>>, vector<128x32xbf16>
    %cst_96 = arith.constant dense<0.000000e+00> : vector<2x32xf32>
    %182 = tpu.matmul %180, %181, %cst_96 {dimension_numbers = #tpu.dot_dimension_numbers<[1], [0], [0], [1], [0, 0, 1, 1], [], []>} : vector<2x128xbf16>, vector<128x32xbf16>, vector<2x32xf32> -> vector<2x32xf32>
    %c0_97 = arith.constant 0 : index
    %c0_98 = arith.constant 0 : index
    %183 = vector.load %arg21[%c0_97, %c0_98] : memref<1x32xf32, #tpu.memory_space<vmem>>, vector<1x32xf32>
    %184 = vector.broadcast %183 : vector<1x32xf32> to vector<2x32xf32>
    %185 = arith.addf %182, %184 : vector<2x32xf32>
    %186 = arith.truncf %185 : vector<2x32xf32> to vector<2x32xbf16>
    %c0_99 = arith.constant 0 : index
    %c0_100 = arith.constant 0 : index
    %187 = vector.load %arg22[%c0_99, %c0_100] : memref<32x512xbf16, #tpu.memory_space<vmem>>, vector<32x512xbf16>
    %cst_101 = arith.constant dense<0.000000e+00> : vector<2x512xf32>
    %188 = tpu.matmul %186, %187, %cst_101 {dimension_numbers = #tpu.dot_dimension_numbers<[1], [0], [0], [1], [0, 0, 1, 1], [], []>} : vector<2x32xbf16>, vector<32x512xbf16>, vector<2x512xf32> -> vector<2x512xf32>
    %189 = arith.addf %161, %188 : vector<2x512xf32>
    %190 = arith.truncf %179 : vector<2x128xf32> to vector<2x128xbf16>
    %c0_102 = arith.constant 0 : index
    %c0_103 = arith.constant 0 : index
    %191 = vector.load %arg23[%c0_102, %c0_103] : memref<128x128xbf16, #tpu.memory_space<vmem>>, vector<128x128xbf16>
    %cst_104 = arith.constant dense<0.000000e+00> : vector<2x128xf32>
    %192 = tpu.matmul %190, %191, %cst_104 {dimension_numbers = #tpu.dot_dimension_numbers<[1], [0], [0], [1], [0, 0, 1, 1], [], []>} : vector<2x128xbf16>, vector<128x128xbf16>, vector<2x128xf32> -> vector<2x128xf32>
    %c0_105 = arith.constant 0 : index
    %c0_106 = arith.constant 0 : index
    %193 = vector.load %arg24[%c0_105, %c0_106] : memref<1x128xf32, #tpu.memory_space<vmem>>, vector<1x128xf32>
    %194 = vector.broadcast %193 : vector<1x128xf32> to vector<2x128xf32>
    %195 = arith.addf %192, %194 : vector<2x128xf32>
    %cst_107 = arith.constant 0.000000e+00 : f32
    %196 = vector.broadcast %cst_107 : f32 to vector<2x128xf32>
    %197 = arith.cmpf ogt, %195, %196 : vector<2x128xf32>
    %cst_108 = arith.constant 0.000000e+00 : f32
    %198 = vector.broadcast %cst_108 : f32 to vector<2x128xf32>
    %199 = arith.minimumf %195, %198 : vector<2x128xf32>
    %200 = math.exp %199 : vector<2x128xf32>
    %cst_109 = arith.constant 1.000000e+00 : f32
    %201 = vector.broadcast %cst_109 : f32 to vector<2x128xf32>
    %202 = arith.subf %200, %201 : vector<2x128xf32>
    %cst_110 = arith.constant 1.67326319 : f32
    %203 = vector.broadcast %cst_110 : f32 to vector<2x128xf32>
    %204 = arith.mulf %203, %202 : vector<2x128xf32>
    %205 = arith.select %197, %195, %204 : vector<2x128xi1>, vector<2x128xf32>
    %cst_111 = arith.constant 1.05070102 : f32
    %206 = vector.broadcast %cst_111 : f32 to vector<2x128xf32>
    %207 = arith.mulf %206, %205 : vector<2x128xf32>
    %208 = arith.truncf %207 : vector<2x128xf32> to vector<2x128xbf16>
    %c0_112 = arith.constant 0 : index
    %c0_113 = arith.constant 0 : index
    %209 = vector.load %arg25[%c0_112, %c0_113] : memref<128x64xbf16, #tpu.memory_space<vmem>>, vector<128x64xbf16>
    %cst_114 = arith.constant dense<0.000000e+00> : vector<2x64xf32>
    %210 = tpu.matmul %208, %209, %cst_114 {dimension_numbers = #tpu.dot_dimension_numbers<[1], [0], [0], [1], [0, 0, 1, 1], [], []>} : vector<2x128xbf16>, vector<128x64xbf16>, vector<2x64xf32> -> vector<2x64xf32>
    %c0_115 = arith.constant 0 : index
    %c0_116 = arith.constant 0 : index
    %211 = vector.load %arg26[%c0_115, %c0_116] : memref<1x64xf32, #tpu.memory_space<vmem>>, vector<1x64xf32>
    %212 = vector.broadcast %211 : vector<1x64xf32> to vector<2x64xf32>
    %213 = arith.addf %210, %212 : vector<2x64xf32>
    %214 = arith.truncf %213 : vector<2x64xf32> to vector<2x64xbf16>
    %c0_117 = arith.constant 0 : index
    %c0_118 = arith.constant 0 : index
    %215 = vector.load %arg27[%c0_117, %c0_118] : memref<64x512xbf16, #tpu.memory_space<vmem>>, vector<64x512xbf16>
    %cst_119 = arith.constant dense<0.000000e+00> : vector<2x512xf32>
    %216 = tpu.matmul %214, %215, %cst_119 {dimension_numbers = #tpu.dot_dimension_numbers<[1], [0], [0], [1], [0, 0, 1, 1], [], []>} : vector<2x64xbf16>, vector<64x512xbf16>, vector<2x512xf32> -> vector<2x512xf32>
    %217 = arith.addf %189, %216 : vector<2x512xf32>
    %218 = vector.extract_strided_slice %0 {offsets = [0, 0], sizes = [2, 1], strides = [1, 1]} : vector<2x4xf32> to vector<2x1xf32>
    %219 = vector.extract_strided_slice %217 {offsets = [0, 0], sizes = [2, 128], strides = [1, 1]} : vector<2x512xf32> to vector<2x128xf32>
    %220 = vector.broadcast %218 : vector<2x1xf32> to vector<2x128xf32>
    %221 = arith.mulf %220, %219 : vector<2x128xf32>
    %222 = vector.extract_strided_slice %0 {offsets = [0, 1], sizes = [2, 1], strides = [1, 1]} : vector<2x4xf32> to vector<2x1xf32>
    %223 = vector.extract_strided_slice %217 {offsets = [0, 128], sizes = [2, 128], strides = [1, 1]} : vector<2x512xf32> to vector<2x128xf32>
    %224 = vector.broadcast %222 : vector<2x1xf32> to vector<2x128xf32>
    %225 = arith.mulf %224, %223 : vector<2x128xf32>
    %226 = arith.addf %221, %225 : vector<2x128xf32>
    %227 = vector.extract_strided_slice %0 {offsets = [0, 2], sizes = [2, 1], strides = [1, 1]} : vector<2x4xf32> to vector<2x1xf32>
    %228 = vector.extract_strided_slice %217 {offsets = [0, 256], sizes = [2, 128], strides = [1, 1]} : vector<2x512xf32> to vector<2x128xf32>
    %229 = vector.broadcast %227 : vector<2x1xf32> to vector<2x128xf32>
    %230 = arith.mulf %229, %228 : vector<2x128xf32>
    %231 = arith.addf %226, %230 : vector<2x128xf32>
    %232 = vector.extract_strided_slice %0 {offsets = [0, 3], sizes = [2, 1], strides = [1, 1]} : vector<2x4xf32> to vector<2x1xf32>
    %233 = vector.extract_strided_slice %217 {offsets = [0, 384], sizes = [2, 128], strides = [1, 1]} : vector<2x512xf32> to vector<2x128xf32>
    %234 = vector.broadcast %232 : vector<2x1xf32> to vector<2x128xf32>
    %235 = arith.mulf %234, %233 : vector<2x128xf32>
    %236 = arith.addf %231, %235 : vector<2x128xf32>
    %c0_120 = arith.constant 0 : index
    %c0_121 = arith.constant 0 : index
    %237 = vector.load %arg28[%c0_120, %c0_121] : memref<2x128xf32, #tpu.memory_space<vmem>>, vector<2x128xf32>
    tpu.vector_store %arg28[%c0_120, %c0_121], %236 {strides = array<i32>} : memref<2x128xf32, #tpu.memory_space<vmem>>, vector<2x128xf32>,
    return
  }
}

</mosaic_0001>

<llo_original>
// kernel: tpu_custom_call.1
$region0: #{tpu_custom_call.1}
  #allocation0 [shape = 'u32[]', space=smem, size = 0x4, offset = 0x4, fixed_abs, tag = 'smem constant byte address 0x4 - core index']
  #allocation1 [shape = 'u32[144,128]{1,0:T(1,128)}', space=vmem, size = 0x12000, scoped, tag = 'internal scratch']
  %s0 = inlined_call_operand.vmem [shape: f32[2,1024], index: 0, kind: input, shape index: {}]
  %s1 = inlined_call_operand.vmem [shape: f32[2,4], index: 1, kind: input, shape index: {}]
  %s2 = inlined_call_operand.vmem [shape: f32[4,4], index: 2, kind: input, shape index: {}]
  %s3 = inlined_call_operand.vmem [shape: f32[1,512], index: 3, kind: input, shape index: {}]
  %s4 = inlined_call_operand.vmem [shape: f32[1,1024], index: 4, kind: input, shape index: {}]
  %s5 = inlined_call_operand.vmem [shape: bf16[1024,4], index: 5, kind: input, shape index: {}]
  %s6 = inlined_call_operand.vmem [shape: f32[1,4], index: 6, kind: input, shape index: {}]
  %s7 = inlined_call_operand.vmem [shape: bf16[4,512], index: 7, kind: input, shape index: {}]
  %s8 = inlined_call_operand.hbm [shape: bf16[1024,512], index: 8, kind: input, shape index: {}]
  %s9 = inlined_call_operand.vmem [shape: f32[1,512], index: 9, kind: input, shape index: {}]
  %s10 = inlined_call_operand.vmem [shape: bf16[512,8], index: 10, kind: input, shape index: {}]
  %s11 = inlined_call_operand.vmem [shape: f32[1,8], index: 11, kind: input, shape index: {}]
  %s12 = inlined_call_operand.vmem [shape: bf16[8,512], index: 12, kind: input, shape index: {}]
  %s13 = inlined_call_operand.vmem [shape: bf16[512,256], index: 13, kind: input, shape index: {}]
  %s14 = inlined_call_operand.vmem [shape: f32[1,256], index: 14, kind: input, shape index: {}]
  %s15 = inlined_call_operand.vmem [shape: bf16[256,16], index: 15, kind: input, shape index: {}]
  %s16 = inlined_call_operand.vmem [shape: f32[1,16], index: 16, kind: input, shape index: {}]
  %s17 = inlined_call_operand.vmem [shape: bf16[16,512], index: 17, kind: input, shape index: {}]
  %s18 = inlined_call_operand.vmem [shape: bf16[256,128], index: 18, kind: input, shape index: {}]
  %s19 = inlined_call_operand.vmem [shape: f32[1,128], index: 19, kind: input, shape index: {}]
  %s20 = inlined_call_operand.vmem [shape: bf16[128,32], index: 20, kind: input, shape index: {}]
  %s21 = inlined_call_operand.vmem [shape: f32[1,32], index: 21, kind: input, shape index: {}]
  %s22 = inlined_call_operand.vmem [shape: bf16[32,512], index: 22, kind: input, shape index: {}]
  %s23 = inlined_call_operand.vmem [shape: bf16[128,128], index: 23, kind: input, shape index: {}]
  %s24 = inlined_call_operand.vmem [shape: f32[1,128], index: 24, kind: input, shape index: {}]
  %s25 = inlined_call_operand.vmem [shape: bf16[128,64], index: 25, kind: input, shape index: {}]
  %s26 = inlined_call_operand.vmem [shape: f32[1,64], index: 26, kind: input, shape index: {}]
  %s27 = inlined_call_operand.vmem [shape: bf16[64,512], index: 27, kind: input, shape index: {}]
  %s28 = inlined_call_operand.hbm [shape: f32[2,128], index: 28, kind: output, shape index: {}]
  %s29 = sld [smem:[#allocation0]]
  $region130: #{tpu_custom_call.1} parent=0
    _
  %s31 = ssub.s32 1, %s29
  %s32 = scalar_select 0, %s31, %s29
  $region1: #{tpu_custom_call.1} parent=0
    #allocation2 [shape = 'u8[2048]{0}', space=smem, size = 0x800, scoped, tag = 'input window, operand 2, single buffered']
    #allocation3 [shape = 's32[1]{0}', space=sflag, size = 0x4, scoped, tag = 'scoped memory for tpu_custom_call.1']
    #allocation4 [shape = 's32[1]{0}', space=sflag, size = 0x4, scoped, tag = 'scoped memory for tpu_custom_call.1']
    #allocation5 [shape = 's32[1]{0}', space=sflag, size = 0x4, scoped, tag = 'scoped memory for tpu_custom_call.1']
    #allocation6 [shape = 'u8[1048576]{0}', space=vmem, size = 0x100000, scoped, tag = 'input window, operand 8, single buffered']
    #allocation7 [shape = 'u8[1024]{0}', space=vmem, size = 0x400, scoped, tag = 'output window, operand 0, single buffered']
    %33 = vsyncpa [#allocation5], 0
    %34 = vsyncpa [#allocation3], 0
    %35 = vsyncpa [#allocation4], 0
    // Predicated region
    $region2: #{tpu_custom_call.1} parent=1 // pred_check
      _
    $region3: #{tpu_custom_call.1} parent=1 // pred_check_branch
      %37 = sbr.rel (0) target = $region5
    $region4: #{tpu_custom_call.1} parent=1 // pred_region
      _
    $region5: #{tpu_custom_call.1} parent=1 // pred_fallthru
      _
    // Predicated region
    $region6: #{tpu_custom_call.1} parent=1 // pred_check
      _
    $region7: #{tpu_custom_call.1} parent=1 // pred_check_branch
      %39 = sbr.rel (0) target = $region9
    $region8: #{tpu_custom_call.1} parent=1 // pred_region
      _
    $region9: #{tpu_custom_call.1} parent=1 // pred_fallthru
      _
    // Predicated region
    $region10: #{tpu_custom_call.1} parent=1 // pred_check
      _
    $region11: #{tpu_custom_call.1} parent=1 // pred_check_branch
      %41 = sbr.rel (0) target = $region13
    $region12: #{tpu_custom_call.1} parent=1 // pred_region
      %s43 = ssub.s32 64, 64
      %44 = vsyncadd [#allocation5], %s43
      %s46 = sshll.u32 %s2, 4
      %s47 = int_to_ptr.vmem [resolvable:$true] %s46
      %49 = dma.vmem_to_smem %s47, 64, [#allocation2], [#allocation5]
    $region13: #{tpu_custom_call.1} parent=1 // pred_fallthru
      _
    // Predicated region
    $region14: #{tpu_custom_call.1} parent=1 // pred_check
      _
    $region15: #{tpu_custom_call.1} parent=1 // pred_check_branch
      %51 = sbr.rel (0) target = $region17
    $region16: #{tpu_custom_call.1} parent=1 // pred_region
      _
    $region17: #{tpu_custom_call.1} parent=1 // pred_fallthru
      _
    // Predicated region
    $region18: #{tpu_custom_call.1} parent=1 // pred_check
      _
    $region19: #{tpu_custom_call.1} parent=1 // pred_check_branch
      %53 = sbr.rel (0) target = $region21
    $region20: #{tpu_custom_call.1} parent=1 // pred_region
      _
    $region21: #{tpu_custom_call.1} parent=1 // pred_fallthru
      _
    // Predicated region
    $region22: #{tpu_custom_call.1} parent=1 // pred_check
      _
    $region23: #{tpu_custom_call.1} parent=1 // pred_check_branch
      %55 = sbr.rel (0) target = $region25
    $region24: #{tpu_custom_call.1} parent=1 // pred_region
      _
    $region25: #{tpu_custom_call.1} parent=1 // pred_fallthru
      _
    // Predicated region
    $region26: #{tpu_custom_call.1} parent=1 // pred_check
      _
    $region27: #{tpu_custom_call.1} parent=1 // pred_check_branch
      %57 = sbr.rel (0) target = $region29
    $region28: #{tpu_custom_call.1} parent=1 // pred_region
      _
    $region29: #{tpu_custom_call.1} parent=1 // pred_fallthru
      _
    // Predicated region
    $region30: #{tpu_custom_call.1} parent=1 // pred_check
      _
    $region31: #{tpu_custom_call.1} parent=1 // pred_check_branch
      %59 = sbr.rel (0) target = $region33
    $region32: #{tpu_custom_call.1} parent=1 // pred_region
      _
    $region33: #{tpu_custom_call.1} parent=1 // pred_fallthru
      _
    // Predicated region
    $region34: #{tpu_custom_call.1} parent=1 // pred_check
      _
    $region35: #{tpu_custom_call.1} parent=1 // pred_check_branch
      %61 = sbr.rel (0) target = $region37
    $region36: #{tpu_custom_call.1} parent=1 // pred_region
      %s63 = ssub.s32 32768, 32768
      %64 = vsyncadd [#allocation3], %s63
      %s65 = sshll.u32 [#allocation6], 4
      %s66 = int_to_ptr.vmem [resolvable:$true] %s65
      %71 = dma.hbm_to_vmem [thread:$0]  %s8, 32768, %s66, [#allocation3], 256, 256, 16
    $region37: #{tpu_custom_call.1} parent=1 // pred_fallthru
      _
    // Predicated region
    $region38: #{tpu_custom_call.1} parent=1 // pred_check
      _
    $region39: #{tpu_custom_call.1} parent=1 // pred_check_branch
      %73 = sbr.rel (0) target = $region41
    $region40: #{tpu_custom_call.1} parent=1 // pred_region
      _
    $region41: #{tpu_custom_call.1} parent=1 // pred_fallthru
      _
    // Predicated region
    $region42: #{tpu_custom_call.1} parent=1 // pred_check
      _
    $region43: #{tpu_custom_call.1} parent=1 // pred_check_branch
      %75 = sbr.rel (0) target = $region45
    $region44: #{tpu_custom_call.1} parent=1 // pred_region
      _
    $region45: #{tpu_custom_call.1} parent=1 // pred_fallthru
      _
    // Predicated region
    $region46: #{tpu_custom_call.1} parent=1 // pred_check
      _
    $region47: #{tpu_custom_call.1} parent=1 // pred_check_branch
      %77 = sbr.rel (0) target = $region49
    $region48: #{tpu_custom_call.1} parent=1 // pred_region
      _
    $region49: #{tpu_custom_call.1} parent=1 // pred_fallthru
      _
    // Predicated region
    $region50: #{tpu_custom_call.1} parent=1 // pred_check
      _
    $region51: #{tpu_custom_call.1} parent=1 // pred_check_branch
      %79 = sbr.rel (0) target = $region53
    $region52: #{tpu_custom_call.1} parent=1 // pred_region
      _
    $region53: #{tpu_custom_call.1} parent=1 // pred_fallthru
      _
    // Predicated region
    $region54: #{tpu_custom_call.1} parent=1 // pred_check
      _
    $region55: #{tpu_custom_call.1} parent=1 // pred_check_branch
      %81 = sbr.rel (0) target = $region57
    $region56: #{tpu_custom_call.1} parent=1 // pred_region
      _
    $region57: #{tpu_custom_call.1} parent=1 // pred_fallthru
      _
    // Predicated region
    $region58: #{tpu_custom_call.1} parent=1 // pred_check
      _
    $region59: #{tpu_custom_call.1} parent=1 // pred_check_branch
      %83 = sbr.rel (0) target = $region61
    $region60: #{tpu_custom_call.1} parent=1 // pred_region
      _
    $region61: #{tpu_custom_call.1} parent=1 // pred_fallthru
      _
    // Predicated region
    $region62: #{tpu_custom_call.1} parent=1 // pred_check
      _
    $region63: #{tpu_custom_call.1} parent=1 // pred_check_branch
      %85 = sbr.rel (0) target = $region65
    $region64: #{tpu_custom_call.1} parent=1 // pred_region
      _
    $region65: #{tpu_custom_call.1} parent=1 // pred_fallthru
      _
    // Predicated region
    $region66: #{tpu_custom_call.1} parent=1 // pred_check
      _
    $region67: #{tpu_custom_call.1} parent=1 // pred_check_branch
      %87 = sbr.rel (0) target = $region69
    $region68: #{tpu_custom_call.1} parent=1 // pred_region
      _
    $region69: #{tpu_custom_call.1} parent=1 // pred_fallthru
      _
    // Predicated region
    $region70: #{tpu_custom_call.1} parent=1 // pred_check
      _
    $region71: #{tpu_custom_call.1} parent=1 // pred_check_branch
      %89 = sbr.rel (0) target = $region73
    $region72: #{tpu_custom_call.1} parent=1 // pred_region
      _
    $region73: #{tpu_custom_call.1} parent=1 // pred_fallthru
      _
    // Predicated region
    $region74: #{tpu_custom_call.1} parent=1 // pred_check
      _
    $region75: #{tpu_custom_call.1} parent=1 // pred_check_branch
      %91 = sbr.rel (0) target = $region77
    $region76: #{tpu_custom_call.1} parent=1 // pred_region
      _
    $region77: #{tpu_custom_call.1} parent=1 // pred_fallthru
      _
    // Predicated region
    $region78: #{tpu_custom_call.1} parent=1 // pred_check
      _
    $region79: #{tpu_custom_call.1} parent=1 // pred_check_branch
      %93 = sbr.rel (0) target = $region81
    $region80: #{tpu_custom_call.1} parent=1 // pred_region
      _
    $region81: #{tpu_custom_call.1} parent=1 // pred_fallthru
      _
    // Predicated region
    $region82: #{tpu_custom_call.1} parent=1 // pred_check
      _
    $region83: #{tpu_custom_call.1} parent=1 // pred_check_branch
      %95 = sbr.rel (0) target = $region85
    $region84: #{tpu_custom_call.1} parent=1 // pred_region
      _
    $region85: #{tpu_custom_call.1} parent=1 // pred_fallthru
      _
    // Predicated region
    $region86: #{tpu_custom_call.1} parent=1 // pred_check
      _
    $region87: #{tpu_custom_call.1} parent=1 // pred_check_branch
      %97 = sbr.rel (0) target = $region89
    $region88: #{tpu_custom_call.1} parent=1 // pred_region
      _
    $region89: #{tpu_custom_call.1} parent=1 // pred_fallthru
      _
    // Predicated region
    $region90: #{tpu_custom_call.1} parent=1 // pred_check
      _
    $region91: #{tpu_custom_call.1} parent=1 // pred_check_branch
      %99 = sbr.rel (0) target = $region93
    $region92: #{tpu_custom_call.1} parent=1 // pred_region
      _
    $region93: #{tpu_custom_call.1} parent=1 // pred_fallthru
      _
    // Predicated region
    $region94: #{tpu_custom_call.1} parent=1 // pred_check
      _
    $region95: #{tpu_custom_call.1} parent=1 // pred_check_branch
      %101 = sbr.rel (0) target = $region97
    $region96: #{tpu_custom_call.1} parent=1 // pred_region
      _
    $region97: #{tpu_custom_call.1} parent=1 // pred_fallthru
      _
    // Predicated region
    $region98: #{tpu_custom_call.1} parent=1 // pred_check
      _
    $region99: #{tpu_custom_call.1} parent=1 // pred_check_branch
      %103 = sbr.rel (0) target = $region101
    $region100: #{tpu_custom_call.1} parent=1 // pred_region
      _
    $region101: #{tpu_custom_call.1} parent=1 // pred_fallthru
      _
    // Predicated region
    $region102: #{tpu_custom_call.1} parent=1 // pred_check
      _
    $region103: #{tpu_custom_call.1} parent=1 // pred_check_branch
      %105 = sbr.rel (0) target = $region105
    $region104: #{tpu_custom_call.1} parent=1 // pred_region
      _
    $region105: #{tpu_custom_call.1} parent=1 // pred_fallthru
      _
    // Predicated region
    $region106: #{tpu_custom_call.1} parent=1 // pred_check
      _
    $region107: #{tpu_custom_call.1} parent=1 // pred_check_branch
      %107 = sbr.rel (0) target = $region109
    $region108: #{tpu_custom_call.1} parent=1 // pred_region
      _
    $region109: #{tpu_custom_call.1} parent=1 // pred_fallthru
      _
    // Predicated region
    $region110: #{tpu_custom_call.1} parent=1 // pred_check
      _
    $region111: #{tpu_custom_call.1} parent=1 // pred_check_branch
      %109 = sbr.rel (0) target = $region113
    $region112: #{tpu_custom_call.1} parent=1 // pred_region
      _
    $region113: #{tpu_custom_call.1} parent=1 // pred_fallthru
      _
    // Predicated region
    $region114: #{tpu_custom_call.1} parent=1 // pred_check
      _
    $region115: #{tpu_custom_call.1} parent=1 // pred_check_branch
      %111 = sbr.rel (0) target = $region117
    $region116: #{tpu_custom_call.1} parent=1 // pred_region
      %112 = dma.done [#allocation5], 64
    $region117: #{tpu_custom_call.1} parent=1 // pred_fallthru
      _
    // Predicated region
    $region118: #{tpu_custom_call.1} parent=1 // pred_check
      _
    $region119: #{tpu_custom_call.1} parent=1 // pred_check_branch
      %114 = sbr.rel (0) target = $region121
    $region120: #{tpu_custom_call.1} parent=1 // pred_region
      %115 = dma.done [#allocation3], 32768
    $region121: #{tpu_custom_call.1} parent=1 // pred_fallthru
      _
    %116 = sfence
    %v118 = vld [vmem:[%s1] sm:$0x3]
    %v119 = vld [vmem:[%s3] sm:$0xf]
    %v120 = vld [vmem:[%s0] sm:$0xff]
    %v121 = vld [vmem:[%s0 + $0x8] sm:$0xff]
    %s122 = sld [smem:[#allocation2]]
    %v123 = vstv %s122
    %v124 = vmul.f32 %v123, %v120
    %s125 = sld [smem:[#allocation2 + $0x80]]
    %v126 = vstv %s125
    %v128 = vrot.slane %v120, 4
    %v130 = vmul.f32 %v126, %v128
    %v131 = vadd.f32 %v124, %v130
    %s132 = sld [smem:[#allocation2 + $0x100]]
    %v133 = vstv %s132
    %v134 = vmul.f32 %v133, %v121
    %v135 = vadd.f32 %v131, %v134
    %s136 = sld [smem:[#allocation2 + $0x180]]
    %v137 = vstv %s136
    %v139 = vrot.slane %v121, 4
    %v141 = vmul.f32 %v137, %v139
    %v142 = vadd.f32 %v135, %v141
    %s143 = sld [smem:[#allocation2 + $0x1]]
    %v144 = vstv %s143
    %v145 = vmul.f32 %v144, %v120
    %s146 = sld [smem:[#allocation2 + $0x81]]
    %v147 = vstv %s146
    %v148 = vmul.f32 %v147, %v128
    %v149 = vadd.f32 %v145, %v148
    %s150 = sld [smem:[#allocation2 + $0x101]]
    %v151 = vstv %s150
    %v152 = vmul.f32 %v151, %v121
    %v153 = vadd.f32 %v149, %v152
    %s154 = sld [smem:[#allocation2 + $0x181]]
    %v155 = vstv %s154
    %v156 = vmul.f32 %v155, %v139
    %v157 = vadd.f32 %v153, %v156
    %s158 = sld [smem:[#allocation2 + $0x2]]
    %v159 = vstv %s158
    %v160 = vmul.f32 %v159, %v120
    %s161 = sld [smem:[#allocation2 + $0x82]]
    %v162 = vstv %s161
    %v163 = vmul.f32 %v162, %v128
    %v164 = vadd.f32 %v160, %v163
    %s165 = sld [smem:[#allocation2 + $0x102]]
    %v166 = vstv %s165
    %v167 = vmul.f32 %v166, %v121
    %v168 = vadd.f32 %v164, %v167
    %s169 = sld [smem:[#allocation2 + $0x182]]
    %v170 = vstv %s169
    %v171 = vmul.f32 %v170, %v139
    %v172 = vadd.f32 %v168, %v171
    %s173 = sld [smem:[#allocation2 + $0x3]]
    %v174 = vstv %s173
    %v175 = vmul.f32 %v174, %v120
    %s176 = sld [smem:[#allocation2 + $0x83]]
    %v177 = vstv %s176
    %v178 = vmul.f32 %v177, %v128
    %v179 = vadd.f32 %v175, %v178
    %s180 = sld [smem:[#allocation2 + $0x103]]
    %v181 = vstv %s180
    %v182 = vmul.f32 %v181, %v121
    %v183 = vadd.f32 %v179, %v182
    %s184 = sld [smem:[#allocation2 + $0x183]]
    %v185 = vstv %s184
    %v186 = vmul.f32 %v185, %v139
    %v187 = vadd.f32 %v183, %v186
    %v190 = vunpack.c.l.s4 1983009808
    %v191 = vunpack.c.0.s8 %v190
    %v192 = vlaneseq
    %v193 = vshrl.u32 %v192, 7
    %v194 = vsub.s32 %v191, %v193
    %v195 = vrot.slane %v142, %v194
    %v196 = vcombine.high %v195, %v195
    %v201 = vunpack.c.l.s4 1983009808
    %v202 = vunpack.c.0.s8 %v201
    %v203 = vlaneseq
    %v204 = vshrl.u32 %v203, 7
    %v205 = vsub.s32 %v202, %v204
    %v206 = vrot.slane %v157, %v205
    %v207 = vcombine.high %v206, %v206
    %v212 = vunpack.c.l.s4 1983009808
    %v213 = vunpack.c.0.s8 %v212
    %v214 = vlaneseq
    %v215 = vshrl.u32 %v214, 7
    %v216 = vsub.s32 %v213, %v215
    %v217 = vrot.slane %v172, %v216
    %v218 = vcombine.high %v217, %v217
    %v223 = vunpack.c.l.s4 1983009808
    %v224 = vunpack.c.0.s8 %v223
    %v225 = vlaneseq
    %v226 = vshrl.u32 %v225, 7
    %v227 = vsub.s32 %v224, %v226
    %v228 = vrot.slane %v187, %v227
    %v229 = vcombine.high %v228, %v228
    %v232 = vld [vmem:[%s4] sm:$0xff]
    %v234 = vlaneseq
    %v235 = vshrl.u32 %v234, 7
    %v236 = vsub.s32 0, %v235
    %v237 = vrot.slane %v232, %v236
    %v238 = vlaneseq
    %v239 = vshrl.u32 %v238, 7
    %v240 = vsub.s32 1, %v239
    %v241 = vrot.slane %v232, %v240
    %v242 = vlaneseq
    %v243 = vshrl.u32 %v242, 7
    %v244 = vsub.s32 2, %v243
    %v245 = vrot.slane %v232, %v244
    %v246 = vlaneseq
    %v247 = vshrl.u32 %v246, 7
    %v248 = vsub.s32 3, %v247
    %v249 = vrot.slane %v232, %v248
    %v250 = vlaneseq
    %v251 = vshrl.u32 %v250, 7
    %v252 = vsub.s32 4, %v251
    %v253 = vrot.slane %v232, %v252
    %v254 = vlaneseq
    %v255 = vshrl.u32 %v254, 7
    %v256 = vsub.s32 5, %v255
    %v257 = vrot.slane %v232, %v256
    %v258 = vlaneseq
    %v259 = vshrl.u32 %v258, 7
    %v260 = vsub.s32 6, %v259
    %v261 = vrot.slane %v232, %v260
    %v262 = vlaneseq
    %v263 = vshrl.u32 %v262, 7
    %v264 = vsub.s32 7, %v263
    %v265 = vrot.slane %v232, %v264
    %v274 = vadd.f32 %v195, %v237
    %v275 = vadd.f32 %v196, %v241
    %v276 = vadd.f32 %v206, %v245
    %v277 = vadd.f32 %v207, %v249
    %v278 = vadd.f32 %v217, %v253
    %v279 = vadd.f32 %v218, %v257
    %v280 = vadd.f32 %v228, %v261
    %v281 = vadd.f32 %v229, %v265
    %vm282 = vcmp.gt.f32.partialorder %v274, 0.0
    %vm283 = vcmp.gt.f32.partialorder %v275, 0.0
    %vm284 = vcmp.gt.f32.partialorder %v276, 0.0
    %vm285 = vcmp.gt.f32.partialorder %v277, 0.0
    %vm286 = vcmp.gt.f32.partialorder %v278, 0.0
    %vm287 = vcmp.gt.f32.partialorder %v279, 0.0
    %vm288 = vcmp.gt.f32.partialorder %v280, 0.0
    %vm289 = vcmp.gt.f32.partialorder %v281, 0.0
    %v290 = vmin.f32 %v274, 0.0
    %v291 = vmin.f32 %v275, 0.0
    %v292 = vmin.f32 %v276, 0.0
    %v293 = vmin.f32 %v277, 0.0
    %v294 = vmin.f32 %v278, 0.0
    %v295 = vmin.f32 %v279, 0.0
    %v296 = vmin.f32 %v280, 0.0
    %v297 = vmin.f32 %v281, 0.0
    %v298 = vmul.f32 %v290, 1.442695
    %v299 = vpow.pop %v298
    %v300 = vmul.f32 %v291, 1.442695
    %v301 = vpow.pop %v300
    %v302 = vmul.f32 %v292, 1.442695
    %v303 = vpow.pop %v302
    %v304 = vmul.f32 %v293, 1.442695
    %v305 = vpow.pop %v304
    %v306 = vmul.f32 %v294, 1.442695
    %v307 = vpow.pop %v306
    %v308 = vmul.f32 %v295, 1.442695
    %v309 = vpow.pop %v308
    %v310 = vmul.f32 %v296, 1.442695
    %v311 = vpow.pop %v310
    %v312 = vmul.f32 %v297, 1.442695
    %v313 = vpow.pop %v312
    %v314 = vsub.f32 %v299, 1.0
    %v315 = vsub.f32 %v301, 1.0
    %v316 = vsub.f32 %v303, 1.0
    %v317 = vsub.f32 %v305, 1.0
    %v318 = vsub.f32 %v307, 1.0
    %v319 = vsub.f32 %v309, 1.0
    %v320 = vsub.f32 %v311, 1.0
    %v321 = vsub.f32 %v313, 1.0
    %v322 = vmul.f32 %v314, 1.6732632
    %v323 = vmul.f32 %v315, 1.6732632
    %v324 = vmul.f32 %v316, 1.6732632
    %v325 = vmul.f32 %v317, 1.6732632
    %v326 = vmul.f32 %v318, 1.6732632
    %v327 = vmul.f32 %v319, 1.6732632
    %v328 = vmul.f32 %v320, 1.6732632
    %v329 = vmul.f32 %v321, 1.6732632
    %v330 = vsel %vm282, %v274, %v322
    %v331 = vsel %vm283, %v275, %v323
    %v332 = vsel %vm284, %v276, %v324
    %v333 = vsel %vm285, %v277, %v325
    %v334 = vsel %vm286, %v278, %v326
    %v335 = vsel %vm287, %v279, %v327
    %v336 = vsel %vm288, %v280, %v328
    %v337 = vsel %vm289, %v281, %v329
    %v338 = vmul.f32 %v330, 1.050701
    %v339 = vmul.f32 %v331, 1.050701
    %v340 = vmul.f32 %v332, 1.050701
    %v341 = vmul.f32 %v333, 1.050701
    %v342 = vmul.f32 %v334, 1.050701
    %v343 = vmul.f32 %v335, 1.050701
    %v344 = vmul.f32 %v336, 1.050701
    %v345 = vmul.f32 %v337, 1.050701
    %v346 = vpack.c.bf16 %v338, %v338
    %v347 = vpack.c.bf16 %v339, %v339
    %v348 = vpack.c.bf16 %v340, %v340
    %v349 = vpack.c.bf16 %v341, %v341
    %v350 = vpack.c.bf16 %v342, %v342
    %v351 = vpack.c.bf16 %v343, %v343
    %v352 = vpack.c.bf16 %v344, %v344
    %v353 = vpack.c.bf16 %v345, %v345
    %v354 = vld [vmem:[%s5] sm:$0xf]
    %v355 = vld [vmem:[%s5 + $0x4] sm:$0xf]
    %v356 = vld [vmem:[%s5 + $0x8] sm:$0xf]
    %v357 = vld [vmem:[%s5 + $0xc] sm:$0xf]
    %v358 = vld [vmem:[%s5 + $0x10] sm:$0xf]
    %v359 = vld [vmem:[%s5 + $0x14] sm:$0xf]
    %v360 = vld [vmem:[%s5 + $0x18] sm:$0xf]
    %v361 = vld [vmem:[%s5 + $0x1c] sm:$0xf]
    %v362 = vld [vmem:[%s5 + $0x20] sm:$0xf]
    %v363 = vld [vmem:[%s5 + $0x24] sm:$0xf]
    %v364 = vld [vmem:[%s5 + $0x28] sm:$0xf]
    %v365 = vld [vmem:[%s5 + $0x2c] sm:$0xf]
    %v366 = vld [vmem:[%s5 + $0x30] sm:$0xf]
    %v367 = vld [vmem:[%s5 + $0x34] sm:$0xf]
    %v368 = vld [vmem:[%s5 + $0x38] sm:$0xf]
    %v369 = vld [vmem:[%s5 + $0x3c] sm:$0xf]
    %v370 = vld [vmem:[%s5 + $0x40] sm:$0xf]
    %v371 = vld [vmem:[%s5 + $0x44] sm:$0xf]
    %v372 = vld [vmem:[%s5 + $0x48] sm:$0xf]
    %v373 = vld [vmem:[%s5 + $0x4c] sm:$0xf]
    %v374 = vld [vmem:[%s5 + $0x50] sm:$0xf]
    %v375 = vld [vmem:[%s5 + $0x54] sm:$0xf]
    %v376 = vld [vmem:[%s5 + $0x58] sm:$0xf]
    %v377 = vld [vmem:[%s5 + $0x5c] sm:$0xf]
    %v378 = vld [vmem:[%s5 + $0x60] sm:$0xf]
    %v379 = vld [vmem:[%s5 + $0x64] sm:$0xf]
    %v380 = vld [vmem:[%s5 + $0x68] sm:$0xf]
    %v381 = vld [vmem:[%s5 + $0x6c] sm:$0xf]
    %v382 = vld [vmem:[%s5 + $0x70] sm:$0xf]
    %v383 = vld [vmem:[%s5 + $0x74] sm:$0xf]
    %v384 = vld [vmem:[%s5 + $0x78] sm:$0xf]
    %v385 = vld [vmem:[%s5 + $0x7c] sm:$0xf]
    %v386 = vld [vmem:[%s5 + $0x80] sm:$0xf]
    %v387 = vld [vmem:[%s5 + $0x84] sm:$0xf]
    %v388 = vld [vmem:[%s5 + $0x88] sm:$0xf]
    %v389 = vld [vmem:[%s5 + $0x8c] sm:$0xf]
    %v390 = vld [vmem:[%s5 + $0x90] sm:$0xf]
    %v391 = vld [vmem:[%s5 + $0x94] sm:$0xf]
    %v392 = vld [vmem:[%s5 + $0x98] sm:$0xf]
    %v393 = vld [vmem:[%s5 + $0x9c] sm:$0xf]
    %v394 = vld [vmem:[%s5 + $0xa0] sm:$0xf]
    %v395 = vld [vmem:[%s5 + $0xa4] sm:$0xf]
    %v396 = vld [vmem:[%s5 + $0xa8] sm:$0xf]
    %v397 = vld [vmem:[%s5 + $0xac] sm:$0xf]
    %v398 = vld [vmem:[%s5 + $0xb0] sm:$0xf]
    %v399 = vld [vmem:[%s5 + $0xb4] sm:$0xf]
    %v400 = vld [vmem:[%s5 + $0xb8] sm:$0xf]
    %v401 = vld [vmem:[%s5 + $0xbc] sm:$0xf]
    %v402 = vld [vmem:[%s5 + $0xc0] sm:$0xf]
    %v403 = vld [vmem:[%s5 + $0xc4] sm:$0xf]
    %v404 = vld [vmem:[%s5 + $0xc8] sm:$0xf]
    %v405 = vld [vmem:[%s5 + $0xcc] sm:$0xf]
    %v406 = vld [vmem:[%s5 + $0xd0] sm:$0xf]
    %v407 = vld [vmem:[%s5 + $0xd4] sm:$0xf]
    %v408 = vld [vmem:[%s5 + $0xd8] sm:$0xf]
    %v409 = vld [vmem:[%s5 + $0xdc] sm:$0xf]
    %v410 = vld [vmem:[%s5 + $0xe0] sm:$0xf]
    %v411 = vld [vmem:[%s5 + $0xe4] sm:$0xf]
    %v412 = vld [vmem:[%s5 + $0xe8] sm:$0xf]
    %v413 = vld [vmem:[%s5 + $0xec] sm:$0xf]
    %v414 = vld [vmem:[%s5 + $0xf0] sm:$0xf]
    %v415 = vld [vmem:[%s5 + $0xf4] sm:$0xf]
    %v416 = vld [vmem:[%s5 + $0xf8] sm:$0xf]
    %v417 = vld [vmem:[%s5 + $0xfc] sm:$0xf]
    %v418 = vld [vmem:[%s5 + $0x100] sm:$0xf]
    %v419 = vld [vmem:[%s5 + $0x104] sm:$0xf]
    %v420 = vld [vmem:[%s5 + $0x108] sm:$0xf]
    %v421 = vld [vmem:[%s5 + $0x10c] sm:$0xf]
    %v422 = vld [vmem:[%s5 + $0x110] sm:$0xf]
    %v423 = vld [vmem:[%s5 + $0x114] sm:$0xf]
    %v424 = vld [vmem:[%s5 + $0x118] sm:$0xf]
    %v425 = vld [vmem:[%s5 + $0x11c] sm:$0xf]
    %v426 = vld [vmem:[%s5 + $0x120] sm:$0xf]
    %v427 = vld [vmem:[%s5 + $0x124] sm:$0xf]
    %v428 = vld [vmem:[%s5 + $0x128] sm:$0xf]
    %v429 = vld [vmem:[%s5 + $0x12c] sm:$0xf]
    %v430 = vld [vmem:[%s5 + $0x130] sm:$0xf]
    %v431 = vld [vmem:[%s5 + $0x134] sm:$0xf]
    %v432 = vld [vmem:[%s5 + $0x138] sm:$0xf]
    %v433 = vld [vmem:[%s5 + $0x13c] sm:$0xf]
    %v434 = vld [vmem:[%s5 + $0x140] sm:$0xf]
    %v435 = vld [vmem:[%s5 + $0x144] sm:$0xf]
    %v436 = vld [vmem:[%s5 + $0x148] sm:$0xf]
    %v437 = vld [vmem:[%s5 + $0x14c] sm:$0xf]
    %v438 = vld [vmem:[%s5 + $0x150] sm:$0xf]
    %v439 = vld [vmem:[%s5 + $0x154] sm:$0xf]
    %v440 = vld [vmem:[%s5 + $0x158] sm:$0xf]
    %v441 = vld [vmem:[%s5 + $0x15c] sm:$0xf]
    %v442 = vld [vmem:[%s5 + $0x160] sm:$0xf]
    %v443 = vld [vmem:[%s5 + $0x164] sm:$0xf]
    %v444 = vld [vmem:[%s5 + $0x168] sm:$0xf]
    %v445 = vld [vmem:[%s5 + $0x16c] sm:$0xf]
    %v446 = vld [vmem:[%s5 + $0x170] sm:$0xf]
    %v447 = vld [vmem:[%s5 + $0x174] sm:$0xf]
    %v448 = vld [vmem:[%s5 + $0x178] sm:$0xf]
    %v449 = vld [vmem:[%s5 + $0x17c] sm:$0xf]
    %v450 = vld [vmem:[%s5 + $0x180] sm:$0xf]
    %v451 = vld [vmem:[%s5 + $0x184] sm:$0xf]
    %v452 = vld [vmem:[%s5 + $0x188] sm:$0xf]
    %v453 = vld [vmem:[%s5 + $0x18c] sm:$0xf]
    %v454 = vld [vmem:[%s5 + $0x190] sm:$0xf]
    %v455 = vld [vmem:[%s5 + $0x194] sm:$0xf]
    %v456 = vld [vmem:[%s5 + $0x198] sm:$0xf]
    %v457 = vld [vmem:[%s5 + $0x19c] sm:$0xf]
    %v458 = vld [vmem:[%s5 + $0x1a0] sm:$0xf]
    %v459 = vld [vmem:[%s5 + $0x1a4] sm:$0xf]
    %v460 = vld [vmem:[%s5 + $0x1a8] sm:$0xf]
    %v461 = vld [vmem:[%s5 + $0x1ac] sm:$0xf]
    %v462 = vld [vmem:[%s5 + $0x1b0] sm:$0xf]
    %v463 = vld [vmem:[%s5 + $0x1b4] sm:$0xf]
    %v464 = vld [vmem:[%s5 + $0x1b8] sm:$0xf]
    %v465 = vld [vmem:[%s5 + $0x1bc] sm:$0xf]
    %v466 = vld [vmem:[%s5 + $0x1c0] sm:$0xf]
    %v467 = vld [vmem:[%s5 + $0x1c4] sm:$0xf]
    %v468 = vld [vmem:[%s5 + $0x1c8] sm:$0xf]
    %v469 = vld [vmem:[%s5 + $0x1cc] sm:$0xf]
    %v470 = vld [vmem:[%s5 + $0x1d0] sm:$0xf]
    %v471 = vld [vmem:[%s5 + $0x1d4] sm:$0xf]
    %v472 = vld [vmem:[%s5 + $0x1d8] sm:$0xf]
    %v473 = vld [vmem:[%s5 + $0x1dc] sm:$0xf]
    %v474 = vld [vmem:[%s5 + $0x1e0] sm:$0xf]
    %v475 = vld [vmem:[%s5 + $0x1e4] sm:$0xf]
    %v476 = vld [vmem:[%s5 + $0x1e8] sm:$0xf]
    %v477 = vld [vmem:[%s5 + $0x1ec] sm:$0xf]
    %v478 = vld [vmem:[%s5 + $0x1f0] sm:$0xf]
    %v479 = vld [vmem:[%s5 + $0x1f4] sm:$0xf]
    %v480 = vld [vmem:[%s5 + $0x1f8] sm:$0xf]
    %v481 = vld [vmem:[%s5 + $0x1fc] sm:$0xf]
    %v482 = vld [vmem:[%s6] sm:$0x1]
    %v484 = vlaneseq
    %v485 = vshrl.u32 %v484, 7
    %v486 = vsub.s32 0, %v485
    %v487 = vrot.slane %v482, %v486
    %v617 = vunpack.c.l.b16 %v354
    %v618 = vunpack.c.l.b16 %v355
    %v619 = vunpack.c.l.b16 %v356
    %v620 = vunpack.c.l.b16 %v357
    %v621 = vunpack.c.l.b16 %v358
    %v622 = vunpack.c.l.b16 %v359
    %v623 = vunpack.c.l.b16 %v360
    %v624 = vunpack.c.l.b16 %v361
    %v625 = vunpack.c.l.b16 %v362
    %v626 = vunpack.c.l.b16 %v363
    %v627 = vunpack.c.l.b16 %v364
    %v628 = vunpack.c.l.b16 %v365
    %v629 = vunpack.c.l.b16 %v366
    %v630 = vunpack.c.l.b16 %v367
    %v631 = vunpack.c.l.b16 %v368
    %v632 = vunpack.c.l.b16 %v369
    %v633 = vunpack.c.l.b16 %v370
    %v634 = vunpack.c.l.b16 %v371
    %v635 = vunpack.c.l.b16 %v372
    %v636 = vunpack.c.l.b16 %v373
    %v637 = vunpack.c.l.b16 %v374
    %v638 = vunpack.c.l.b16 %v375
    %v639 = vunpack.c.l.b16 %v376
    %v640 = vunpack.c.l.b16 %v377
    %v641 = vunpack.c.l.b16 %v378
    %v642 = vunpack.c.l.b16 %v379
    %v643 = vunpack.c.l.b16 %v380
    %v644 = vunpack.c.l.b16 %v381
    %v645 = vunpack.c.l.b16 %v382
    %v646 = vunpack.c.l.b16 %v383
    %v647 = vunpack.c.l.b16 %v384
    %v648 = vunpack.c.l.b16 %v385
    %v649 = vunpack.c.l.b16 %v386
    %v650 = vunpack.c.l.b16 %v387
    %v651 = vunpack.c.l.b16 %v388
    %v652 = vunpack.c.l.b16 %v389
    %v653 = vunpack.c.l.b16 %v390
    %v654 = vunpack.c.l.b16 %v391
    %v655 = vunpack.c.l.b16 %v392
    %v656 = vunpack.c.l.b16 %v393
    %v657 = vunpack.c.l.b16 %v394
    %v658 = vunpack.c.l.b16 %v395
    %v659 = vunpack.c.l.b16 %v396
    %v660 = vunpack.c.l.b16 %v397
    %v661 = vunpack.c.l.b16 %v398
    %v662 = vunpack.c.l.b16 %v399
    %v663 = vunpack.c.l.b16 %v400
    %v664 = vunpack.c.l.b16 %v401
    %v665 = vunpack.c.l.b16 %v402
    %v666 = vunpack.c.l.b16 %v403
    %v667 = vunpack.c.l.b16 %v404
    %v668 = vunpack.c.l.b16 %v405
    %v669 = vunpack.c.l.b16 %v406
    %v670 = vunpack.c.l.b16 %v407
    %v671 = vunpack.c.l.b16 %v408
    %v672 = vunpack.c.l.b16 %v409
    %v673 = vunpack.c.l.b16 %v410
    %v674 = vunpack.c.l.b16 %v411
    %v675 = vunpack.c.l.b16 %v412
    %v676 = vunpack.c.l.b16 %v413
    %v677 = vunpack.c.l.b16 %v414
    %v678 = vunpack.c.l.b16 %v415
    %v679 = vunpack.c.l.b16 %v416
    %v680 = vunpack.c.l.b16 %v417
    %v681 = vunpack.c.l.b16 %v418
    %v682 = vunpack.c.l.b16 %v419
    %v683 = vunpack.c.l.b16 %v420
    %v684 = vunpack.c.l.b16 %v421
    %v685 = vunpack.c.l.b16 %v422
    %v686 = vunpack.c.l.b16 %v423
    %v687 = vunpack.c.l.b16 %v424
    %v688 = vunpack.c.l.b16 %v425
    %v689 = vunpack.c.l.b16 %v426
    %v690 = vunpack.c.l.b16 %v427
    %v691 = vunpack.c.l.b16 %v428
    %v692 = vunpack.c.l.b16 %v429
    %v693 = vunpack.c.l.b16 %v430
    %v694 = vunpack.c.l.b16 %v431
    %v695 = vunpack.c.l.b16 %v432
    %v696 = vunpack.c.l.b16 %v433
    %v697 = vunpack.c.l.b16 %v434
    %v698 = vunpack.c.l.b16 %v435
    %v699 = vunpack.c.l.b16 %v436
    %v700 = vunpack.c.l.b16 %v437
    %v701 = vunpack.c.l.b16 %v438
    %v702 = vunpack.c.l.b16 %v439
    %v703 = vunpack.c.l.b16 %v440
    %v704 = vunpack.c.l.b16 %v441
    %v705 = vunpack.c.l.b16 %v442
    %v706 = vunpack.c.l.b16 %v443
    %v707 = vunpack.c.l.b16 %v444
    %v708 = vunpack.c.l.b16 %v445
    %v709 = vunpack.c.l.b16 %v446
    %v710 = vunpack.c.l.b16 %v447
    %v711 = vunpack.c.l.b16 %v448
    %v712 = vunpack.c.l.b16 %v449
    %v713 = vunpack.c.l.b16 %v450
    %v714 = vunpack.c.l.b16 %v451
    %v715 = vunpack.c.l.b16 %v452
    %v716 = vunpack.c.l.b16 %v453
    %v717 = vunpack.c.l.b16 %v454
    %v718 = vunpack.c.l.b16 %v455
    %v719 = vunpack.c.l.b16 %v456
    %v720 = vunpack.c.l.b16 %v457
    %v721 = vunpack.c.l.b16 %v458
    %v722 = vunpack.c.l.b16 %v459
    %v723 = vunpack.c.l.b16 %v460
    %v724 = vunpack.c.l.b16 %v461
    %v725 = vunpack.c.l.b16 %v462
    %v726 = vunpack.c.l.b16 %v463
    %v727 = vunpack.c.l.b16 %v464
    %v728 = vunpack.c.l.b16 %v465
    %v729 = vunpack.c.l.b16 %v466
    %v730 = vunpack.c.l.b16 %v467
    %v731 = vunpack.c.l.b16 %v468
    %v732 = vunpack.c.l.b16 %v469
    %v733 = vunpack.c.l.b16 %v470
    %v734 = vunpack.c.l.b16 %v471
    %v735 = vunpack.c.l.b16 %v472
    %v736 = vunpack.c.l.b16 %v473
    %v737 = vunpack.c.l.b16 %v474
    %v738 = vunpack.c.l.b16 %v475
    %v739 = vunpack.c.l.b16 %v476
    %v740 = vunpack.c.l.b16 %v477
    %v741 = vunpack.c.l.b16 %v478
    %v742 = vunpack.c.l.b16 %v479
    %v743 = vunpack.c.l.b16 %v480
    %v744 = vunpack.c.l.b16 %v481
    %v745 = vpack.c.b16 %v618, %v617
    %v746 = vpack.c.b16 %v620, %v619
    %v747 = vpack.c.b16 %v622, %v621
    %v748 = vpack.c.b16 %v624, %v623
    %v749 = vpack.c.b16 %v626, %v625
    %v750 = vpack.c.b16 %v628, %v627
    %v751 = vpack.c.b16 %v630, %v629
    %v752 = vpack.c.b16 %v632, %v631
    %v753 = vpack.c.b16 %v634, %v633
    %v754 = vpack.c.b16 %v636, %v635
    %v755 = vpack.c.b16 %v638, %v637
    %v756 = vpack.c.b16 %v640, %v639
    %v757 = vpack.c.b16 %v642, %v641
    %v758 = vpack.c.b16 %v644, %v643
    %v759 = vpack.c.b16 %v646, %v645
    %v760 = vpack.c.b16 %v648, %v647
    %v761 = vpack.c.b16 %v650, %v649
    %v762 = vpack.c.b16 %v652, %v651
    %v763 = vpack.c.b16 %v654, %v653
    %v764 = vpack.c.b16 %v656, %v655
    %v765 = vpack.c.b16 %v658, %v657
    %v766 = vpack.c.b16 %v660, %v659
    %v767 = vpack.c.b16 %v662, %v661
    %v768 = vpack.c.b16 %v664, %v663
    %v769 = vpack.c.b16 %v666, %v665
    %v770 = vpack.c.b16 %v668, %v667
    %v771 = vpack.c.b16 %v670, %v669
    %v772 = vpack.c.b16 %v672, %v671
    %v773 = vpack.c.b16 %v674, %v673
    %v774 = vpack.c.b16 %v676, %v675
    %v775 = vpack.c.b16 %v678, %v677
    %v776 = vpack.c.b16 %v680, %v679
    %v777 = vpack.c.b16 %v682, %v681
    %v778 = vpack.c.b16 %v684, %v683
    %v779 = vpack.c.b16 %v686, %v685
    %v780 = vpack.c.b16 %v688, %v687
    %v781 = vpack.c.b16 %v690, %v689
    %v782 = vpack.c.b16 %v692, %v691
    %v783 = vpack.c.b16 %v694, %v693
    %v784 = vpack.c.b16 %v696, %v695
    %v785 = vpack.c.b16 %v698, %v697
    %v786 = vpack.c.b16 %v700, %v699
    %v787 = vpack.c.b16 %v702, %v701
    %v788 = vpack.c.b16 %v704, %v703
    %v789 = vpack.c.b16 %v706, %v705
    %v790 = vpack.c.b16 %v708, %v707
    %v791 = vpack.c.b16 %v710, %v709
    %v792 = vpack.c.b16 %v712, %v711
    %v793 = vpack.c.b16 %v714, %v713
    %v794 = vpack.c.b16 %v716, %v715
    %v795 = vpack.c.b16 %v718, %v717
    %v796 = vpack.c.b16 %v720, %v719
    %v797 = vpack.c.b16 %v722, %v721
    %v798 = vpack.c.b16 %v724, %v723
    %v799 = vpack.c.b16 %v726, %v725
    %v800 = vpack.c.b16 %v728, %v727
    %v801 = vpack.c.b16 %v730, %v729
    %v802 = vpack.c.b16 %v732, %v731
    %v803 = vpack.c.b16 %v734, %v733
    %v804 = vpack.c.b16 %v736, %v735
    %v805 = vpack.c.b16 %v738, %v737
    %v806 = vpack.c.b16 %v740, %v739
    %v807 = vpack.c.b16 %v742, %v741
    %v808 = vpack.c.b16 %v744, %v743
    %873 = vmatprep.subr.bf16.mxu0 0
    %874 = vmatpush1.bf16.msra.mxu0 %v745
    %875 = vmatprep.subr.bf16.mxu0 0
    %876 = vmatpush1.bf16.msra.mxu0 %v746
    %877 = vmatprep.subr.bf16.mxu0 0
    %878 = vmatpush1.bf16.msra.mxu0 %v747
    %879 = vmatprep.subr.bf16.mxu0 0
    %880 = vmatpush1.bf16.msra.mxu0 %v748
    %881 = vmatprep.subr.bf16.mxu0 0
    %882 = vmatpush1.bf16.msra.mxu0 %v749
    %883 = vmatprep.subr.bf16.mxu0 0
    %884 = vmatpush1.bf16.msra.mxu0 %v750
    %885 = vmatprep.subr.bf16.mxu0 0
    %886 = vmatpush1.bf16.msra.mxu0 %v751
    %887 = vmatprep.subr.bf16.mxu0 0
    %888 = vmatpush1.bf16.msra.mxu0 %v752
    %889 = vmatprep.subr.bf16.mxu0 0
    %890 = vmatpush1.bf16.msra.mxu0 %v753
    %891 = vmatprep.subr.bf16.mxu0 0
    %892 = vmatpush1.bf16.msra.mxu0 %v754
    %893 = vmatprep.subr.bf16.mxu0 0
    %894 = vmatpush1.bf16.msra.mxu0 %v755
    %895 = vmatprep.subr.bf16.mxu0 0
    %896 = vmatpush1.bf16.msra.mxu0 %v756
    %897 = vmatprep.subr.bf16.mxu0 0
    %898 = vmatpush1.bf16.msra.mxu0 %v757
    %899 = vmatprep.subr.bf16.mxu0 0
    %900 = vmatpush1.bf16.msra.mxu0 %v758
    %901 = vmatprep.subr.bf16.mxu0 0
    %902 = vmatpush1.bf16.msra.mxu0 %v759
    %903 = vmatprep.subr.bf16.mxu0 0
    %904 = vmatpush1.bf16.msra.mxu0 %v760
    %905 = vmatprep.mubr.bf16.mxu0 %v347
    %906 = vmatmul.mubr.bf16.gmra.mrb[0].mxu0 %v346
    %v907 = vpop.f32.mrb[0].mxu0
    %v908 = vadd.f32 %v487, %v907
    %v909 = vpop.f32.mrb[0].mxu0
    %v910 = vpop.f32.mrb[0].mxu0
    %v911 = vpop.f32.mrb[0].mxu0
    %912 = vdwg.mxu0
    %913 = vmatprep.subr.bf16.mxu0 0
    %914 = vmatpush1.bf16.msra.mxu0 %v761
    %915 = vmatprep.subr.bf16.mxu0 0
    %916 = vmatpush1.bf16.msra.mxu0 %v762
    %917 = vmatprep.subr.bf16.mxu0 0
    %918 = vmatpush1.bf16.msra.mxu0 %v763
    %919 = vmatprep.subr.bf16.mxu0 0
    %920 = vmatpush1.bf16.msra.mxu0 %v764
    %921 = vmatprep.subr.bf16.mxu0 0
    %922 = vmatpush1.bf16.msra.mxu0 %v765
    %923 = vmatprep.subr.bf16.mxu0 0
    %924 = vmatpush1.bf16.msra.mxu0 %v766
    %925 = vmatprep.subr.bf16.mxu0 0
    %926 = vmatpush1.bf16.msra.mxu0 %v767
    %927 = vmatprep.subr.bf16.mxu0 0
    %928 = vmatpush1.bf16.msra.mxu0 %v768
    %929 = vmatprep.subr.bf16.mxu0 0
    %930 = vmatpush1.bf16.msra.mxu0 %v769
    %931 = vmatprep.subr.bf16.mxu0 0
    %932 = vmatpush1.bf16.msra.mxu0 %v770
    %933 = vmatprep.subr.bf16.mxu0 0
    %934 = vmatpush1.bf16.msra.mxu0 %v771
    %935 = vmatprep.subr.bf16.mxu0 0
    %936 = vmatpush1.bf16.msra.mxu0 %v772
    %937 = vmatprep.subr.bf16.mxu0 0
    %938 = vmatpush1.bf16.msra.mxu0 %v773
    %939 = vmatprep.subr.bf16.mxu0 0
    %940 = vmatpush1.bf16.msra.mxu0 %v774
    %941 = vmatprep.subr.bf16.mxu0 0
    %942 = vmatpush1.bf16.msra.mxu0 %v775
    %943 = vmatprep.subr.bf16.mxu0 0
    %944 = vmatpush1.bf16.msra.mxu0 %v776
    %945 = vmatprep.mubr.bf16.mxu0 %v349
    %946 = vmatmul.mubr.bf16.gmra.mrb[0].mxu0 %v348
    %v947 = vpop.f32.mrb[0].mxu0
    %v948 = vadd.f32 %v908, %v947
    %v949 = vpop.f32.mrb[0].mxu0
    %v950 = vpop.f32.mrb[0].mxu0
    %v951 = vpop.f32.mrb[0].mxu0
    %952 = vdwg.mxu0
    %953 = vmatprep.subr.bf16.mxu0 0
    %954 = vmatpush1.bf16.msra.mxu0 %v777
    %955 = vmatprep.subr.bf16.mxu0 0
    %956 = vmatpush1.bf16.msra.mxu0 %v778
    %957 = vmatprep.subr.bf16.mxu0 0
    %958 = vmatpush1.bf16.msra.mxu0 %v779
    %959 = vmatprep.subr.bf16.mxu0 0
    %960 = vmatpush1.bf16.msra.mxu0 %v780
    %961 = vmatprep.subr.bf16.mxu0 0
    %962 = vmatpush1.bf16.msra.mxu0 %v781
    %963 = vmatprep.subr.bf16.mxu0 0
    %964 = vmatpush1.bf16.msra.mxu0 %v782
    %965 = vmatprep.subr.bf16.mxu0 0
    %966 = vmatpush1.bf16.msra.mxu0 %v783
    %967 = vmatprep.subr.bf16.mxu0 0
    %968 = vmatpush1.bf16.msra.mxu0 %v784
    %969 = vmatprep.subr.bf16.mxu0 0
    %970 = vmatpush1.bf16.msra.mxu0 %v785
    %971 = vmatprep.subr.bf16.mxu0 0
    %972 = vmatpush1.bf16.msra.mxu0 %v786
    %973 = vmatprep.subr.bf16.mxu0 0
    %974 = vmatpush1.bf16.msra.mxu0 %v787
    %975 = vmatprep.subr.bf16.mxu0 0
    %976 = vmatpush1.bf16.msra.mxu0 %v788
    %977 = vmatprep.subr.bf16.mxu0 0
    %978 = vmatpush1.bf16.msra.mxu0 %v789
    %979 = vmatprep.subr.bf16.mxu0 0
    %980 = vmatpush1.bf16.msra.mxu0 %v790
    %981 = vmatprep.subr.bf16.mxu0 0
    %982 = vmatpush1.bf16.msra.mxu0 %v791
    %983 = vmatprep.subr.bf16.mxu0 0
    %984 = vmatpush1.bf16.msra.mxu0 %v792
    %985 = vmatprep.mubr.bf16.mxu0 %v351
    %986 = vmatmul.mubr.bf16.gmra.mrb[0].mxu0 %v350
    %v987 = vpop.f32.mrb[0].mxu0
    %v988 = vadd.f32 %v948, %v987
    %v989 = vpop.f32.mrb[0].mxu0
    %v990 = vpop.f32.mrb[0].mxu0
    %v991 = vpop.f32.mrb[0].mxu0
    %992 = vdwg.mxu0
    %993 = vmatprep.subr.bf16.mxu0 0
    %994 = vmatpush1.bf16.msra.mxu0 %v793
    %995 = vmatprep.subr.bf16.mxu0 0
    %996 = vmatpush1.bf16.msra.mxu0 %v794
    %997 = vmatprep.subr.bf16.mxu0 0
    %998 = vmatpush1.bf16.msra.mxu0 %v795
    %999 = vmatprep.subr.bf16.mxu0 0
    %1000 = vmatpush1.bf16.msra.mxu0 %v796
    %1001 = vmatprep.subr.bf16.mxu0 0
    %1002 = vmatpush1.bf16.msra.mxu0 %v797
    %1003 = vmatprep.subr.bf16.mxu0 0
    %1004 = vmatpush1.bf16.msra.mxu0 %v798
    %1005 = vmatprep.subr.bf16.mxu0 0
    %1006 = vmatpush1.bf16.msra.mxu0 %v799
    %1007 = vmatprep.subr.bf16.mxu0 0
    %1008 = vmatpush1.bf16.msra.mxu0 %v800
    %1009 = vmatprep.subr.bf16.mxu0 0
    %1010 = vmatpush1.bf16.msra.mxu0 %v801
    %1011 = vmatprep.subr.bf16.mxu0 0
    %1012 = vmatpush1.bf16.msra.mxu0 %v802
    %1013 = vmatprep.subr.bf16.mxu0 0
    %1014 = vmatpush1.bf16.msra.mxu0 %v803
    %1015 = vmatprep.subr.bf16.mxu0 0
    %1016 = vmatpush1.bf16.msra.mxu0 %v804
    %1017 = vmatprep.subr.bf16.mxu0 0
    %1018 = vmatpush1.bf16.msra.mxu0 %v805
    %1019 = vmatprep.subr.bf16.mxu0 0
    %1020 = vmatpush1.bf16.msra.mxu0 %v806
    %1021 = vmatprep.subr.bf16.mxu0 0
    %1022 = vmatpush1.bf16.msra.mxu0 %v807
    %1023 = vmatprep.subr.bf16.mxu0 0
    %1024 = vmatpush1.bf16.msra.mxu0 %v808
    %1025 = vmatprep.mubr.bf16.mxu0 %v353
    %1026 = vmatmul.mubr.bf16.gmra.mrb[0].mxu0 %v352
    %v1027 = vpop.f32.mrb[0].mxu0
    %v1028 = vadd.f32 %v988, %v1027
    %v1029 = vpop.f32.mrb[0].mxu0
    %v1030 = vpop.f32.mrb[0].mxu0
    %v1031 = vpop.f32.mrb[0].mxu0
    %1032 = vdwg.mxu0
    %v1033 = vpack.c.bf16 %v1028, %v1028
    %v1034 = vld [vmem:[%s7] sm:$0xff]
    %v1036 = vcombine.high %v1034, %v1034
    %v1038 = vunpack.c.l.s4 1983009808
    %v1039 = vunpack.c.0.s8 %v1038
    %v1040 = vlaneseq
    %v1041 = vshrl.u32 %v1040, 7
    %v1042 = vsub.s32 %v1039, %v1041
    %v1043 = vrot.slane %v1034, %v1042
    %v1045 = vunpack.c.l.s4 1983009808
    %v1046 = vunpack.c.0.s8 %v1045
    %v1047 = vlaneseq
    %v1048 = vshrl.u32 %v1047, 7
    %v1049 = vsub.s32 %v1046, %v1048
    %v1050 = vrot.slane %v1036, %v1049
    %v1051 = vcombine.high %v1043, %v1043
    %v1052 = vcombine.high %v1050, %v1050
    %vm1053 = vcmask 31744
    %v1055 = vsel %vm1053, %v1033, 0
    %vm1057 = vcmask 1041408
    %v1059 = vsel %vm1057, %v1043, 0
    %v1062 = vsel %vm1057, %v1051, 0
    %v1065 = vsel %vm1057, %v1050, 0
    %v1068 = vsel %vm1057, %v1052, 0
    %1070 = vmatprep.subr.bf16.mxu0 %v1062
    %1071 = vmatpush1.bf16.msra.mxu0 %v1059
    %1072 = vmatprep.subr.bf16.mxu0 0
    %1073 = vmatpush1.bf16.msra.mxu0 0
    %1074 = vmatprep.subr.bf16.mxu0 0
    %1075 = vmatpush1.bf16.msra.mxu0 0
    %1076 = vmatprep.subr.bf16.mxu0 0
    %1077 = vmatpush1.bf16.msra.mxu0 0
    %1078 = vmatprep.subr.bf16.mxu0 0
    %1079 = vmatpush1.bf16.msra.mxu0 0
    %1080 = vmatprep.subr.bf16.mxu0 0
    %1081 = vmatpush1.bf16.msra.mxu0 0
    %1082 = vmatprep.subr.bf16.mxu0 0
    %1083 = vmatpush1.bf16.msra.mxu0 0
    %1084 = vmatprep.subr.bf16.mxu0 0
    %1085 = vmatpush1.bf16.msra.mxu0 0
    %1086 = vmatprep.subr.bf16.mxu0 0
    %1087 = vmatpush1.bf16.msra.mxu0 0
    %1088 = vmatprep.subr.bf16.mxu0 0
    %1089 = vmatpush1.bf16.msra.mxu0 0
    %1090 = vmatprep.subr.bf16.mxu0 0
    %1091 = vmatpush1.bf16.msra.mxu0 0
    %1092 = vmatprep.subr.bf16.mxu0 0
    %1093 = vmatpush1.bf16.msra.mxu0 0
    %1094 = vmatprep.subr.bf16.mxu0 0
    %1095 = vmatpush1.bf16.msra.mxu0 0
    %1096 = vmatprep.subr.bf16.mxu0 0
    %1097 = vmatpush1.bf16.msra.mxu0 0
    %1098 = vmatprep.subr.bf16.mxu0 0
    %1099 = vmatpush1.bf16.msra.mxu0 0
    %1100 = vmatprep.subr.bf16.mxu0 0
    %1101 = vmatpush1.bf16.msra.mxu0 0
    %1102 = vmatprep.mubr.bf16.mxu0 0
    %1103 = vmatmul.mubr.bf16.gmra.mrb[0].mxu0 %v1055
    %v1104 = vpop.f32.mrb[0].mxu0
    %v1105 = vadd.f32 0.0, %v1104
    %v1106 = vpop.f32.mrb[0].mxu0
    %v1107 = vadd.f32 0.0, %v1106
    %v1108 = vpop.f32.mrb[0].mxu0
    %v1109 = vpop.f32.mrb[0].mxu0
    %1110 = vdwg.mxu0
    %1111 = vmatprep.subr.bf16.mxu0 %v1068
    %1112 = vmatpush1.bf16.msra.mxu0 %v1065
    %1113 = vmatprep.subr.bf16.mxu0 0
    %1114 = vmatpush1.bf16.msra.mxu0 0
    %1115 = vmatprep.subr.bf16.mxu0 0
    %1116 = vmatpush1.bf16.msra.mxu0 0
    %1117 = vmatprep.subr.bf16.mxu0 0
    %1118 = vmatpush1.bf16.msra.mxu0 0
    %1119 = vmatprep.subr.bf16.mxu0 0
    %1120 = vmatpush1.bf16.msra.mxu0 0
    %1121 = vmatprep.subr.bf16.mxu0 0
    %1122 = vmatpush1.bf16.msra.mxu0 0
    %1123 = vmatprep.subr.bf16.mxu0 0
    %1124 = vmatpush1.bf16.msra.mxu0 0
    %1125 = vmatprep.subr.bf16.mxu0 0
    %1126 = vmatpush1.bf16.msra.mxu0 0
    %1127 = vmatprep.subr.bf16.mxu0 0
    %1128 = vmatpush1.bf16.msra.mxu0 0
    %1129 = vmatprep.subr.bf16.mxu0 0
    %1130 = vmatpush1.bf16.msra.mxu0 0
    %1131 = vmatprep.subr.bf16.mxu0 0
    %1132 = vmatpush1.bf16.msra.mxu0 0
    %1133 = vmatprep.subr.bf16.mxu0 0
    %1134 = vmatpush1.bf16.msra.mxu0 0
    %1135 = vmatprep.subr.bf16.mxu0 0
    %1136 = vmatpush1.bf16.msra.mxu0 0
    %1137 = vmatprep.subr.bf16.mxu0 0
    %1138 = vmatpush1.bf16.msra.mxu0 0
    %1139 = vmatprep.subr.bf16.mxu0 0
    %1140 = vmatpush1.bf16.msra.mxu0 0
    %1141 = vmatprep.subr.bf16.mxu0 0
    %1142 = vmatpush1.bf16.msra.mxu0 0
    %1143 = vmatprep.mubr.bf16.mxu0 0
    %1144 = vmatmul.mubr.bf16.gmra.mrb[0].mxu0 %v1055
    %v1145 = vpop.f32.mrb[0].mxu0
    %v1146 = vadd.f32 0.0, %v1145
    %v1147 = vpop.f32.mrb[0].mxu0
    %v1148 = vadd.f32 0.0, %v1147
    %v1149 = vpop.f32.mrb[0].mxu0
    %v1150 = vpop.f32.mrb[0].mxu0
    %1151 = vdwg.mxu0
    %v1153 = vlaneseq
    %v1154 = vshrl.u32 %v1153, 7
    %v1155 = vsub.s32 0, %v1154
    %v1156 = vrot.slane %v119, %v1155
    %v1157 = vlaneseq
    %v1158 = vshrl.u32 %v1157, 7
    %v1159 = vsub.s32 1, %v1158
    %v1160 = vrot.slane %v119, %v1159
    %v1161 = vlaneseq
    %v1162 = vshrl.u32 %v1161, 7
    %v1163 = vsub.s32 2, %v1162
    %v1164 = vrot.slane %v119, %v1163
    %v1165 = vlaneseq
    %v1166 = vshrl.u32 %v1165, 7
    %v1167 = vsub.s32 3, %v1166
    %v1168 = vrot.slane %v119, %v1167
    %v1173 = vadd.f32 %v1156, %v1105
    %v1174 = vadd.f32 %v1160, %v1107
    %v1175 = vadd.f32 %v1164, %v1146
    %v1176 = vadd.f32 %v1168, %v1148
    %v1177 = vld [vmem:[#allocation6] sm:$0xff]
    %v1178 = vld [vmem:[#allocation6 + $0x8] sm:$0xff]
    %v1179 = vld [vmem:[#allocation6 + $0x10] sm:$0xff]
    %v1180 = vld [vmem:[#allocation6 + $0x18] sm:$0xff]
    %v1181 = vld [vmem:[#allocation6 + $0x20] sm:$0xff]
    %v1182 = vld [vmem:[#allocation6 + $0x28] sm:$0xff]
    %v1183 = vld [vmem:[#allocation6 + $0x30] sm:$0xff]
    %v1184 = vld [vmem:[#allocation6 + $0x38] sm:$0xff]
    %v1185 = vld [vmem:[#allocation6 + $0x40] sm:$0xff]
    %v1186 = vld [vmem:[#allocation6 + $0x48] sm:$0xff]
    %v1187 = vld [vmem:[#allocation6 + $0x50] sm:$0xff]
    %v1188 = vld [vmem:[#allocation6 + $0x58] sm:$0xff]
    %v1189 = vld [vmem:[#allocation6 + $0x60] sm:$0xff]
    %v1190 = vld [vmem:[#allocation6 + $0x68] sm:$0xff]
    %v1191 = vld [vmem:[#allocation6 + $0x70] sm:$0xff]
    %v1192 = vld [vmem:[#allocation6 + $0x78] sm:$0xff]
    %v1193 = vld [vmem:[#allocation6 + $0x80] sm:$0xff]
    %v1194 = vld [vmem:[#allocation6 + $0x88] sm:$0xff]
    %v1195 = vld [vmem:[#allocation6 + $0x90] sm:$0xff]
    %v1196 = vld [vmem:[#allocation6 + $0x98] sm:$0xff]
    %v1197 = vld [vmem:[#allocation6 + $0xa0] sm:$0xff]
    %v1198 = vld [vmem:[#allocation6 + $0xa8] sm:$0xff]
    %v1199 = vld [vmem:[#allocation6 + $0xb0] sm:$0xff]
    %v1200 = vld [vmem:[#allocation6 + $0xb8] sm:$0xff]
    %v1201 = vld [vmem:[#allocation6 + $0xc0] sm:$0xff]
    %v1202 = vld [vmem:[#allocation6 + $0xc8] sm:$0xff]
    %v1203 = vld [vmem:[#allocation6 + $0xd0] sm:$0xff]
    %v1204 = vld [vmem:[#allocation6 + $0xd8] sm:$0xff]
    %v1205 = vld [vmem:[#allocation6 + $0xe0] sm:$0xff]
    %v1206 = vld [vmem:[#allocation6 + $0xe8] sm:$0xff]
    %v1207 = vld [vmem:[#allocation6 + $0xf0] sm:$0xff]
    %v1208 = vld [vmem:[#allocation6 + $0xf8] sm:$0xff]
    %v1209 = vld [vmem:[#allocation6 + $0x100] sm:$0xff]
    %v1210 = vld [vmem:[#allocation6 + $0x108] sm:$0xff]
    %v1211 = vld [vmem:[#allocation6 + $0x110] sm:$0xff]
    %v1212 = vld [vmem:[#allocation6 + $0x118] sm:$0xff]
    %v1213 = vld [vmem:[#allocation6 + $0x120] sm:$0xff]
    %v1214 = vld [vmem:[#allocation6 + $0x128] sm:$0xff]
    %v1215 = vld [vmem:[#allocation6 + $0x130] sm:$0xff]
    %v1216 = vld [vmem:[#allocation6 + $0x138] sm:$0xff]
    %v1217 = vld [vmem:[#allocation6 + $0x140] sm:$0xff]
    %v1218 = vld [vmem:[#allocation6 + $0x148] sm:$0xff]
    %v1219 = vld [vmem:[#allocation6 + $0x150] sm:$0xff]
    %v1220 = vld [vmem:[#allocation6 + $0x158] sm:$0xff]
    %v1221 = vld [vmem:[#allocation6 + $0x160] sm:$0xff]
    %v1222 = vld [vmem:[#allocation6 + $0x168] sm:$0xff]
    %v1223 = vld [vmem:[#allocation6 + $0x170] sm:$0xff]
    %v1224 = vld [vmem:[#allocation6 + $0x178] sm:$0xff]
    %v1225 = vld [vmem:[#allocation6 + $0x180] sm:$0xff]
    %v1226 = vld [vmem:[#allocation6 + $0x188] sm:$0xff]
    %v1227 = vld [vmem:[#allocation6 + $0x190] sm:$0xff]
    %v1228 = vld [vmem:[#allocation6 + $0x198] sm:$0xff]
    %v1229 = vld [vmem:[#allocation6 + $0x1a0] sm:$0xff]
    %v1230 = vld [vmem:[#allocation6 + $0x1a8] sm:$0xff]
    %v1231 = vld [vmem:[#allocation6 + $0x1b0] sm:$0xff]
    %v1232 = vld [vmem:[#allocation6 + $0x1b8] sm:$0xff]
    %v1233 = vld [vmem:[#allocation6 + $0x1c0] sm:$0xff]
    %v1234 = vld [vmem:[#allocation6 + $0x1c8] sm:$0xff]
    %v1235 = vld [vmem:[#allocation6 + $0x1d0] sm:$0xff]
    %v1236 = vld [vmem:[#allocation6 + $0x1d8] sm:$0xff]
    %v1237 = vld [vmem:[#allocation6 + $0x1e0] sm:$0xff]
    %v1238 = vld [vmem:[#allocation6 + $0x1e8] sm:$0xff]
    %v1239 = vld [vmem:[#allocation6 + $0x1f0] sm:$0xff]
    %v1240 = vld [vmem:[#allocation6 + $0x1f8] sm:$0xff]
    %v1241 = vld [vmem:[#allocation6 + $0x200] sm:$0xff]
    %v1242 = vld [vmem:[#allocation6 + $0x208] sm:$0xff]
    %v1243 = vld [vmem:[#allocation6 + $0x210] sm:$0xff]
    %v1244 = vld [vmem:[#allocation6 + $0x218] sm:$0xff]
    %v1245 = vld [vmem:[#allocation6 + $0x220] sm:$0xff]
    %v1246 = vld [vmem:[#allocation6 + $0x228] sm:$0xff]
    %v1247 = vld [vmem:[#allocation6 + $0x230] sm:$0xff]
    %v1248 = vld [vmem:[#allocation6 + $0x238] sm:$0xff]
    %v1249 = vld [vmem:[#allocation6 + $0x240] sm:$0xff]
    %v1250 = vld [vmem:[#allocation6 + $0x248] sm:$0xff]
    %v1251 = vld [vmem:[#allocation6 + $0x250] sm:$0xff]
    %v1252 = vld [vmem:[#allocation6 + $0x258] sm:$0xff]
    %v1253 = vld [vmem:[#allocation6 + $0x260] sm:$0xff]
    %v1254 = vld [vmem:[#allocation6 + $0x268] sm:$0xff]
    %v1255 = vld [vmem:[#allocation6 + $0x270] sm:$0xff]
    %v1256 = vld [vmem:[#allocation6 + $0x278] sm:$0xff]
    %v1257 = vld [vmem:[#allocation6 + $0x280] sm:$0xff]
    %v1258 = vld [vmem:[#allocation6 + $0x288] sm:$0xff]
    %v1259 = vld [vmem:[#allocation6 + $0x290] sm:$0xff]
    %v1260 = vld [vmem:[#allocation6 + $0x298] sm:$0xff]
    %v1261 = vld [vmem:[#allocation6 + $0x2a0] sm:$0xff]
    %v1262 = vld [vmem:[#allocation6 + $0x2a8] sm:$0xff]
    %v1263 = vld [vmem:[#allocation6 + $0x2b0] sm:$0xff]
    %v1264 = vld [vmem:[#allocation6 + $0x2b8] sm:$0xff]
    %v1265 = vld [vmem:[#allocation6 + $0x2c0] sm:$0xff]
    %v1266 = vld [vmem:[#allocation6 + $0x2c8] sm:$0xff]
    %v1267 = vld [vmem:[#allocation6 + $0x2d0] sm:$0xff]
    %v1268 = vld [vmem:[#allocation6 + $0x2d8] sm:$0xff]
    %v1269 = vld [vmem:[#allocation6 + $0x2e0] sm:$0xff]
    %v1270 = vld [vmem:[#allocation6 + $0x2e8] sm:$0xff]
    %v1271 = vld [vmem:[#allocation6 + $0x2f0] sm:$0xff]
    %v1272 = vld [vmem:[#allocation6 + $0x2f8] sm:$0xff]
    %v1273 = vld [vmem:[#allocation6 + $0x300] sm:$0xff]
    %v1274 = vld [vmem:[#allocation6 + $0x308] sm:$0xff]
    %v1275 = vld [vmem:[#allocation6 + $0x310] sm:$0xff]
    %v1276 = vld [vmem:[#allocation6 + $0x318] sm:$0xff]
    %v1277 = vld [vmem:[#allocation6 + $0x320] sm:$0xff]
    %v1278 = vld [vmem:[#allocation6 + $0x328] sm:$0xff]
    %v1279 = vld [vmem:[#allocation6 + $0x330] sm:$0xff]
    %v1280 = vld [vmem:[#allocation6 + $0x338] sm:$0xff]
    %v1281 = vld [vmem:[#allocation6 + $0x340] sm:$0xff]
    %v1282 = vld [vmem:[#allocation6 + $0x348] sm:$0xff]
    %v1283 = vld [vmem:[#allocation6 + $0x350] sm:$0xff]
    %v1284 = vld [vmem:[#allocation6 + $0x358] sm:$0xff]
    %v1285 = vld [vmem:[#allocation6 + $0x360] sm:$0xff]
    %v1286 = vld [vmem:[#allocation6 + $0x368] sm:$0xff]
    %v1287 = vld [vmem:[#allocation6 + $0x370] sm:$0xff]
    %v1288 = vld [vmem:[#allocation6 + $0x378] sm:$0xff]
    %v1289 = vld [vmem:[#allocation6 + $0x380] sm:$0xff]
    %v1290 = vld [vmem:[#allocation6 + $0x388] sm:$0xff]
    %v1291 = vld [vmem:[#allocation6 + $0x390] sm:$0xff]
    %v1292 = vld [vmem:[#allocation6 + $0x398] sm:$0xff]
    %v1293 = vld [vmem:[#allocation6 + $0x3a0] sm:$0xff]
    %v1294 = vld [vmem:[#allocation6 + $0x3a8] sm:$0xff]
    %v1295 = vld [vmem:[#allocation6 + $0x3b0] sm:$0xff]
    %v1296 = vld [vmem:[#allocation6 + $0x3b8] sm:$0xff]
    %v1297 = vld [vmem:[#allocation6 + $0x3c0] sm:$0xff]
    %v1298 = vld [vmem:[#allocation6 + $0x3c8] sm:$0xff]
    %v1299 = vld [vmem:[#allocation6 + $0x3d0] sm:$0xff]
    %v1300 = vld [vmem:[#allocation6 + $0x3d8] sm:$0xff]
    %v1301 = vld [vmem:[#allocation6 + $0x3e0] sm:$0xff]
    %v1302 = vld [vmem:[#allocation6 + $0x3e8] sm:$0xff]
    %v1303 = vld [vmem:[#allocation6 + $0x3f0] sm:$0xff]
    %v1304 = vld [vmem:[#allocation6 + $0x3f8] sm:$0xff]
    %v1305 = vld [vmem:[#allocation6 + $0x400] sm:$0xff]
    %v1306 = vld [vmem:[#allocation6 + $0x408] sm:$0xff]
    %v1307 = vld [vmem:[#allocation6 + $0x410] sm:$0xff]
    %v1308 = vld [vmem:[#allocation6 + $0x418] sm:$0xff]
    %v1309 = vld [vmem:[#allocation6 + $0x420] sm:$0xff]
    %v1310 = vld [vmem:[#allocation6 + $0x428] sm:$0xff]
    %v1311 = vld [vmem:[#allocation6 + $0x430] sm:$0xff]
    %v1312 = vld [vmem:[#allocation6 + $0x438] sm:$0xff]
    %v1313 = vld [vmem:[#allocation6 + $0x440] sm:$0xff]
    %v1314 = vld [vmem:[#allocation6 + $0x448] sm:$0xff]
    %v1315 = vld [vmem:[#allocation6 + $0x450] sm:$0xff]
    %v1316 = vld [vmem:[#allocation6 + $0x458] sm:$0xff]
    %v1317 = vld [vmem:[#allocation6 + $0x460] sm:$0xff]
    %v1318 = vld [vmem:[#allocation6 + $0x468] sm:$0xff]
    %v1319 = vld [vmem:[#allocation6 + $0x470] sm:$0xff]
    %v1320 = vld [vmem:[#allocation6 + $0x478] sm:$0xff]
    %v1321 = vld [vmem:[#allocation6 + $0x480] sm:$0xff]
    %v1322 = vld [vmem:[#allocation6 + $0x488] sm:$0xff]
    %v1323 = vld [vmem:[#allocation6 + $0x490] sm:$0xff]
    %v1324 = vld [vmem:[#allocation6 + $0x498] sm:$0xff]
    %v1325 = vld [vmem:[#allocation6 + $0x4a0] sm:$0xff]
    %v1326 = vld [vmem:[#allocation6 + $0x4a8] sm:$0xff]
    %v1327 = vld [vmem:[#allocation6 + $0x4b0] sm:$0xff]
    %v1328 = vld [vmem:[#allocation6 + $0x4b8] sm:$0xff]
    %v1329 = vld [vmem:[#allocation6 + $0x4c0] sm:$0xff]
    %v1330 = vld [vmem:[#allocation6 + $0x4c8] sm:$0xff]
    %v1331 = vld [vmem:[#allocation6 + $0x4d0] sm:$0xff]
    %v1332 = vld [vmem:[#allocation6 + $0x4d8] sm:$0xff]
    %v1333 = vld [vmem:[#allocation6 + $0x4e0] sm:$0xff]
    %v1334 = vld [vmem:[#allocation6 + $0x4e8] sm:$0xff]
    %v1335 = vld [vmem:[#allocation6 + $0x4f0] sm:$0xff]
    %v1336 = vld [vmem:[#allocation6 + $0x4f8] sm:$0xff]
    %v1337 = vld [vmem:[#allocation6 + $0x500] sm:$0xff]
    %v1338 = vld [vmem:[#allocation6 + $0x508] sm:$0xff]
    %v1339 = vld [vmem:[#allocation6 + $0x510] sm:$0xff]
    %v1340 = vld [vmem:[#allocation6 + $0x518] sm:$0xff]
    %v1341 = vld [vmem:[#allocation6 + $0x520] sm:$0xff]
    %v1342 = vld [vmem:[#allocation6 + $0x528] sm:$0xff]
    %v1343 = vld [vmem:[#allocation6 + $0x530] sm:$0xff]
    %v1344 = vld [vmem:[#allocation6 + $0x538] sm:$0xff]
    %v1345 = vld [vmem:[#allocation6 + $0x540] sm:$0xff]
    %v1346 = vld [vmem:[#allocation6 + $0x548] sm:$0xff]
    %v1347 = vld [vmem:[#allocation6 + $0x550] sm:$0xff]
    %v1348 = vld [vmem:[#allocation6 + $0x558] sm:$0xff]
    %v1349 = vld [vmem:[#allocation6 + $0x560] sm:$0xff]
    %v1350 = vld [vmem:[#allocation6 + $0x568] sm:$0xff]
    %v1351 = vld [vmem:[#allocation6 + $0x570] sm:$0xff]
    %v1352 = vld [vmem:[#allocation6 + $0x578] sm:$0xff]
    %v1353 = vld [vmem:[#allocation6 + $0x580] sm:$0xff]
    %v1354 = vld [vmem:[#allocation6 + $0x588] sm:$0xff]
    %v1355 = vld [vmem:[#allocation6 + $0x590] sm:$0xff]
    %v1356 = vld [vmem:[#allocation6 + $0x598] sm:$0xff]
    %v1357 = vld [vmem:[#allocation6 + $0x5a0] sm:$0xff]
    %v1358 = vld [vmem:[#allocation6 + $0x5a8] sm:$0xff]
    %v1359 = vld [vmem:[#allocation6 + $0x5b0] sm:$0xff]
    %v1360 = vld [vmem:[#allocation6 + $0x5b8] sm:$0xff]
    %v1361 = vld [vmem:[#allocation6 + $0x5c0] sm:$0xff]
    %v1362 = vld [vmem:[#allocation6 + $0x5c8] sm:$0xff]
    %v1363 = vld [vmem:[#allocation6 + $0x5d0] sm:$0xff]
    %v1364 = vld [vmem:[#allocation6 + $0x5d8] sm:$0xff]
    %v1365 = vld [vmem:[#allocation6 + $0x5e0] sm:$0xff]
    %v1366 = vld [vmem:[#allocation6 + $0x5e8] sm:$0xff]
    %v1367 = vld [vmem:[#allocation6 + $0x5f0] sm:$0xff]
    %v1368 = vld [vmem:[#allocation6 + $0x5f8] sm:$0xff]
    %v1369 = vld [vmem:[#allocation6 + $0x600] sm:$0xff]
    %v1370 = vld [vmem:[#allocation6 + $0x608] sm:$0xff]
    %v1371 = vld [vmem:[#allocation6 + $0x610] sm:$0xff]
    %v1372 = vld [vmem:[#allocation6 + $0x618] sm:$0xff]
    %v1373 = vld [vmem:[#allocation6 + $0x620] sm:$0xff]
    %v1374 = vld [vmem:[#allocation6 + $0x628] sm:$0xff]
    %v1375 = vld [vmem:[#allocation6 + $0x630] sm:$0xff]
    %v1376 = vld [vmem:[#allocation6 + $0x638] sm:$0xff]
    %v1377 = vld [vmem:[#allocation6 + $0x640] sm:$0xff]
    %v1378 = vld [vmem:[#allocation6 + $0x648] sm:$0xff]
    %v1379 = vld [vmem:[#allocation6 + $0x650] sm:$0xff]
    %v1380 = vld [vmem:[#allocation6 + $0x658] sm:$0xff]
    %v1381 = vld [vmem:[#allocation6 + $0x660] sm:$0xff]
    %v1382 = vld [vmem:[#allocation6 + $0x668] sm:$0xff]
    %v1383 = vld [vmem:[#allocation6 + $0x670] sm:$0xff]
    %v1384 = vld [vmem:[#allocation6 + $0x678] sm:$0xff]
    %v1385 = vld [vmem:[#allocation6 + $0x680] sm:$0xff]
    %v1386 = vld [vmem:[#allocation6 + $0x688] sm:$0xff]
    %v1387 = vld [vmem:[#allocation6 + $0x690] sm:$0xff]
    %v1388 = vld [vmem:[#allocation6 + $0x698] sm:$0xff]
    %v1389 = vld [vmem:[#allocation6 + $0x6a0] sm:$0xff]
    %v1390 = vld [vmem:[#allocation6 + $0x6a8] sm:$0xff]
    %v1391 = vld [vmem:[#allocation6 + $0x6b0] sm:$0xff]
    %v1392 = vld [vmem:[#allocation6 + $0x6b8] sm:$0xff]
    %v1393 = vld [vmem:[#allocation6 + $0x6c0] sm:$0xff]
    %v1394 = vld [vmem:[#allocation6 + $0x6c8] sm:$0xff]
    %v1395 = vld [vmem:[#allocation6 + $0x6d0] sm:$0xff]
    %v1396 = vld [vmem:[#allocation6 + $0x6d8] sm:$0xff]
    %v1397 = vld [vmem:[#allocation6 + $0x6e0] sm:$0xff]
    %v1398 = vld [vmem:[#allocation6 + $0x6e8] sm:$0xff]
    %v1399 = vld [vmem:[#allocation6 + $0x6f0] sm:$0xff]
    %v1400 = vld [vmem:[#allocation6 + $0x6f8] sm:$0xff]
    %v1401 = vld [vmem:[#allocation6 + $0x700] sm:$0xff]
    %v1402 = vld [vmem:[#allocation6 + $0x708] sm:$0xff]
    %v1403 = vld [vmem:[#allocation6 + $0x710] sm:$0xff]
    %v1404 = vld [vmem:[#allocation6 + $0x718] sm:$0xff]
    %v1405 = vld [vmem:[#allocation6 + $0x720] sm:$0xff]
    %v1406 = vld [vmem:[#allocation6 + $0x728] sm:$0xff]
    %v1407 = vld [vmem:[#allocation6 + $0x730] sm:$0xff]
    %v1408 = vld [vmem:[#allocation6 + $0x738] sm:$0xff]
    %v1409 = vld [vmem:[#allocation6 + $0x740] sm:$0xff]
    %v1410 = vld [vmem:[#allocation6 + $0x748] sm:$0xff]
    %v1411 = vld [vmem:[#allocation6 + $0x750] sm:$0xff]
    %v1412 = vld [vmem:[#allocation6 + $0x758] sm:$0xff]
    %v1413 = vld [vmem:[#allocation6 + $0x760] sm:$0xff]
    %v1414 = vld [vmem:[#allocation6 + $0x768] sm:$0xff]
    %v1415 = vld [vmem:[#allocation6 + $0x770] sm:$0xff]
    %v1416 = vld [vmem:[#allocation6 + $0x778] sm:$0xff]
    %v1417 = vld [vmem:[#allocation6 + $0x780] sm:$0xff]
    %v1418 = vld [vmem:[#allocation6 + $0x788] sm:$0xff]
    %v1419 = vld [vmem:[#allocation6 + $0x790] sm:$0xff]
    %v1420 = vld [vmem:[#allocation6 + $0x798] sm:$0xff]
    %v1421 = vld [vmem:[#allocation6 + $0x7a0] sm:$0xff]
    %v1422 = vld [vmem:[#allocation6 + $0x7a8] sm:$0xff]
    %v1423 = vld [vmem:[#allocation6 + $0x7b0] sm:$0xff]
    %v1424 = vld [vmem:[#allocation6 + $0x7b8] sm:$0xff]
    %v1425 = vld [vmem:[#allocation6 + $0x7c0] sm:$0xff]
    %v1426 = vld [vmem:[#allocation6 + $0x7c8] sm:$0xff]
    %v1427 = vld [vmem:[#allocation6 + $0x7d0] sm:$0xff]
    %v1428 = vld [vmem:[#allocation6 + $0x7d8] sm:$0xff]
    %v1429 = vld [vmem:[#allocation6 + $0x7e0] sm:$0xff]
    %v1430 = vld [vmem:[#allocation6 + $0x7e8] sm:$0xff]
    %v1431 = vld [vmem:[#allocation6 + $0x7f0] sm:$0xff]
    %v1432 = vld [vmem:[#allocation6 + $0x7f8] sm:$0xff]
    %v1433 = vld [vmem:[%s9] sm:$0xf]
    %v1435 = vlaneseq
    %v1436 = vshrl.u32 %v1435, 7
    %v1437 = vsub.s32 0, %v1436
    %v1438 = vrot.slane %v1433, %v1437
    %v1439 = vlaneseq
    %v1440 = vshrl.u32 %v1439, 7
    %v1441 = vsub.s32 1, %v1440
    %v1442 = vrot.slane %v1433, %v1441
    %v1443 = vlaneseq
    %v1444 = vshrl.u32 %v1443, 7
    %v1445 = vsub.s32 2, %v1444
    %v1446 = vrot.slane %v1433, %v1445
    %v1447 = vlaneseq
    %v1448 = vshrl.u32 %v1447, 7
    %v1449 = vsub.s32 3, %v1448
    %v1450 = vrot.slane %v1433, %v1449
    %v1711 = vunpack.c.l.b16 %v1177
    %v1712 = vunpack.c.h.b16 %v1177
    %v1713 = vunpack.c.l.b16 %v1178
    %v1714 = vunpack.c.h.b16 %v1178
    %v1715 = vunpack.c.l.b16 %v1179
    %v1716 = vunpack.c.h.b16 %v1179
    %v1717 = vunpack.c.l.b16 %v1180
    %v1718 = vunpack.c.h.b16 %v1180
    %v1719 = vunpack.c.l.b16 %v1181
    %v1720 = vunpack.c.h.b16 %v1181
    %v1721 = vunpack.c.l.b16 %v1182
    %v1722 = vunpack.c.h.b16 %v1182
    %v1723 = vunpack.c.l.b16 %v1183
    %v1724 = vunpack.c.h.b16 %v1183
    %v1725 = vunpack.c.l.b16 %v1184
    %v1726 = vunpack.c.h.b16 %v1184
    %v1727 = vunpack.c.l.b16 %v1185
    %v1728 = vunpack.c.h.b16 %v1185
    %v1729 = vunpack.c.l.b16 %v1186
    %v1730 = vunpack.c.h.b16 %v1186
    %v1731 = vunpack.c.l.b16 %v1187
    %v1732 = vunpack.c.h.b16 %v1187
    %v1733 = vunpack.c.l.b16 %v1188
    %v1734 = vunpack.c.h.b16 %v1188
    %v1735 = vunpack.c.l.b16 %v1189
    %v1736 = vunpack.c.h.b16 %v1189
    %v1737 = vunpack.c.l.b16 %v1190
    %v1738 = vunpack.c.h.b16 %v1190
    %v1739 = vunpack.c.l.b16 %v1191
    %v1740 = vunpack.c.h.b16 %v1191
    %v1741 = vunpack.c.l.b16 %v1192
    %v1742 = vunpack.c.h.b16 %v1192
    %v1743 = vunpack.c.l.b16 %v1193
    %v1744 = vunpack.c.h.b16 %v1193
    %v1745 = vunpack.c.l.b16 %v1194
    %v1746 = vunpack.c.h.b16 %v1194
    %v1747 = vunpack.c.l.b16 %v1195
    %v1748 = vunpack.c.h.b16 %v1195
    %v1749 = vunpack.c.l.b16 %v1196
    %v1750 = vunpack.c.h.b16 %v1196
    %v1751 = vunpack.c.l.b16 %v1197
    %v1752 = vunpack.c.h.b16 %v1197
    %v1753 = vunpack.c.l.b16 %v1198
    %v1754 = vunpack.c.h.b16 %v1198
    %v1755 = vunpack.c.l.b16 %v1199
    %v1756 = vunpack.c.h.b16 %v1199
    %v1757 = vunpack.c.l.b16 %v1200
    %v1758 = vunpack.c.h.b16 %v1200
    %v1759 = vunpack.c.l.b16 %v1201
    %v1760 = vunpack.c.h.b16 %v1201
    %v1761 = vunpack.c.l.b16 %v1202
    %v1762 = vunpack.c.h.b16 %v1202
    %v1763 = vunpack.c.l.b16 %v1203
    %v1764 = vunpack.c.h.b16 %v1203
    %v1765 = vunpack.c.l.b16 %v1204
    %v1766 = vunpack.c.h.b16 %v1204
    %v1767 = vunpack.c.l.b16 %v1205
    %v1768 = vunpack.c.h.b16 %v1205
    %v1769 = vunpack.c.l.b16 %v1206
    %v1770 = vunpack.c.h.b16 %v1206
    %v1771 = vunpack.c.l.b16 %v1207
    %v1772 = vunpack.c.h.b16 %v1207
    %v1773 = vunpack.c.l.b16 %v1208
    %v1774 = vunpack.c.h.b16 %v1208
    %v1775 = vunpack.c.l.b16 %v1209
    %v1776 = vunpack.c.h.b16 %v1209
    %v1777 = vunpack.c.l.b16 %v1210
    %v1778 = vunpack.c.h.b16 %v1210
    %v1779 = vunpack.c.l.b16 %v1211
    %v1780 = vunpack.c.h.b16 %v1211
    %v1781 = vunpack.c.l.b16 %v1212
    %v1782 = vunpack.c.h.b16 %v1212
    %v1783 = vunpack.c.l.b16 %v1213
    %v1784 = vunpack.c.h.b16 %v1213
    %v1785 = vunpack.c.l.b16 %v1214
    %v1786 = vunpack.c.h.b16 %v1214
    %v1787 = vunpack.c.l.b16 %v1215
    %v1788 = vunpack.c.h.b16 %v1215
    %v1789 = vunpack.c.l.b16 %v1216
    %v1790 = vunpack.c.h.b16 %v1216
    %v1791 = vunpack.c.l.b16 %v1217
    %v1792 = vunpack.c.h.b16 %v1217
    %v1793 = vunpack.c.l.b16 %v1218
    %v1794 = vunpack.c.h.b16 %v1218
    %v1795 = vunpack.c.l.b16 %v1219
    %v1796 = vunpack.c.h.b16 %v1219
    %v1797 = vunpack.c.l.b16 %v1220
    %v1798 = vunpack.c.h.b16 %v1220
    %v1799 = vunpack.c.l.b16 %v1221
    %v1800 = vunpack.c.h.b16 %v1221
    %v1801 = vunpack.c.l.b16 %v1222
    %v1802 = vunpack.c.h.b16 %v1222
    %v1803 = vunpack.c.l.b16 %v1223
    %v1804 = vunpack.c.h.b16 %v1223
    %v1805 = vunpack.c.l.b16 %v1224
    %v1806 = vunpack.c.h.b16 %v1224
    %v1807 = vunpack.c.l.b16 %v1225
    %v1808 = vunpack.c.h.b16 %v1225
    %v1809 = vunpack.c.l.b16 %v1226
    %v1810 = vunpack.c.h.b16 %v1226
    %v1811 = vunpack.c.l.b16 %v1227
    %v1812 = vunpack.c.h.b16 %v1227
    %v1813 = vunpack.c.l.b16 %v1228
    %v1814 = vunpack.c.h.b16 %v1228
    %v1815 = vunpack.c.l.b16 %v1229
    %v1816 = vunpack.c.h.b16 %v1229
    %v1817 = vunpack.c.l.b16 %v1230
    %v1818 = vunpack.c.h.b16 %v1230
    %v1819 = vunpack.c.l.b16 %v1231
    %v1820 = vunpack.c.h.b16 %v1231
    %v1821 = vunpack.c.l.b16 %v1232
    %v1822 = vunpack.c.h.b16 %v1232
    %v1823 = vunpack.c.l.b16 %v1233
    %v1824 = vunpack.c.h.b16 %v1233
    %v1825 = vunpack.c.l.b16 %v1234
    %v1826 = vunpack.c.h.b16 %v1234
    %v1827 = vunpack.c.l.b16 %v1235
    %v1828 = vunpack.c.h.b16 %v1235
    %v1829 = vunpack.c.l.b16 %v1236
    %v1830 = vunpack.c.h.b16 %v1236
    %v1831 = vunpack.c.l.b16 %v1237
    %v1832 = vunpack.c.h.b16 %v1237
    %v1833 = vunpack.c.l.b16 %v1238
    %v1834 = vunpack.c.h.b16 %v1238
    %v1835 = vunpack.c.l.b16 %v1239
    %v1836 = vunpack.c.h.b16 %v1239
    %v1837 = vunpack.c.l.b16 %v1240
    %v1838 = vunpack.c.h.b16 %v1240
    %v1839 = vunpack.c.l.b16 %v1241
    %v1840 = vunpack.c.h.b16 %v1241
    %v1841 = vunpack.c.l.b16 %v1242
    %v1842 = vunpack.c.h.b16 %v1242
    %v1843 = vunpack.c.l.b16 %v1243
    %v1844 = vunpack.c.h.b16 %v1243
    %v1845 = vunpack.c.l.b16 %v1244
    %v1846 = vunpack.c.h.b16 %v1244
    %v1847 = vunpack.c.l.b16 %v1245
    %v1848 = vunpack.c.h.b16 %v1245
    %v1849 = vunpack.c.l.b16 %v1246
    %v1850 = vunpack.c.h.b16 %v1246
    %v1851 = vunpack.c.l.b16 %v1247
    %v1852 = vunpack.c.h.b16 %v1247
    %v1853 = vunpack.c.l.b16 %v1248
    %v1854 = vunpack.c.h.b16 %v1248
    %v1855 = vunpack.c.l.b16 %v1249
    %v1856 = vunpack.c.h.b16 %v1249
    %v1857 = vunpack.c.l.b16 %v1250
    %v1858 = vunpack.c.h.b16 %v1250
    %v1859 = vunpack.c.l.b16 %v1251
    %v1860 = vunpack.c.h.b16 %v1251
    %v1861 = vunpack.c.l.b16 %v1252
    %v1862 = vunpack.c.h.b16 %v1252
    %v1863 = vunpack.c.l.b16 %v1253
    %v1864 = vunpack.c.h.b16 %v1253
    %v1865 = vunpack.c.l.b16 %v1254
    %v1866 = vunpack.c.h.b16 %v1254
    %v1867 = vunpack.c.l.b16 %v1255
    %v1868 = vunpack.c.h.b16 %v1255
    %v1869 = vunpack.c.l.b16 %v1256
    %v1870 = vunpack.c.h.b16 %v1256
    %v1871 = vunpack.c.l.b16 %v1257
    %v1872 = vunpack.c.h.b16 %v1257
    %v1873 = vunpack.c.l.b16 %v1258
    %v1874 = vunpack.c.h.b16 %v1258
    %v1875 = vunpack.c.l.b16 %v1259
    %v1876 = vunpack.c.h.b16 %v1259
    %v1877 = vunpack.c.l.b16 %v1260
    %v1878 = vunpack.c.h.b16 %v1260
    %v1879 = vunpack.c.l.b16 %v1261
    %v1880 = vunpack.c.h.b16 %v1261
    %v1881 = vunpack.c.l.b16 %v1262
    %v1882 = vunpack.c.h.b16 %v1262
    %v1883 = vunpack.c.l.b16 %v1263
    %v1884 = vunpack.c.h.b16 %v1263
    %v1885 = vunpack.c.l.b16 %v1264
    %v1886 = vunpack.c.h.b16 %v1264
    %v1887 = vunpack.c.l.b16 %v1265
    %v1888 = vunpack.c.h.b16 %v1265
    %v1889 = vunpack.c.l.b16 %v1266
    %v1890 = vunpack.c.h.b16 %v1266
    %v1891 = vunpack.c.l.b16 %v1267
    %v1892 = vunpack.c.h.b16 %v1267
    %v1893 = vunpack.c.l.b16 %v1268
    %v1894 = vunpack.c.h.b16 %v1268
    %v1895 = vunpack.c.l.b16 %v1269
    %v1896 = vunpack.c.h.b16 %v1269
    %v1897 = vunpack.c.l.b16 %v1270
    %v1898 = vunpack.c.h.b16 %v1270
    %v1899 = vunpack.c.l.b16 %v1271
    %v1900 = vunpack.c.h.b16 %v1271
    %v1901 = vunpack.c.l.b16 %v1272
    %v1902 = vunpack.c.h.b16 %v1272
    %v1903 = vunpack.c.l.b16 %v1273
    %v1904 = vunpack.c.h.b16 %v1273
    %v1905 = vunpack.c.l.b16 %v1274
    %v1906 = vunpack.c.h.b16 %v1274
    %v1907 = vunpack.c.l.b16 %v1275
    %v1908 = vunpack.c.h.b16 %v1275
    %v1909 = vunpack.c.l.b16 %v1276
    %v1910 = vunpack.c.h.b16 %v1276
    %v1911 = vunpack.c.l.b16 %v1277
    %v1912 = vunpack.c.h.b16 %v1277
    %v1913 = vunpack.c.l.b16 %v1278
    %v1914 = vunpack.c.h.b16 %v1278
    %v1915 = vunpack.c.l.b16 %v1279
    %v1916 = vunpack.c.h.b16 %v1279
    %v1917 = vunpack.c.l.b16 %v1280
    %v1918 = vunpack.c.h.b16 %v1280
    %v1919 = vunpack.c.l.b16 %v1281
    %v1920 = vunpack.c.h.b16 %v1281
    %v1921 = vunpack.c.l.b16 %v1282
    %v1922 = vunpack.c.h.b16 %v1282
    %v1923 = vunpack.c.l.b16 %v1283
    %v1924 = vunpack.c.h.b16 %v1283
    %v1925 = vunpack.c.l.b16 %v1284
    %v1926 = vunpack.c.h.b16 %v1284
    %v1927 = vunpack.c.l.b16 %v1285
    %v1928 = vunpack.c.h.b16 %v1285
    %v1929 = vunpack.c.l.b16 %v1286
    %v1930 = vunpack.c.h.b16 %v1286
    %v1931 = vunpack.c.l.b16 %v1287
    %v1932 = vunpack.c.h.b16 %v1287
    %v1933 = vunpack.c.l.b16 %v1288
    %v1934 = vunpack.c.h.b16 %v1288
    %v1935 = vunpack.c.l.b16 %v1289
    %v1936 = vunpack.c.h.b16 %v1289
    %v1937 = vunpack.c.l.b16 %v1290
    %v1938 = vunpack.c.h.b16 %v1290
    %v1939 = vunpack.c.l.b16 %v1291
    %v1940 = vunpack.c.h.b16 %v1291
    %v1941 = vunpack.c.l.b16 %v1292
    %v1942 = vunpack.c.h.b16 %v1292
    %v1943 = vunpack.c.l.b16 %v1293
    %v1944 = vunpack.c.h.b16 %v1293
    %v1945 = vunpack.c.l.b16 %v1294
    %v1946 = vunpack.c.h.b16 %v1294
    %v1947 = vunpack.c.l.b16 %v1295
    %v1948 = vunpack.c.h.b16 %v1295
    %v1949 = vunpack.c.l.b16 %v1296
    %v1950 = vunpack.c.h.b16 %v1296
    %v1951 = vunpack.c.l.b16 %v1297
    %v1952 = vunpack.c.h.b16 %v1297
    %v1953 = vunpack.c.l.b16 %v1298
    %v1954 = vunpack.c.h.b16 %v1298
    %v1955 = vunpack.c.l.b16 %v1299
    %v1956 = vunpack.c.h.b16 %v1299
    %v1957 = vunpack.c.l.b16 %v1300
    %v1958 = vunpack.c.h.b16 %v1300
    %v1959 = vunpack.c.l.b16 %v1301
    %v1960 = vunpack.c.h.b16 %v1301
    %v1961 = vunpack.c.l.b16 %v1302
    %v1962 = vunpack.c.h.b16 %v1302
    %v1963 = vunpack.c.l.b16 %v1303
    %v1964 = vunpack.c.h.b16 %v1303
    %v1965 = vunpack.c.l.b16 %v1304
    %v1966 = vunpack.c.h.b16 %v1304
    %v1967 = vunpack.c.l.b16 %v1305
    %v1968 = vunpack.c.h.b16 %v1305
    %v1969 = vunpack.c.l.b16 %v1306
    %v1970 = vunpack.c.h.b16 %v1306
    %v1971 = vunpack.c.l.b16 %v1307
    %v1972 = vunpack.c.h.b16 %v1307
    %v1973 = vunpack.c.l.b16 %v1308
    %v1974 = vunpack.c.h.b16 %v1308
    %v1975 = vunpack.c.l.b16 %v1309
    %v1976 = vunpack.c.h.b16 %v1309
    %v1977 = vunpack.c.l.b16 %v1310
    %v1978 = vunpack.c.h.b16 %v1310
    %v1979 = vunpack.c.l.b16 %v1311
    %v1980 = vunpack.c.h.b16 %v1311
    %v1981 = vunpack.c.l.b16 %v1312
    %v1982 = vunpack.c.h.b16 %v1312
    %v1983 = vunpack.c.l.b16 %v1313
    %v1984 = vunpack.c.h.b16 %v1313
    %v1985 = vunpack.c.l.b16 %v1314
    %v1986 = vunpack.c.h.b16 %v1314
    %v1987 = vunpack.c.l.b16 %v1315
    %v1988 = vunpack.c.h.b16 %v1315
    %v1989 = vunpack.c.l.b16 %v1316
    %v1990 = vunpack.c.h.b16 %v1316
    %v1991 = vunpack.c.l.b16 %v1317
    %v1992 = vunpack.c.h.b16 %v1317
    %v1993 = vunpack.c.l.b16 %v1318
    %v1994 = vunpack.c.h.b16 %v1318
    %v1995 = vunpack.c.l.b16 %v1319
    %v1996 = vunpack.c.h.b16 %v1319
    %v1997 = vunpack.c.l.b16 %v1320
    %v1998 = vunpack.c.h.b16 %v1320
    %v1999 = vunpack.c.l.b16 %v1321
    %v2000 = vunpack.c.h.b16 %v1321
    %v2001 = vunpack.c.l.b16 %v1322
    %v2002 = vunpack.c.h.b16 %v1322
    %v2003 = vunpack.c.l.b16 %v1323
    %v2004 = vunpack.c.h.b16 %v1323
    %v2005 = vunpack.c.l.b16 %v1324
    %v2006 = vunpack.c.h.b16 %v1324
    %v2007 = vunpack.c.l.b16 %v1325
    %v2008 = vunpack.c.h.b16 %v1325
    %v2009 = vunpack.c.l.b16 %v1326
    %v2010 = vunpack.c.h.b16 %v1326
    %v2011 = vunpack.c.l.b16 %v1327
    %v2012 = vunpack.c.h.b16 %v1327
    %v2013 = vunpack.c.l.b16 %v1328
    %v2014 = vunpack.c.h.b16 %v1328
    %v2015 = vunpack.c.l.b16 %v1329
    %v2016 = vunpack.c.h.b16 %v1329
    %v2017 = vunpack.c.l.b16 %v1330
    %v2018 = vunpack.c.h.b16 %v1330
    %v2019 = vunpack.c.l.b16 %v1331
    %v2020 = vunpack.c.h.b16 %v1331
    %v2021 = vunpack.c.l.b16 %v1332
    %v2022 = vunpack.c.h.b16 %v1332
    %v2023 = vunpack.c.l.b16 %v1333
    %v2024 = vunpack.c.h.b16 %v1333
    %v2025 = vunpack.c.l.b16 %v1334
    %v2026 = vunpack.c.h.b16 %v1334
    %v2027 = vunpack.c.l.b16 %v1335
    %v2028 = vunpack.c.h.b16 %v1335
    %v2029 = vunpack.c.l.b16 %v1336
    %v2030 = vunpack.c.h.b16 %v1336
    %v2031 = vunpack.c.l.b16 %v1337
    %v2032 = vunpack.c.h.b16 %v1337
    %v2033 = vunpack.c.l.b16 %v1338
    %v2034 = vunpack.c.h.b16 %v1338
    %v2035 = vunpack.c.l.b16 %v1339
    %v2036 = vunpack.c.h.b16 %v1339
    %v2037 = vunpack.c.l.b16 %v1340
    %v2038 = vunpack.c.h.b16 %v1340
    %v2039 = vunpack.c.l.b16 %v1341
    %v2040 = vunpack.c.h.b16 %v1341
    %v2041 = vunpack.c.l.b16 %v1342
    %v2042 = vunpack.c.h.b16 %v1342
    %v2043 = vunpack.c.l.b16 %v1343
    %v2044 = vunpack.c.h.b16 %v1343
    %v2045 = vunpack.c.l.b16 %v1344
    %v2046 = vunpack.c.h.b16 %v1344
    %v2047 = vunpack.c.l.b16 %v1345
    %v2048 = vunpack.c.h.b16 %v1345
    %v2049 = vunpack.c.l.b16 %v1346
    %v2050 = vunpack.c.h.b16 %v1346
    %v2051 = vunpack.c.l.b16 %v1347
    %v2052 = vunpack.c.h.b16 %v1347
    %v2053 = vunpack.c.l.b16 %v1348
    %v2054 = vunpack.c.h.b16 %v1348
    %v2055 = vunpack.c.l.b16 %v1349
    %v2056 = vunpack.c.h.b16 %v1349
    %v2057 = vunpack.c.l.b16 %v1350
    %v2058 = vunpack.c.h.b16 %v1350
    %v2059 = vunpack.c.l.b16 %v1351
    %v2060 = vunpack.c.h.b16 %v1351
    %v2061 = vunpack.c.l.b16 %v1352
    %v2062 = vunpack.c.h.b16 %v1352
    %v2063 = vunpack.c.l.b16 %v1353
    %v2064 = vunpack.c.h.b16 %v1353
    %v2065 = vunpack.c.l.b16 %v1354
    %v2066 = vunpack.c.h.b16 %v1354
    %v2067 = vunpack.c.l.b16 %v1355
    %v2068 = vunpack.c.h.b16 %v1355
    %v2069 = vunpack.c.l.b16 %v1356
    %v2070 = vunpack.c.h.b16 %v1356
    %v2071 = vunpack.c.l.b16 %v1357
    %v2072 = vunpack.c.h.b16 %v1357
    %v2073 = vunpack.c.l.b16 %v1358
    %v2074 = vunpack.c.h.b16 %v1358
    %v2075 = vunpack.c.l.b16 %v1359
    %v2076 = vunpack.c.h.b16 %v1359
    %v2077 = vunpack.c.l.b16 %v1360
    %v2078 = vunpack.c.h.b16 %v1360
    %v2079 = vunpack.c.l.b16 %v1361
    %v2080 = vunpack.c.h.b16 %v1361
    %v2081 = vunpack.c.l.b16 %v1362
    %v2082 = vunpack.c.h.b16 %v1362
    %v2083 = vunpack.c.l.b16 %v1363
    %v2084 = vunpack.c.h.b16 %v1363
    %v2085 = vunpack.c.l.b16 %v1364
    %v2086 = vunpack.c.h.b16 %v1364
    %v2087 = vunpack.c.l.b16 %v1365
    %v2088 = vunpack.c.h.b16 %v1365
    %v2089 = vunpack.c.l.b16 %v1366
    %v2090 = vunpack.c.h.b16 %v1366
    %v2091 = vunpack.c.l.b16 %v1367
    %v2092 = vunpack.c.h.b16 %v1367
    %v2093 = vunpack.c.l.b16 %v1368
    %v2094 = vunpack.c.h.b16 %v1368
    %v2095 = vunpack.c.l.b16 %v1369
    %v2096 = vunpack.c.h.b16 %v1369
    %v2097 = vunpack.c.l.b16 %v1370
    %v2098 = vunpack.c.h.b16 %v1370
    %v2099 = vunpack.c.l.b16 %v1371
    %v2100 = vunpack.c.h.b16 %v1371
    %v2101 = vunpack.c.l.b16 %v1372
    %v2102 = vunpack.c.h.b16 %v1372
    %v2103 = vunpack.c.l.b16 %v1373
    %v2104 = vunpack.c.h.b16 %v1373
    %v2105 = vunpack.c.l.b16 %v1374
    %v2106 = vunpack.c.h.b16 %v1374
    %v2107 = vunpack.c.l.b16 %v1375
    %v2108 = vunpack.c.h.b16 %v1375
    %v2109 = vunpack.c.l.b16 %v1376
    %v2110 = vunpack.c.h.b16 %v1376
    %v2111 = vunpack.c.l.b16 %v1377
    %v2112 = vunpack.c.h.b16 %v1377
    %v2113 = vunpack.c.l.b16 %v1378
    %v2114 = vunpack.c.h.b16 %v1378
    %v2115 = vunpack.c.l.b16 %v1379
    %v2116 = vunpack.c.h.b16 %v1379
    %v2117 = vunpack.c.l.b16 %v1380
    %v2118 = vunpack.c.h.b16 %v1380
    %v2119 = vunpack.c.l.b16 %v1381
    %v2120 = vunpack.c.h.b16 %v1381
    %v2121 = vunpack.c.l.b16 %v1382
    %v2122 = vunpack.c.h.b16 %v1382
    %v2123 = vunpack.c.l.b16 %v1383
    %v2124 = vunpack.c.h.b16 %v1383
    %v2125 = vunpack.c.l.b16 %v1384
    %v2126 = vunpack.c.h.b16 %v1384
    %v2127 = vunpack.c.l.b16 %v1385
    %v2128 = vunpack.c.h.b16 %v1385
    %v2129 = vunpack.c.l.b16 %v1386
    %v2130 = vunpack.c.h.b16 %v1386
    %v2131 = vunpack.c.l.b16 %v1387
    %v2132 = vunpack.c.h.b16 %v1387
    %v2133 = vunpack.c.l.b16 %v1388
    %v2134 = vunpack.c.h.b16 %v1388
    %v2135 = vunpack.c.l.b16 %v1389
    %v2136 = vunpack.c.h.b16 %v1389
    %v2137 = vunpack.c.l.b16 %v1390
    %v2138 = vunpack.c.h.b16 %v1390
    %v2139 = vunpack.c.l.b16 %v1391
    %v2140 = vunpack.c.h.b16 %v1391
    %v2141 = vunpack.c.l.b16 %v1392
    %v2142 = vunpack.c.h.b16 %v1392
    %v2143 = vunpack.c.l.b16 %v1393
    %v2144 = vunpack.c.h.b16 %v1393
    %v2145 = vunpack.c.l.b16 %v1394
    %v2146 = vunpack.c.h.b16 %v1394
    %v2147 = vunpack.c.l.b16 %v1395
    %v2148 = vunpack.c.h.b16 %v1395
    %v2149 = vunpack.c.l.b16 %v1396
    %v2150 = vunpack.c.h.b16 %v1396
    %v2151 = vunpack.c.l.b16 %v1397
    %v2152 = vunpack.c.h.b16 %v1397
    %v2153 = vunpack.c.l.b16 %v1398
    %v2154 = vunpack.c.h.b16 %v1398
    %v2155 = vunpack.c.l.b16 %v1399
    %v2156 = vunpack.c.h.b16 %v1399
    %v2157 = vunpack.c.l.b16 %v1400
    %v2158 = vunpack.c.h.b16 %v1400
    %v2159 = vunpack.c.l.b16 %v1401
    %v2160 = vunpack.c.h.b16 %v1401
    %v2161 = vunpack.c.l.b16 %v1402
    %v2162 = vunpack.c.h.b16 %v1402
    %v2163 = vunpack.c.l.b16 %v1403
    %v2164 = vunpack.c.h.b16 %v1403
    %v2165 = vunpack.c.l.b16 %v1404
    %v2166 = vunpack.c.h.b16 %v1404
    %v2167 = vunpack.c.l.b16 %v1405
    %v2168 = vunpack.c.h.b16 %v1405
    %v2169 = vunpack.c.l.b16 %v1406
    %v2170 = vunpack.c.h.b16 %v1406
    %v2171 = vunpack.c.l.b16 %v1407
    %v2172 = vunpack.c.h.b16 %v1407
    %v2173 = vunpack.c.l.b16 %v1408
    %v2174 = vunpack.c.h.b16 %v1408
    %v2175 = vunpack.c.l.b16 %v1409
    %v2176 = vunpack.c.h.b16 %v1409
    %v2177 = vunpack.c.l.b16 %v1410
    %v2178 = vunpack.c.h.b16 %v1410
    %v2179 = vunpack.c.l.b16 %v1411
    %v2180 = vunpack.c.h.b16 %v1411
    %v2181 = vunpack.c.l.b16 %v1412
    %v2182 = vunpack.c.h.b16 %v1412
    %v2183 = vunpack.c.l.b16 %v1413
    %v2184 = vunpack.c.h.b16 %v1413
    %v2185 = vunpack.c.l.b16 %v1414
    %v2186 = vunpack.c.h.b16 %v1414
    %v2187 = vunpack.c.l.b16 %v1415
    %v2188 = vunpack.c.h.b16 %v1415
    %v2189 = vunpack.c.l.b16 %v1416
    %v2190 = vunpack.c.h.b16 %v1416
    %v2191 = vunpack.c.l.b16 %v1417
    %v2192 = vunpack.c.h.b16 %v1417
    %v2193 = vunpack.c.l.b16 %v1418
    %v2194 = vunpack.c.h.b16 %v1418
    %v2195 = vunpack.c.l.b16 %v1419
    %v2196 = vunpack.c.h.b16 %v1419
    %v2197 = vunpack.c.l.b16 %v1420
    %v2198 = vunpack.c.h.b16 %v1420
    %v2199 = vunpack.c.l.b16 %v1421
    %v2200 = vunpack.c.h.b16 %v1421
    %v2201 = vunpack.c.l.b16 %v1422
    %v2202 = vunpack.c.h.b16 %v1422
    %v2203 = vunpack.c.l.b16 %v1423
    %v2204 = vunpack.c.h.b16 %v1423
    %v2205 = vunpack.c.l.b16 %v1424
    %v2206 = vunpack.c.h.b16 %v1424
    %v2207 = vunpack.c.l.b16 %v1425
    %v2208 = vunpack.c.h.b16 %v1425
    %v2209 = vunpack.c.l.b16 %v1426
    %v2210 = vunpack.c.h.b16 %v1426
    %v2211 = vunpack.c.l.b16 %v1427
    %v2212 = vunpack.c.h.b16 %v1427
    %v2213 = vunpack.c.l.b16 %v1428
    %v2214 = vunpack.c.h.b16 %v1428
    %v2215 = vunpack.c.l.b16 %v1429
    %v2216 = vunpack.c.h.b16 %v1429
    %v2217 = vunpack.c.l.b16 %v1430
    %v2218 = vunpack.c.h.b16 %v1430
    %v2219 = vunpack.c.l.b16 %v1431
    %v2220 = vunpack.c.h.b16 %v1431
    %v2221 = vunpack.c.l.b16 %v1432
    %v2222 = vunpack.c.h.b16 %v1432
    %v2223 = vpack.c.b16 %v1715, %v1711
    %v2224 = vpack.c.b16 %v1716, %v1712
    %v2225 = vpack.c.b16 %v1717, %v1713
    %v2226 = vpack.c.b16 %v1718, %v1714
    %v2227 = vpack.c.b16 %v1723, %v1719
    %v2228 = vpack.c.b16 %v1724, %v1720
    %v2229 = vpack.c.b16 %v1725, %v1721
    %v2230 = vpack.c.b16 %v1726, %v1722
    %v2231 = vpack.c.b16 %v1731, %v1727
    %v2232 = vpack.c.b16 %v1732, %v1728
    %v2233 = vpack.c.b16 %v1733, %v1729
    %v2234 = vpack.c.b16 %v1734, %v1730
    %v2235 = vpack.c.b16 %v1739, %v1735
    %v2236 = vpack.c.b16 %v1740, %v1736
    %v2237 = vpack.c.b16 %v1741, %v1737
    %v2238 = vpack.c.b16 %v1742, %v1738
    %v2239 = vpack.c.b16 %v1747, %v1743
    %v2240 = vpack.c.b16 %v1748, %v1744
    %v2241 = vpack.c.b16 %v1749, %v1745
    %v2242 = vpack.c.b16 %v1750, %v1746
    %v2243 = vpack.c.b16 %v1755, %v1751
    %v2244 = vpack.c.b16 %v1756, %v1752
    %v2245 = vpack.c.b16 %v1757, %v1753
    %v2246 = vpack.c.b16 %v1758, %v1754
    %v2247 = vpack.c.b16 %v1763, %v1759
    %v2248 = vpack.c.b16 %v1764, %v1760
    %v2249 = vpack.c.b16 %v1765, %v1761
    %v2250 = vpack.c.b16 %v1766, %v1762
    %v2251 = vpack.c.b16 %v1771, %v1767
    %v2252 = vpack.c.b16 %v1772, %v1768
    %v2253 = vpack.c.b16 %v1773, %v1769
    %v2254 = vpack.c.b16 %v1774, %v1770
    %v2255 = vpack.c.b16 %v1779, %v1775
    %v2256 = vpack.c.b16 %v1780, %v1776
    %v2257 = vpack.c.b16 %v1781, %v1777
    %v2258 = vpack.c.b16 %v1782, %v1778
    %v2259 = vpack.c.b16 %v1787, %v1783
    %v2260 = vpack.c.b16 %v1788, %v1784
    %v2261 = vpack.c.b16 %v1789, %v1785
    %v2262 = vpack.c.b16 %v1790, %v1786
    %v2263 = vpack.c.b16 %v1795, %v1791
    %v2264 = vpack.c.b16 %v1796, %v1792
    %v2265 = vpack.c.b16 %v1797, %v1793
    %v2266 = vpack.c.b16 %v1798, %v1794
    %v2267 = vpack.c.b16 %v1803, %v1799
    %v2268 = vpack.c.b16 %v1804, %v1800
    %v2269 = vpack.c.b16 %v1805, %v1801
    %v2270 = vpack.c.b16 %v1806, %v1802
    %v2271 = vpack.c.b16 %v1811, %v1807
    %v2272 = vpack.c.b16 %v1812, %v1808
    %v2273 = vpack.c.b16 %v1813, %v1809
    %v2274 = vpack.c.b16 %v1814, %v1810
    %v2275 = vpack.c.b16 %v1819, %v1815
    %v2276 = vpack.c.b16 %v1820, %v1816
    %v2277 = vpack.c.b16 %v1821, %v1817
    %v2278 = vpack.c.b16 %v1822, %v1818
    %v2279 = vpack.c.b16 %v1827, %v1823
    %v2280 = vpack.c.b16 %v1828, %v1824
    %v2281 = vpack.c.b16 %v1829, %v1825
    %v2282 = vpack.c.b16 %v1830, %v1826
    %v2283 = vpack.c.b16 %v1835, %v1831
    %v2284 = vpack.c.b16 %v1836, %v1832
    %v2285 = vpack.c.b16 %v1837, %v1833
    %v2286 = vpack.c.b16 %v1838, %v1834
    %v2287 = vpack.c.b16 %v1843, %v1839
    %v2288 = vpack.c.b16 %v1844, %v1840
    %v2289 = vpack.c.b16 %v1845, %v1841
    %v2290 = vpack.c.b16 %v1846, %v1842
    %v2291 = vpack.c.b16 %v1851, %v1847
    %v2292 = vpack.c.b16 %v1852, %v1848
    %v2293 = vpack.c.b16 %v1853, %v1849
    %v2294 = vpack.c.b16 %v1854, %v1850
    %v2295 = vpack.c.b16 %v1859, %v1855
    %v2296 = vpack.c.b16 %v1860, %v1856
    %v2297 = vpack.c.b16 %v1861, %v1857
    %v2298 = vpack.c.b16 %v1862, %v1858
    %v2299 = vpack.c.b16 %v1867, %v1863
    %v2300 = vpack.c.b16 %v1868, %v1864
    %v2301 = vpack.c.b16 %v1869, %v1865
    %v2302 = vpack.c.b16 %v1870, %v1866
    %v2303 = vpack.c.b16 %v1875, %v1871
    %v2304 = vpack.c.b16 %v1876, %v1872
    %v2305 = vpack.c.b16 %v1877, %v1873
    %v2306 = vpack.c.b16 %v1878, %v1874
    %v2307 = vpack.c.b16 %v1883, %v1879
    %v2308 = vpack.c.b16 %v1884, %v1880
    %v2309 = vpack.c.b16 %v1885, %v1881
    %v2310 = vpack.c.b16 %v1886, %v1882
    %v2311 = vpack.c.b16 %v1891, %v1887
    %v2312 = vpack.c.b16 %v1892, %v1888
    %v2313 = vpack.c.b16 %v1893, %v1889
    %v2314 = vpack.c.b16 %v1894, %v1890
    %v2315 = vpack.c.b16 %v1899, %v1895
    %v2316 = vpack.c.b16 %v1900, %v1896
    %v2317 = vpack.c.b16 %v1901, %v1897
    %v2318 = vpack.c.b16 %v1902, %v1898
    %v2319 = vpack.c.b16 %v1907, %v1903
    %v2320 = vpack.c.b16 %v1908, %v1904
    %v2321 = vpack.c.b16 %v1909, %v1905
    %v2322 = vpack.c.b16 %v1910, %v1906
    %v2323 = vpack.c.b16 %v1915, %v1911
    %v2324 = vpack.c.b16 %v1916, %v1912
    %v2325 = vpack.c.b16 %v1917, %v1913
    %v2326 = vpack.c.b16 %v1918, %v1914
    %v2327 = vpack.c.b16 %v1923, %v1919
    %v2328 = vpack.c.b16 %v1924, %v1920
    %v2329 = vpack.c.b16 %v1925, %v1921
    %v2330 = vpack.c.b16 %v1926, %v1922
    %v2331 = vpack.c.b16 %v1931, %v1927
    %v2332 = vpack.c.b16 %v1932, %v1928
    %v2333 = vpack.c.b16 %v1933, %v1929
    %v2334 = vpack.c.b16 %v1934, %v1930
    %v2335 = vpack.c.b16 %v1939, %v1935
    %v2336 = vpack.c.b16 %v1940, %v1936
    %v2337 = vpack.c.b16 %v1941, %v1937
    %v2338 = vpack.c.b16 %v1942, %v1938
    %v2339 = vpack.c.b16 %v1947, %v1943
    %v2340 = vpack.c.b16 %v1948, %v1944
    %v2341 = vpack.c.b16 %v1949, %v1945
    %v2342 = vpack.c.b16 %v1950, %v1946
    %v2343 = vpack.c.b16 %v1955, %v1951
    %v2344 = vpack.c.b16 %v1956, %v1952
    %v2345 = vpack.c.b16 %v1957, %v1953
    %v2346 = vpack.c.b16 %v1958, %v1954
    %v2347 = vpack.c.b16 %v1963, %v1959
    %v2348 = vpack.c.b16 %v1964, %v1960
    %v2349 = vpack.c.b16 %v1965, %v1961
    %v2350 = vpack.c.b16 %v1966, %v1962
    %v2351 = vpack.c.b16 %v1971, %v1967
    %v2352 = vpack.c.b16 %v1972, %v1968
    %v2353 = vpack.c.b16 %v1973, %v1969
    %v2354 = vpack.c.b16 %v1974, %v1970
    %v2355 = vpack.c.b16 %v1979, %v1975
    %v2356 = vpack.c.b16 %v1980, %v1976
    %v2357 = vpack.c.b16 %v1981, %v1977
    %v2358 = vpack.c.b16 %v1982, %v1978
    %v2359 = vpack.c.b16 %v1987, %v1983
    %v2360 = vpack.c.b16 %v1988, %v1984
    %v2361 = vpack.c.b16 %v1989, %v1985
    %v2362 = vpack.c.b16 %v1990, %v1986
    %v2363 = vpack.c.b16 %v1995, %v1991
    %v2364 = vpack.c.b16 %v1996, %v1992
    %v2365 = vpack.c.b16 %v1997, %v1993
    %v2366 = vpack.c.b16 %v1998, %v1994
    %v2367 = vpack.c.b16 %v2003, %v1999
    %v2368 = vpack.c.b16 %v2004, %v2000
    %v2369 = vpack.c.b16 %v2005, %v2001
    %v2370 = vpack.c.b16 %v2006, %v2002
    %v2371 = vpack.c.b16 %v2011, %v2007
    %v2372 = vpack.c.b16 %v2012, %v2008
    %v2373 = vpack.c.b16 %v2013, %v2009
    %v2374 = vpack.c.b16 %v2014, %v2010
    %v2375 = vpack.c.b16 %v2019, %v2015
    %v2376 = vpack.c.b16 %v2020, %v2016
    %v2377 = vpack.c.b16 %v2021, %v2017
    %v2378 = vpack.c.b16 %v2022, %v2018
    %v2379 = vpack.c.b16 %v2027, %v2023
    %v2380 = vpack.c.b16 %v2028, %v2024
    %v2381 = vpack.c.b16 %v2029, %v2025
    %v2382 = vpack.c.b16 %v2030, %v2026
    %v2383 = vpack.c.b16 %v2035, %v2031
    %v2384 = vpack.c.b16 %v2036, %v2032
    %v2385 = vpack.c.b16 %v2037, %v2033
    %v2386 = vpack.c.b16 %v2038, %v2034
    %v2387 = vpack.c.b16 %v2043, %v2039
    %v2388 = vpack.c.b16 %v2044, %v2040
    %v2389 = vpack.c.b16 %v2045, %v2041
    %v2390 = vpack.c.b16 %v2046, %v2042
    %v2391 = vpack.c.b16 %v2051, %v2047
    %v2392 = vpack.c.b16 %v2052, %v2048
    %v2393 = vpack.c.b16 %v2053, %v2049
    %v2394 = vpack.c.b16 %v2054, %v2050
    %v2395 = vpack.c.b16 %v2059, %v2055
    %v2396 = vpack.c.b16 %v2060, %v2056
    %v2397 = vpack.c.b16 %v2061, %v2057
    %v2398 = vpack.c.b16 %v2062, %v2058
    %v2399 = vpack.c.b16 %v2067, %v2063
    %v2400 = vpack.c.b16 %v2068, %v2064
    %v2401 = vpack.c.b16 %v2069, %v2065
    %v2402 = vpack.c.b16 %v2070, %v2066
    %v2403 = vpack.c.b16 %v2075, %v2071
    %v2404 = vpack.c.b16 %v2076, %v2072
    %v2405 = vpack.c.b16 %v2077, %v2073
    %v2406 = vpack.c.b16 %v2078, %v2074
    %v2407 = vpack.c.b16 %v2083, %v2079
    %v2408 = vpack.c.b16 %v2084, %v2080
    %v2409 = vpack.c.b16 %v2085, %v2081
    %v2410 = vpack.c.b16 %v2086, %v2082
    %v2411 = vpack.c.b16 %v2091, %v2087
    %v2412 = vpack.c.b16 %v2092, %v2088
    %v2413 = vpack.c.b16 %v2093, %v2089
    %v2414 = vpack.c.b16 %v2094, %v2090
    %v2415 = vpack.c.b16 %v2099, %v2095
    %v2416 = vpack.c.b16 %v2100, %v2096
    %v2417 = vpack.c.b16 %v2101, %v2097
    %v2418 = vpack.c.b16 %v2102, %v2098
    %v2419 = vpack.c.b16 %v2107, %v2103
    %v2420 = vpack.c.b16 %v2108, %v2104
    %v2421 = vpack.c.b16 %v2109, %v2105
    %v2422 = vpack.c.b16 %v2110, %v2106
    %v2423 = vpack.c.b16 %v2115, %v2111
    %v2424 = vpack.c.b16 %v2116, %v2112
    %v2425 = vpack.c.b16 %v2117, %v2113
    %v2426 = vpack.c.b16 %v2118, %v2114
    %v2427 = vpack.c.b16 %v2123, %v2119
    %v2428 = vpack.c.b16 %v2124, %v2120
    %v2429 = vpack.c.b16 %v2125, %v2121
    %v2430 = vpack.c.b16 %v2126, %v2122
    %v2431 = vpack.c.b16 %v2131, %v2127
    %v2432 = vpack.c.b16 %v2132, %v2128
    %v2433 = vpack.c.b16 %v2133, %v2129
    %v2434 = vpack.c.b16 %v2134, %v2130
    %v2435 = vpack.c.b16 %v2139, %v2135
    %v2436 = vpack.c.b16 %v2140, %v2136
    %v2437 = vpack.c.b16 %v2141, %v2137
    %v2438 = vpack.c.b16 %v2142, %v2138
    %v2439 = vpack.c.b16 %v2147, %v2143
    %v2440 = vpack.c.b16 %v2148, %v2144
    %v2441 = vpack.c.b16 %v2149, %v2145
    %v2442 = vpack.c.b16 %v2150, %v2146
    %v2443 = vpack.c.b16 %v2155, %v2151
    %v2444 = vpack.c.b16 %v2156, %v2152
    %v2445 = vpack.c.b16 %v2157, %v2153
    %v2446 = vpack.c.b16 %v2158, %v2154
    %v2447 = vpack.c.b16 %v2163, %v2159
    %v2448 = vpack.c.b16 %v2164, %v2160
    %v2449 = vpack.c.b16 %v2165, %v2161
    %v2450 = vpack.c.b16 %v2166, %v2162
    %v2451 = vpack.c.b16 %v2171, %v2167
    %v2452 = vpack.c.b16 %v2172, %v2168
    %v2453 = vpack.c.b16 %v2173, %v2169
    %v2454 = vpack.c.b16 %v2174, %v2170
    %v2455 = vpack.c.b16 %v2179, %v2175
    %v2456 = vpack.c.b16 %v2180, %v2176
    %v2457 = vpack.c.b16 %v2181, %v2177
    %v2458 = vpack.c.b16 %v2182, %v2178
    %v2459 = vpack.c.b16 %v2187, %v2183
    %v2460 = vpack.c.b16 %v2188, %v2184
    %v2461 = vpack.c.b16 %v2189, %v2185
    %v2462 = vpack.c.b16 %v2190, %v2186
    %v2463 = vpack.c.b16 %v2195, %v2191
    %v2464 = vpack.c.b16 %v2196, %v2192
    %v2465 = vpack.c.b16 %v2197, %v2193
    %v2466 = vpack.c.b16 %v2198, %v2194
    %v2467 = vpack.c.b16 %v2203, %v2199
    %v2468 = vpack.c.b16 %v2204, %v2200
    %v2469 = vpack.c.b16 %v2205, %v2201
    %v2470 = vpack.c.b16 %v2206, %v2202
    %v2471 = vpack.c.b16 %v2211, %v2207
    %v2472 = vpack.c.b16 %v2212, %v2208
    %v2473 = vpack.c.b16 %v2213, %v2209
    %v2474 = vpack.c.b16 %v2214, %v2210
    %v2475 = vpack.c.b16 %v2219, %v2215
    %v2476 = vpack.c.b16 %v2220, %v2216
    %v2477 = vpack.c.b16 %v2221, %v2217
    %v2478 = vpack.c.b16 %v2222, %v2218
    %2735 = vmatprep.subr.bf16.mxu0 %v2224
    %2736 = vmatpush1.bf16.msra.mxu0 %v2223
    %2737 = vmatprep.subr.bf16.mxu0 %v2228
    %2738 = vmatpush1.bf16.msra.mxu0 %v2227
    %2739 = vmatprep.subr.bf16.mxu0 %v2232
    %2740 = vmatpush1.bf16.msra.mxu0 %v2231
    %2741 = vmatprep.subr.bf16.mxu0 %v2236
    %2742 = vmatpush1.bf16.msra.mxu0 %v2235
    %2743 = vmatprep.subr.bf16.mxu0 %v2240
    %2744 = vmatpush1.bf16.msra.mxu0 %v2239
    %2745 = vmatprep.subr.bf16.mxu0 %v2244
    %2746 = vmatpush1.bf16.msra.mxu0 %v2243
    %2747 = vmatprep.subr.bf16.mxu0 %v2248
    %2748 = vmatpush1.bf16.msra.mxu0 %v2247
    %2749 = vmatprep.subr.bf16.mxu0 %v2252
    %2750 = vmatpush1.bf16.msra.mxu0 %v2251
    %2751 = vmatprep.subr.bf16.mxu0 %v2256
    %2752 = vmatpush1.bf16.msra.mxu0 %v2255
    %2753 = vmatprep.subr.bf16.mxu0 %v2260
    %2754 = vmatpush1.bf16.msra.mxu0 %v2259
    %2755 = vmatprep.subr.bf16.mxu0 %v2264
    %2756 = vmatpush1.bf16.msra.mxu0 %v2263
    %2757 = vmatprep.subr.bf16.mxu0 %v2268
    %2758 = vmatpush1.bf16.msra.mxu0 %v2267
    %2759 = vmatprep.subr.bf16.mxu0 %v2272
    %2760 = vmatpush1.bf16.msra.mxu0 %v2271
    %2761 = vmatprep.subr.bf16.mxu0 %v2276
    %2762 = vmatpush1.bf16.msra.mxu0 %v2275
    %2763 = vmatprep.subr.bf16.mxu0 %v2280
    %2764 = vmatpush1.bf16.msra.mxu0 %v2279
    %2765 = vmatprep.subr.bf16.mxu0 %v2284
    %2766 = vmatpush1.bf16.msra.mxu0 %v2283
    %2767 = vmatprep.mubr.bf16.mxu0 %v347
    %2768 = vmatmul.mubr.bf16.gmra.mrb[0].mxu0 %v346
    %v2769 = vpop.f32.mrb[0].mxu0
    %v2770 = vadd.f32 %v1438, %v2769
    %v2771 = vpop.f32.mrb[0].mxu0
    %v2772 = vadd.f32 %v1442, %v2771
    %v2773 = vpop.f32.mrb[0].mxu0
    %v2774 = vpop.f32.mrb[0].mxu0
    %2775 = vdwg.mxu0
    %2776 = vmatprep.subr.bf16.mxu0 %v2288
    %2777 = vmatpush1.bf16.msra.mxu0 %v2287
    %2778 = vmatprep.subr.bf16.mxu0 %v2292
    %2779 = vmatpush1.bf16.msra.mxu0 %v2291
    %2780 = vmatprep.subr.bf16.mxu0 %v2296
    %2781 = vmatpush1.bf16.msra.mxu0 %v2295
    %2782 = vmatprep.subr.bf16.mxu0 %v2300
    %2783 = vmatpush1.bf16.msra.mxu0 %v2299
    %2784 = vmatprep.subr.bf16.mxu0 %v2304
    %2785 = vmatpush1.bf16.msra.mxu0 %v2303
    %2786 = vmatprep.subr.bf16.mxu0 %v2308
    %2787 = vmatpush1.bf16.msra.mxu0 %v2307
    %2788 = vmatprep.subr.bf16.mxu0 %v2312
    %2789 = vmatpush1.bf16.msra.mxu0 %v2311
    %2790 = vmatprep.subr.bf16.mxu0 %v2316
    %2791 = vmatpush1.bf16.msra.mxu0 %v2315
    %2792 = vmatprep.subr.bf16.mxu0 %v2320
    %2793 = vmatpush1.bf16.msra.mxu0 %v2319
    %2794 = vmatprep.subr.bf16.mxu0 %v2324
    %2795 = vmatpush1.bf16.msra.mxu0 %v2323
    %2796 = vmatprep.subr.bf16.mxu0 %v2328
    %2797 = vmatpush1.bf16.msra.mxu0 %v2327
    %2798 = vmatprep.subr.bf16.mxu0 %v2332
    %2799 = vmatpush1.bf16.msra.mxu0 %v2331
    %2800 = vmatprep.subr.bf16.mxu0 %v2336
    %2801 = vmatpush1.bf16.msra.mxu0 %v2335
    %2802 = vmatprep.subr.bf16.mxu0 %v2340
    %2803 = vmatpush1.bf16.msra.mxu0 %v2339
    %2804 = vmatprep.subr.bf16.mxu0 %v2344
    %2805 = vmatpush1.bf16.msra.mxu0 %v2343
    %2806 = vmatprep.subr.bf16.mxu0 %v2348
    %2807 = vmatpush1.bf16.msra.mxu0 %v2347
    %2808 = vmatprep.mubr.bf16.mxu0 %v349
    %2809 = vmatmul.mubr.bf16.gmra.mrb[0].mxu0 %v348
    %v2810 = vpop.f32.mrb[0].mxu0
    %v2811 = vadd.f32 %v2770, %v2810
    %v2812 = vpop.f32.mrb[0].mxu0
    %v2813 = vadd.f32 %v2772, %v2812
    %v2814 = vpop.f32.mrb[0].mxu0
    %v2815 = vpop.f32.mrb[0].mxu0
    %2816 = vdwg.mxu0
    %2817 = vmatprep.subr.bf16.mxu0 %v2352
    %2818 = vmatpush1.bf16.msra.mxu0 %v2351
    %2819 = vmatprep.subr.bf16.mxu0 %v2356
    %2820 = vmatpush1.bf16.msra.mxu0 %v2355
    %2821 = vmatprep.subr.bf16.mxu0 %v2360
    %2822 = vmatpush1.bf16.msra.mxu0 %v2359
    %2823 = vmatprep.subr.bf16.mxu0 %v2364
    %2824 = vmatpush1.bf16.msra.mxu0 %v2363
    %2825 = vmatprep.subr.bf16.mxu0 %v2368
    %2826 = vmatpush1.bf16.msra.mxu0 %v2367
    %2827 = vmatprep.subr.bf16.mxu0 %v2372
    %2828 = vmatpush1.bf16.msra.mxu0 %v2371
    %2829 = vmatprep.subr.bf16.mxu0 %v2376
    %2830 = vmatpush1.bf16.msra.mxu0 %v2375
    %2831 = vmatprep.subr.bf16.mxu0 %v2380
    %2832 = vmatpush1.bf16.msra.mxu0 %v2379
    %2833 = vmatprep.subr.bf16.mxu0 %v2384
    %2834 = vmatpush1.bf16.msra.mxu0 %v2383
    %2835 = vmatprep.subr.bf16.mxu0 %v2388
    %2836 = vmatpush1.bf16.msra.mxu0 %v2387
    %2837 = vmatprep.subr.bf16.mxu0 %v2392
    %2838 = vmatpush1.bf16.msra.mxu0 %v2391
    %2839 = vmatprep.subr.bf16.mxu0 %v2396
    %2840 = vmatpush1.bf16.msra.mxu0 %v2395
    %2841 = vmatprep.subr.bf16.mxu0 %v2400
    %2842 = vmatpush1.bf16.msra.mxu0 %v2399
    %2843 = vmatprep.subr.bf16.mxu0 %v2404
    %2844 = vmatpush1.bf16.msra.mxu0 %v2403
    %2845 = vmatprep.subr.bf16.mxu0 %v2408
    %2846 = vmatpush1.bf16.msra.mxu0 %v2407
    %2847 = vmatprep.subr.bf16.mxu0 %v2412
    %2848 = vmatpush1.bf16.msra.mxu0 %v2411
    %2849 = vmatprep.mubr.bf16.mxu0 %v351
    %2850 = vmatmul.mubr.bf16.gmra.mrb[0].mxu0 %v350
    %v2851 = vpop.f32.mrb[0].mxu0
    %v2852 = vadd.f32 %v2811, %v2851
    %v2853 = vpop.f32.mrb[0].mxu0
    %v2854 = vadd.f32 %v2813, %v2853
    %v2855 = vpop.f32.mrb[0].mxu0
    %v2856 = vpop.f32.mrb[0].mxu0
    %2857 = vdwg.mxu0
    %2858 = vmatprep.subr.bf16.mxu0 %v2416
    %2859 = vmatpush1.bf16.msra.mxu0 %v2415
    %2860 = vmatprep.subr.bf16.mxu0 %v2420
    %2861 = vmatpush1.bf16.msra.mxu0 %v2419
    %2862 = vmatprep.subr.bf16.mxu0 %v2424
    %2863 = vmatpush1.bf16.msra.mxu0 %v2423
    %2864 = vmatprep.subr.bf16.mxu0 %v2428
    %2865 = vmatpush1.bf16.msra.mxu0 %v2427
    %2866 = vmatprep.subr.bf16.mxu0 %v2432
    %2867 = vmatpush1.bf16.msra.mxu0 %v2431
    %2868 = vmatprep.subr.bf16.mxu0 %v2436
    %2869 = vmatpush1.bf16.msra.mxu0 %v2435
    %2870 = vmatprep.subr.bf16.mxu0 %v2440
    %2871 = vmatpush1.bf16.msra.mxu0 %v2439
    %2872 = vmatprep.subr.bf16.mxu0 %v2444
    %2873 = vmatpush1.bf16.msra.mxu0 %v2443
    %2874 = vmatprep.subr.bf16.mxu0 %v2448
    %2875 = vmatpush1.bf16.msra.mxu0 %v2447
    %2876 = vmatprep.subr.bf16.mxu0 %v2452
    %2877 = vmatpush1.bf16.msra.mxu0 %v2451
    %2878 = vmatprep.subr.bf16.mxu0 %v2456
    %2879 = vmatpush1.bf16.msra.mxu0 %v2455
    %2880 = vmatprep.subr.bf16.mxu0 %v2460
    %2881 = vmatpush1.bf16.msra.mxu0 %v2459
    %2882 = vmatprep.subr.bf16.mxu0 %v2464
    %2883 = vmatpush1.bf16.msra.mxu0 %v2463
    %2884 = vmatprep.subr.bf16.mxu0 %v2468
    %2885 = vmatpush1.bf16.msra.mxu0 %v2467
    %2886 = vmatprep.subr.bf16.mxu0 %v2472
    %2887 = vmatpush1.bf16.msra.mxu0 %v2471
    %2888 = vmatprep.subr.bf16.mxu0 %v2476
    %2889 = vmatpush1.bf16.msra.mxu0 %v2475
    %2890 = vmatprep.mubr.bf16.mxu0 %v353
    %2891 = vmatmul.mubr.bf16.gmra.mrb[0].mxu0 %v352
    %v2892 = vpop.f32.mrb[0].mxu0
    %v2893 = vadd.f32 %v2852, %v2892
    %v2894 = vpop.f32.mrb[0].mxu0
    %v2895 = vadd.f32 %v2854, %v2894
    %v2896 = vpop.f32.mrb[0].mxu0
    %v2897 = vpop.f32.mrb[0].mxu0
    %2898 = vdwg.mxu0
    %2899 = vmatprep.subr.bf16.mxu0 %v2226
    %2900 = vmatpush1.bf16.msra.mxu0 %v2225
    %2901 = vmatprep.subr.bf16.mxu0 %v2230
    %2902 = vmatpush1.bf16.msra.mxu0 %v2229
    %2903 = vmatprep.subr.bf16.mxu0 %v2234
    %2904 = vmatpush1.bf16.msra.mxu0 %v2233
    %2905 = vmatprep.subr.bf16.mxu0 %v2238
    %2906 = vmatpush1.bf16.msra.mxu0 %v2237
    %2907 = vmatprep.subr.bf16.mxu0 %v2242
    %2908 = vmatpush1.bf16.msra.mxu0 %v2241
    %2909 = vmatprep.subr.bf16.mxu0 %v2246
    %2910 = vmatpush1.bf16.msra.mxu0 %v2245
    %2911 = vmatprep.subr.bf16.mxu0 %v2250
    %2912 = vmatpush1.bf16.msra.mxu0 %v2249
    %2913 = vmatprep.subr.bf16.mxu0 %v2254
    %2914 = vmatpush1.bf16.msra.mxu0 %v2253
    %2915 = vmatprep.subr.bf16.mxu0 %v2258
    %2916 = vmatpush1.bf16.msra.mxu0 %v2257
    %2917 = vmatprep.subr.bf16.mxu0 %v2262
    %2918 = vmatpush1.bf16.msra.mxu0 %v2261
    %2919 = vmatprep.subr.bf16.mxu0 %v2266
    %2920 = vmatpush1.bf16.msra.mxu0 %v2265
    %2921 = vmatprep.subr.bf16.mxu0 %v2270
    %2922 = vmatpush1.bf16.msra.mxu0 %v2269
    %2923 = vmatprep.subr.bf16.mxu0 %v2274
    %2924 = vmatpush1.bf16.msra.mxu0 %v2273
    %2925 = vmatprep.subr.bf16.mxu0 %v2278
    %2926 = vmatpush1.bf16.msra.mxu0 %v2277
    %2927 = vmatprep.subr.bf16.mxu0 %v2282
    %2928 = vmatpush1.bf16.msra.mxu0 %v2281
    %2929 = vmatprep.subr.bf16.mxu0 %v2286
    %2930 = vmatpush1.bf16.msra.mxu0 %v2285
    %2931 = vmatprep.mubr.bf16.mxu0 %v347
    %2932 = vmatmul.mubr.bf16.gmra.mrb[0].mxu0 %v346
    %v2933 = vpop.f32.mrb[0].mxu0
    %v2934 = vadd.f32 %v1446, %v2933
    %v2935 = vpop.f32.mrb[0].mxu0
    %v2936 = vadd.f32 %v1450, %v2935
    %v2937 = vpop.f32.mrb[0].mxu0
    %v2938 = vpop.f32.mrb[0].mxu0
    %2939 = vdwg.mxu0
    %2940 = vmatprep.subr.bf16.mxu0 %v2290
    %2941 = vmatpush1.bf16.msra.mxu0 %v2289
    %2942 = vmatprep.subr.bf16.mxu0 %v2294
    %2943 = vmatpush1.bf16.msra.mxu0 %v2293
    %2944 = vmatprep.subr.bf16.mxu0 %v2298
    %2945 = vmatpush1.bf16.msra.mxu0 %v2297
    %2946 = vmatprep.subr.bf16.mxu0 %v2302
    %2947 = vmatpush1.bf16.msra.mxu0 %v2301
    %2948 = vmatprep.subr.bf16.mxu0 %v2306
    %2949 = vmatpush1.bf16.msra.mxu0 %v2305
    %2950 = vmatprep.subr.bf16.mxu0 %v2310
    %2951 = vmatpush1.bf16.msra.mxu0 %v2309
    %2952 = vmatprep.subr.bf16.mxu0 %v2314
    %2953 = vmatpush1.bf16.msra.mxu0 %v2313
    %2954 = vmatprep.subr.bf16.mxu0 %v2318
    %2955 = vmatpush1.bf16.msra.mxu0 %v2317
    %2956 = vmatprep.subr.bf16.mxu0 %v2322
    %2957 = vmatpush1.bf16.msra.mxu0 %v2321
    %2958 = vmatprep.subr.bf16.mxu0 %v2326
    %2959 = vmatpush1.bf16.msra.mxu0 %v2325
    %2960 = vmatprep.subr.bf16.mxu0 %v2330
    %2961 = vmatpush1.bf16.msra.mxu0 %v2329
    %2962 = vmatprep.subr.bf16.mxu0 %v2334
    %2963 = vmatpush1.bf16.msra.mxu0 %v2333
    %2964 = vmatprep.subr.bf16.mxu0 %v2338
    %2965 = vmatpush1.bf16.msra.mxu0 %v2337
    %2966 = vmatprep.subr.bf16.mxu0 %v2342
    %2967 = vmatpush1.bf16.msra.mxu0 %v2341
    %2968 = vmatprep.subr.bf16.mxu0 %v2346
    %2969 = vmatpush1.bf16.msra.mxu0 %v2345
    %2970 = vmatprep.subr.bf16.mxu0 %v2350
    %2971 = vmatpush1.bf16.msra.mxu0 %v2349
    %2972 = vmatprep.mubr.bf16.mxu0 %v349
    %2973 = vmatmul.mubr.bf16.gmra.mrb[0].mxu0 %v348
    %v2974 = vpop.f32.mrb[0].mxu0
    %v2975 = vadd.f32 %v2934, %v2974
    %v2976 = vpop.f32.mrb[0].mxu0
    %v2977 = vadd.f32 %v2936, %v2976
    %v2978 = vpop.f32.mrb[0].mxu0
    %v2979 = vpop.f32.mrb[0].mxu0
    %2980 = vdwg.mxu0
    %2981 = vmatprep.subr.bf16.mxu0 %v2354
    %2982 = vmatpush1.bf16.msra.mxu0 %v2353
    %2983 = vmatprep.subr.bf16.mxu0 %v2358
    %2984 = vmatpush1.bf16.msra.mxu0 %v2357
    %2985 = vmatprep.subr.bf16.mxu0 %v2362
    %2986 = vmatpush1.bf16.msra.mxu0 %v2361
    %2987 = vmatprep.subr.bf16.mxu0 %v2366
    %2988 = vmatpush1.bf16.msra.mxu0 %v2365
    %2989 = vmatprep.subr.bf16.mxu0 %v2370
    %2990 = vmatpush1.bf16.msra.mxu0 %v2369
    %2991 = vmatprep.subr.bf16.mxu0 %v2374
    %2992 = vmatpush1.bf16.msra.mxu0 %v2373
    %2993 = vmatprep.subr.bf16.mxu0 %v2378
    %2994 = vmatpush1.bf16.msra.mxu0 %v2377
    %2995 = vmatprep.subr.bf16.mxu0 %v2382
    %2996 = vmatpush1.bf16.msra.mxu0 %v2381
    %2997 = vmatprep.subr.bf16.mxu0 %v2386
    %2998 = vmatpush1.bf16.msra.mxu0 %v2385
    %2999 = vmatprep.subr.bf16.mxu0 %v2390
    %3000 = vmatpush1.bf16.msra.mxu0 %v2389
    %3001 = vmatprep.subr.bf16.mxu0 %v2394
    %3002 = vmatpush1.bf16.msra.mxu0 %v2393
    %3003 = vmatprep.subr.bf16.mxu0 %v2398
    %3004 = vmatpush1.bf16.msra.mxu0 %v2397
    %3005 = vmatprep.subr.bf16.mxu0 %v2402
    %3006 = vmatpush1.bf16.msra.mxu0 %v2401
    %3007 = vmatprep.subr.bf16.mxu0 %v2406
    %3008 = vmatpush1.bf16.msra.mxu0 %v2405
    %3009 = vmatprep.subr.bf16.mxu0 %v2410
    %3010 = vmatpush1.bf16.msra.mxu0 %v2409
    %3011 = vmatprep.subr.bf16.mxu0 %v2414
    %3012 = vmatpush1.bf16.msra.mxu0 %v2413
    %3013 = vmatprep.mubr.bf16.mxu0 %v351
    %3014 = vmatmul.mubr.bf16.gmra.mrb[0].mxu0 %v350
    %v3015 = vpop.f32.mrb[0].mxu0
    %v3016 = vadd.f32 %v2975, %v3015
    %v3017 = vpop.f32.mrb[0].mxu0
    %v3018 = vadd.f32 %v2977, %v3017
    %v3019 = vpop.f32.mrb[0].mxu0
    %v3020 = vpop.f32.mrb[0].mxu0
    %3021 = vdwg.mxu0
    %3022 = vmatprep.subr.bf16.mxu0 %v2418
    %3023 = vmatpush1.bf16.msra.mxu0 %v2417
    %3024 = vmatprep.subr.bf16.mxu0 %v2422
    %3025 = vmatpush1.bf16.msra.mxu0 %v2421
    %3026 = vmatprep.subr.bf16.mxu0 %v2426
    %3027 = vmatpush1.bf16.msra.mxu0 %v2425
    %3028 = vmatprep.subr.bf16.mxu0 %v2430
    %3029 = vmatpush1.bf16.msra.mxu0 %v2429
    %3030 = vmatprep.subr.bf16.mxu0 %v2434
    %3031 = vmatpush1.bf16.msra.mxu0 %v2433
    %3032 = vmatprep.subr.bf16.mxu0 %v2438
    %3033 = vmatpush1.bf16.msra.mxu0 %v2437
    %3034 = vmatprep.subr.bf16.mxu0 %v2442
    %3035 = vmatpush1.bf16.msra.mxu0 %v2441
    %3036 = vmatprep.subr.bf16.mxu0 %v2446
    %3037 = vmatpush1.bf16.msra.mxu0 %v2445
    %3038 = vmatprep.subr.bf16.mxu0 %v2450
    %3039 = vmatpush1.bf16.msra.mxu0 %v2449
    %3040 = vmatprep.subr.bf16.mxu0 %v2454
    %3041 = vmatpush1.bf16.msra.mxu0 %v2453
    %3042 = vmatprep.subr.bf16.mxu0 %v2458
    %3043 = vmatpush1.bf16.msra.mxu0 %v2457
    %3044 = vmatprep.subr.bf16.mxu0 %v2462
    %3045 = vmatpush1.bf16.msra.mxu0 %v2461
    %3046 = vmatprep.subr.bf16.mxu0 %v2466
    %3047 = vmatpush1.bf16.msra.mxu0 %v2465
    %3048 = vmatprep.subr.bf16.mxu0 %v2470
    %3049 = vmatpush1.bf16.msra.mxu0 %v2469
    %3050 = vmatprep.subr.bf16.mxu0 %v2474
    %3051 = vmatpush1.bf16.msra.mxu0 %v2473
    %3052 = vmatprep.subr.bf16.mxu0 %v2478
    %3053 = vmatpush1.bf16.msra.mxu0 %v2477
    %3054 = vmatprep.mubr.bf16.mxu0 %v353
    %3055 = vmatmul.mubr.bf16.gmra.mrb[0].mxu0 %v352
    %v3056 = vpop.f32.mrb[0].mxu0
    %v3057 = vadd.f32 %v3016, %v3056
    %v3058 = vpop.f32.mrb[0].mxu0
    %v3059 = vadd.f32 %v3018, %v3058
    %v3060 = vpop.f32.mrb[0].mxu0
    %v3061 = vpop.f32.mrb[0].mxu0
    %3062 = vdwg.mxu0
    %vm3063 = vcmp.gt.f32.partialorder %v2893, 0.0
    %vm3064 = vcmp.gt.f32.partialorder %v2895, 0.0
    %vm3065 = vcmp.gt.f32.partialorder %v3057, 0.0
    %vm3066 = vcmp.gt.f32.partialorder %v3059, 0.0
    %v3067 = vmin.f32 %v2893, 0.0
    %v3068 = vmin.f32 %v2895, 0.0
    %v3069 = vmin.f32 %v3057, 0.0
    %v3070 = vmin.f32 %v3059, 0.0
    %v3071 = vmul.f32 %v3067, 1.442695
    %v3072 = vpow.pop %v3071
    %v3073 = vmul.f32 %v3068, 1.442695
    %v3074 = vpow.pop %v3073
    %v3075 = vmul.f32 %v3069, 1.442695
    %v3076 = vpow.pop %v3075
    %v3077 = vmul.f32 %v3070, 1.442695
    %v3078 = vpow.pop %v3077
    %v3079 = vsub.f32 %v3072, 1.0
    %v3080 = vsub.f32 %v3074, 1.0
    %v3081 = vsub.f32 %v3076, 1.0
    %v3082 = vsub.f32 %v3078, 1.0
    %v3083 = vmul.f32 %v3079, 1.6732632
    %v3084 = vmul.f32 %v3080, 1.6732632
    %v3085 = vmul.f32 %v3081, 1.6732632
    %v3086 = vmul.f32 %v3082, 1.6732632
    %v3087 = vsel %vm3063, %v2893, %v3083
    %v3088 = vsel %vm3064, %v2895, %v3084
    %v3089 = vsel %vm3065, %v3057, %v3085
    %v3090 = vsel %vm3066, %v3059, %v3086
    %v3091 = vmul.f32 %v3087, 1.050701
    %v3092 = vmul.f32 %v3088, 1.050701
    %v3093 = vmul.f32 %v3089, 1.050701
    %v3094 = vmul.f32 %v3090, 1.050701
    %v3095 = vpack.c.bf16 %v3091, %v3091
    %v3096 = vpack.c.bf16 %v3092, %v3092
    %v3097 = vpack.c.bf16 %v3093, %v3093
    %v3098 = vpack.c.bf16 %v3094, %v3094
    %v3099 = vld [vmem:[%s10] sm:$0xf]
    %v3100 = vld [vmem:[%s10 + $0x4] sm:$0xf]
    %v3101 = vld [vmem:[%s10 + $0x8] sm:$0xf]
    %v3102 = vld [vmem:[%s10 + $0xc] sm:$0xf]
    %v3103 = vld [vmem:[%s10 + $0x10] sm:$0xf]
    %v3104 = vld [vmem:[%s10 + $0x14] sm:$0xf]
    %v3105 = vld [vmem:[%s10 + $0x18] sm:$0xf]
    %v3106 = vld [vmem:[%s10 + $0x1c] sm:$0xf]
    %v3107 = vld [vmem:[%s10 + $0x20] sm:$0xf]
    %v3108 = vld [vmem:[%s10 + $0x24] sm:$0xf]
    %v3109 = vld [vmem:[%s10 + $0x28] sm:$0xf]
    %v3110 = vld [vmem:[%s10 + $0x2c] sm:$0xf]
    %v3111 = vld [vmem:[%s10 + $0x30] sm:$0xf]
    %v3112 = vld [vmem:[%s10 + $0x34] sm:$0xf]
    %v3113 = vld [vmem:[%s10 + $0x38] sm:$0xf]
    %v3114 = vld [vmem:[%s10 + $0x3c] sm:$0xf]
    %v3115 = vld [vmem:[%s10 + $0x40] sm:$0xf]
    %v3116 = vld [vmem:[%s10 + $0x44] sm:$0xf]
    %v3117 = vld [vmem:[%s10 + $0x48] sm:$0xf]
    %v3118 = vld [vmem:[%s10 + $0x4c] sm:$0xf]
    %v3119 = vld [vmem:[%s10 + $0x50] sm:$0xf]
    %v3120 = vld [vmem:[%s10 + $0x54] sm:$0xf]
    %v3121 = vld [vmem:[%s10 + $0x58] sm:$0xf]
    %v3122 = vld [vmem:[%s10 + $0x5c] sm:$0xf]
    %v3123 = vld [vmem:[%s10 + $0x60] sm:$0xf]
    %v3124 = vld [vmem:[%s10 + $0x64] sm:$0xf]
    %v3125 = vld [vmem:[%s10 + $0x68] sm:$0xf]
    %v3126 = vld [vmem:[%s10 + $0x6c] sm:$0xf]
    %v3127 = vld [vmem:[%s10 + $0x70] sm:$0xf]
    %v3128 = vld [vmem:[%s10 + $0x74] sm:$0xf]
    %v3129 = vld [vmem:[%s10 + $0x78] sm:$0xf]
    %v3130 = vld [vmem:[%s10 + $0x7c] sm:$0xf]
    %v3131 = vld [vmem:[%s10 + $0x80] sm:$0xf]
    %v3132 = vld [vmem:[%s10 + $0x84] sm:$0xf]
    %v3133 = vld [vmem:[%s10 + $0x88] sm:$0xf]
    %v3134 = vld [vmem:[%s10 + $0x8c] sm:$0xf]
    %v3135 = vld [vmem:[%s10 + $0x90] sm:$0xf]
    %v3136 = vld [vmem:[%s10 + $0x94] sm:$0xf]
    %v3137 = vld [vmem:[%s10 + $0x98] sm:$0xf]
    %v3138 = vld [vmem:[%s10 + $0x9c] sm:$0xf]
    %v3139 = vld [vmem:[%s10 + $0xa0] sm:$0xf]
    %v3140 = vld [vmem:[%s10 + $0xa4] sm:$0xf]
    %v3141 = vld [vmem:[%s10 + $0xa8] sm:$0xf]
    %v3142 = vld [vmem:[%s10 + $0xac] sm:$0xf]
    %v3143 = vld [vmem:[%s10 + $0xb0] sm:$0xf]
    %v3144 = vld [vmem:[%s10 + $0xb4] sm:$0xf]
    %v3145 = vld [vmem:[%s10 + $0xb8] sm:$0xf]
    %v3146 = vld [vmem:[%s10 + $0xbc] sm:$0xf]
    %v3147 = vld [vmem:[%s10 + $0xc0] sm:$0xf]
    %v3148 = vld [vmem:[%s10 + $0xc4] sm:$0xf]
    %v3149 = vld [vmem:[%s10 + $0xc8] sm:$0xf]
    %v3150 = vld [vmem:[%s10 + $0xcc] sm:$0xf]
    %v3151 = vld [vmem:[%s10 + $0xd0] sm:$0xf]
    %v3152 = vld [vmem:[%s10 + $0xd4] sm:$0xf]
    %v3153 = vld [vmem:[%s10 + $0xd8] sm:$0xf]
    %v3154 = vld [vmem:[%s10 + $0xdc] sm:$0xf]
    %v3155 = vld [vmem:[%s10 + $0xe0] sm:$0xf]
    %v3156 = vld [vmem:[%s10 + $0xe4] sm:$0xf]
    %v3157 = vld [vmem:[%s10 + $0xe8] sm:$0xf]
    %v3158 = vld [vmem:[%s10 + $0xec] sm:$0xf]
    %v3159 = vld [vmem:[%s10 + $0xf0] sm:$0xf]
    %v3160 = vld [vmem:[%s10 + $0xf4] sm:$0xf]
    %v3161 = vld [vmem:[%s10 + $0xf8] sm:$0xf]
    %v3162 = vld [vmem:[%s10 + $0xfc] sm:$0xf]
    %v3163 = vld [vmem:[%s11] sm:$0x1]
    %v3165 = vlaneseq
    %v3166 = vshrl.u32 %v3165, 7
    %v3167 = vsub.s32 0, %v3166
    %v3168 = vrot.slane %v3163, %v3167
    %v3234 = vunpack.c.l.b16 %v3099
    %v3235 = vunpack.c.l.b16 %v3100
    %v3236 = vunpack.c.l.b16 %v3101
    %v3237 = vunpack.c.l.b16 %v3102
    %v3238 = vunpack.c.l.b16 %v3103
    %v3239 = vunpack.c.l.b16 %v3104
    %v3240 = vunpack.c.l.b16 %v3105
    %v3241 = vunpack.c.l.b16 %v3106
    %v3242 = vunpack.c.l.b16 %v3107
    %v3243 = vunpack.c.l.b16 %v3108
    %v3244 = vunpack.c.l.b16 %v3109
    %v3245 = vunpack.c.l.b16 %v3110
    %v3246 = vunpack.c.l.b16 %v3111
    %v3247 = vunpack.c.l.b16 %v3112
    %v3248 = vunpack.c.l.b16 %v3113
    %v3249 = vunpack.c.l.b16 %v3114
    %v3250 = vunpack.c.l.b16 %v3115
    %v3251 = vunpack.c.l.b16 %v3116
    %v3252 = vunpack.c.l.b16 %v3117
    %v3253 = vunpack.c.l.b16 %v3118
    %v3254 = vunpack.c.l.b16 %v3119
    %v3255 = vunpack.c.l.b16 %v3120
    %v3256 = vunpack.c.l.b16 %v3121
    %v3257 = vunpack.c.l.b16 %v3122
    %v3258 = vunpack.c.l.b16 %v3123
    %v3259 = vunpack.c.l.b16 %v3124
    %v3260 = vunpack.c.l.b16 %v3125
    %v3261 = vunpack.c.l.b16 %v3126
    %v3262 = vunpack.c.l.b16 %v3127
    %v3263 = vunpack.c.l.b16 %v3128
    %v3264 = vunpack.c.l.b16 %v3129
    %v3265 = vunpack.c.l.b16 %v3130
    %v3266 = vunpack.c.l.b16 %v3131
    %v3267 = vunpack.c.l.b16 %v3132
    %v3268 = vunpack.c.l.b16 %v3133
    %v3269 = vunpack.c.l.b16 %v3134
    %v3270 = vunpack.c.l.b16 %v3135
    %v3271 = vunpack.c.l.b16 %v3136
    %v3272 = vunpack.c.l.b16 %v3137
    %v3273 = vunpack.c.l.b16 %v3138
    %v3274 = vunpack.c.l.b16 %v3139
    %v3275 = vunpack.c.l.b16 %v3140
    %v3276 = vunpack.c.l.b16 %v3141
    %v3277 = vunpack.c.l.b16 %v3142
    %v3278 = vunpack.c.l.b16 %v3143
    %v3279 = vunpack.c.l.b16 %v3144
    %v3280 = vunpack.c.l.b16 %v3145
    %v3281 = vunpack.c.l.b16 %v3146
    %v3282 = vunpack.c.l.b16 %v3147
    %v3283 = vunpack.c.l.b16 %v3148
    %v3284 = vunpack.c.l.b16 %v3149
    %v3285 = vunpack.c.l.b16 %v3150
    %v3286 = vunpack.c.l.b16 %v3151
    %v3287 = vunpack.c.l.b16 %v3152
    %v3288 = vunpack.c.l.b16 %v3153
    %v3289 = vunpack.c.l.b16 %v3154
    %v3290 = vunpack.c.l.b16 %v3155
    %v3291 = vunpack.c.l.b16 %v3156
    %v3292 = vunpack.c.l.b16 %v3157
    %v3293 = vunpack.c.l.b16 %v3158
    %v3294 = vunpack.c.l.b16 %v3159
    %v3295 = vunpack.c.l.b16 %v3160
    %v3296 = vunpack.c.l.b16 %v3161
    %v3297 = vunpack.c.l.b16 %v3162
    %v3298 = vpack.c.b16 %v3235, %v3234
    %v3299 = vpack.c.b16 %v3237, %v3236
    %v3300 = vpack.c.b16 %v3239, %v3238
    %v3301 = vpack.c.b16 %v3241, %v3240
    %v3302 = vpack.c.b16 %v3243, %v3242
    %v3303 = vpack.c.b16 %v3245, %v3244
    %v3304 = vpack.c.b16 %v3247, %v3246
    %v3305 = vpack.c.b16 %v3249, %v3248
    %v3306 = vpack.c.b16 %v3251, %v3250
    %v3307 = vpack.c.b16 %v3253, %v3252
    %v3308 = vpack.c.b16 %v3255, %v3254
    %v3309 = vpack.c.b16 %v3257, %v3256
    %v3310 = vpack.c.b16 %v3259, %v3258
    %v3311 = vpack.c.b16 %v3261, %v3260
    %v3312 = vpack.c.b16 %v3263, %v3262
    %v3313 = vpack.c.b16 %v3265, %v3264
    %v3314 = vpack.c.b16 %v3267, %v3266
    %v3315 = vpack.c.b16 %v3269, %v3268
    %v3316 = vpack.c.b16 %v3271, %v3270
    %v3317 = vpack.c.b16 %v3273, %v3272
    %v3318 = vpack.c.b16 %v3275, %v3274
    %v3319 = vpack.c.b16 %v3277, %v3276
    %v3320 = vpack.c.b16 %v3279, %v3278
    %v3321 = vpack.c.b16 %v3281, %v3280
    %v3322 = vpack.c.b16 %v3283, %v3282
    %v3323 = vpack.c.b16 %v3285, %v3284
    %v3324 = vpack.c.b16 %v3287, %v3286
    %v3325 = vpack.c.b16 %v3289, %v3288
    %v3326 = vpack.c.b16 %v3291, %v3290
    %v3327 = vpack.c.b16 %v3293, %v3292
    %v3328 = vpack.c.b16 %v3295, %v3294
    %v3329 = vpack.c.b16 %v3297, %v3296
    %3362 = vmatprep.subr.bf16.mxu0 0
    %3363 = vmatpush1.bf16.msra.mxu0 %v3298
    %3364 = vmatprep.subr.bf16.mxu0 0
    %3365 = vmatpush1.bf16.msra.mxu0 %v3299
    %3366 = vmatprep.subr.bf16.mxu0 0
    %3367 = vmatpush1.bf16.msra.mxu0 %v3300
    %3368 = vmatprep.subr.bf16.mxu0 0
    %3369 = vmatpush1.bf16.msra.mxu0 %v3301
    %3370 = vmatprep.subr.bf16.mxu0 0
    %3371 = vmatpush1.bf16.msra.mxu0 %v3302
    %3372 = vmatprep.subr.bf16.mxu0 0
    %3373 = vmatpush1.bf16.msra.mxu0 %v3303
    %3374 = vmatprep.subr.bf16.mxu0 0
    %3375 = vmatpush1.bf16.msra.mxu0 %v3304
    %3376 = vmatprep.subr.bf16.mxu0 0
    %3377 = vmatpush1.bf16.msra.mxu0 %v3305
    %3378 = vmatprep.subr.bf16.mxu0 0
    %3379 = vmatpush1.bf16.msra.mxu0 %v3306
    %3380 = vmatprep.subr.bf16.mxu0 0
    %3381 = vmatpush1.bf16.msra.mxu0 %v3307
    %3382 = vmatprep.subr.bf16.mxu0 0
    %3383 = vmatpush1.bf16.msra.mxu0 %v3308
    %3384 = vmatprep.subr.bf16.mxu0 0
    %3385 = vmatpush1.bf16.msra.mxu0 %v3309
    %3386 = vmatprep.subr.bf16.mxu0 0
    %3387 = vmatpush1.bf16.msra.mxu0 %v3310
    %3388 = vmatprep.subr.bf16.mxu0 0
    %3389 = vmatpush1.bf16.msra.mxu0 %v3311
    %3390 = vmatprep.subr.bf16.mxu0 0
    %3391 = vmatpush1.bf16.msra.mxu0 %v3312
    %3392 = vmatprep.subr.bf16.mxu0 0
    %3393 = vmatpush1.bf16.msra.mxu0 %v3313
    %3394 = vmatprep.mubr.bf16.mxu0 %v3096
    %3395 = vmatmul.mubr.bf16.gmra.mrb[0].mxu0 %v3095
    %v3396 = vpop.f32.mrb[0].mxu0
    %v3397 = vadd.f32 %v3168, %v3396
    %v3398 = vpop.f32.mrb[0].mxu0
    %v3399 = vpop.f32.mrb[0].mxu0
    %v3400 = vpop.f32.mrb[0].mxu0
    %3401 = vdwg.mxu0
    %3402 = vmatprep.subr.bf16.mxu0 0
    %3403 = vmatpush1.bf16.msra.mxu0 %v3314
    %3404 = vmatprep.subr.bf16.mxu0 0
    %3405 = vmatpush1.bf16.msra.mxu0 %v3315
    %3406 = vmatprep.subr.bf16.mxu0 0
    %3407 = vmatpush1.bf16.msra.mxu0 %v3316
    %3408 = vmatprep.subr.bf16.mxu0 0
    %3409 = vmatpush1.bf16.msra.mxu0 %v3317
    %3410 = vmatprep.subr.bf16.mxu0 0
    %3411 = vmatpush1.bf16.msra.mxu0 %v3318
    %3412 = vmatprep.subr.bf16.mxu0 0
    %3413 = vmatpush1.bf16.msra.mxu0 %v3319
    %3414 = vmatprep.subr.bf16.mxu0 0
    %3415 = vmatpush1.bf16.msra.mxu0 %v3320
    %3416 = vmatprep.subr.bf16.mxu0 0
    %3417 = vmatpush1.bf16.msra.mxu0 %v3321
    %3418 = vmatprep.subr.bf16.mxu0 0
    %3419 = vmatpush1.bf16.msra.mxu0 %v3322
    %3420 = vmatprep.subr.bf16.mxu0 0
    %3421 = vmatpush1.bf16.msra.mxu0 %v3323
    %3422 = vmatprep.subr.bf16.mxu0 0
    %3423 = vmatpush1.bf16.msra.mxu0 %v3324
    %3424 = vmatprep.subr.bf16.mxu0 0
    %3425 = vmatpush1.bf16.msra.mxu0 %v3325
    %3426 = vmatprep.subr.bf16.mxu0 0
    %3427 = vmatpush1.bf16.msra.mxu0 %v3326
    %3428 = vmatprep.subr.bf16.mxu0 0
    %3429 = vmatpush1.bf16.msra.mxu0 %v3327
    %3430 = vmatprep.subr.bf16.mxu0 0
    %3431 = vmatpush1.bf16.msra.mxu0 %v3328
    %3432 = vmatprep.subr.bf16.mxu0 0
    %3433 = vmatpush1.bf16.msra.mxu0 %v3329
    %3434 = vmatprep.mubr.bf16.mxu0 %v3098
    %3435 = vmatmul.mubr.bf16.gmra.mrb[0].mxu0 %v3097
    %v3436 = vpop.f32.mrb[0].mxu0
    %v3437 = vadd.f32 %v3397, %v3436
    %v3438 = vpop.f32.mrb[0].mxu0
    %v3439 = vpop.f32.mrb[0].mxu0
    %v3440 = vpop.f32.mrb[0].mxu0
    %3441 = vdwg.mxu0
    %v3442 = vpack.c.bf16 %v3437, %v3437
    %v3443 = vld [vmem:[%s12] sm:$0xff]
    %v3444 = vld [vmem:[%s12 + $0x8] sm:$0xff]
    %v3447 = vunpack.c.l.b16 %v3443
    %v3448 = vunpack.c.h.b16 %v3443
    %v3449 = vunpack.c.l.b16 %v3444
    %v3450 = vunpack.c.h.b16 %v3444
    %v3451 = vpack.c.b16 %v3447, %v3447
    %v3452 = vpack.c.b16 %v3448, %v3448
    %v3453 = vpack.c.b16 %v3449, %v3449
    %v3454 = vpack.c.b16 %v3450, %v3450
    %vm3455 = vcmask 64512
    %v3457 = vsel %vm3455, %v3442, 0
    %vm3459 = vcmask 1043456
    %v3461 = vsel %vm3459, %v3451, 0
    %v3464 = vsel %vm3459, %v3452, 0
    %v3467 = vsel %vm3459, %v3453, 0
    %v3470 = vsel %vm3459, %v3454, 0
    %3472 = vmatprep.subr.bf16.mxu0 %v3464
    %3473 = vmatpush1.bf16.msra.mxu0 %v3461
    %3474 = vmatprep.subr.bf16.mxu0 0
    %3475 = vmatpush1.bf16.msra.mxu0 0
    %3476 = vmatprep.subr.bf16.mxu0 0
    %3477 = vmatpush1.bf16.msra.mxu0 0
    %3478 = vmatprep.subr.bf16.mxu0 0
    %3479 = vmatpush1.bf16.msra.mxu0 0
    %3480 = vmatprep.subr.bf16.mxu0 0
    %3481 = vmatpush1.bf16.msra.mxu0 0
    %3482 = vmatprep.subr.bf16.mxu0 0
    %3483 = vmatpush1.bf16.msra.mxu0 0
    %3484 = vmatprep.subr.bf16.mxu0 0
    %3485 = vmatpush1.bf16.msra.mxu0 0
    %3486 = vmatprep.subr.bf16.mxu0 0
    %3487 = vmatpush1.bf16.msra.mxu0 0
    %3488 = vmatprep.subr.bf16.mxu0 0
    %3489 = vmatpush1.bf16.msra.mxu0 0
    %3490 = vmatprep.subr.bf16.mxu0 0
    %3491 = vmatpush1.bf16.msra.mxu0 0
    %3492 = vmatprep.subr.bf16.mxu0 0
    %3493 = vmatpush1.bf16.msra.mxu0 0
    %3494 = vmatprep.subr.bf16.mxu0 0
    %3495 = vmatpush1.bf16.msra.mxu0 0
    %3496 = vmatprep.subr.bf16.mxu0 0
    %3497 = vmatpush1.bf16.msra.mxu0 0
    %3498 = vmatprep.subr.bf16.mxu0 0
    %3499 = vmatpush1.bf16.msra.mxu0 0
    %3500 = vmatprep.subr.bf16.mxu0 0
    %3501 = vmatpush1.bf16.msra.mxu0 0
    %3502 = vmatprep.subr.bf16.mxu0 0
    %3503 = vmatpush1.bf16.msra.mxu0 0
    %3504 = vmatprep.mubr.bf16.mxu0 0
    %3505 = vmatmul.mubr.bf16.gmra.mrb[0].mxu0 %v3457
    %v3506 = vpop.f32.mrb[0].mxu0
    %v3507 = vadd.f32 0.0, %v3506
    %v3508 = vpop.f32.mrb[0].mxu0
    %v3509 = vadd.f32 0.0, %v3508
    %v3510 = vpop.f32.mrb[0].mxu0
    %v3511 = vpop.f32.mrb[0].mxu0
    %3512 = vdwg.mxu0
    %3513 = vmatprep.subr.bf16.mxu0 %v3470
    %3514 = vmatpush1.bf16.msra.mxu0 %v3467
    %3515 = vmatprep.subr.bf16.mxu0 0
    %3516 = vmatpush1.bf16.msra.mxu0 0
    %3517 = vmatprep.subr.bf16.mxu0 0
    %3518 = vmatpush1.bf16.msra.mxu0 0
    %3519 = vmatprep.subr.bf16.mxu0 0
    %3520 = vmatpush1.bf16.msra.mxu0 0
    %3521 = vmatprep.subr.bf16.mxu0 0
    %3522 = vmatpush1.bf16.msra.mxu0 0
    %3523 = vmatprep.subr.bf16.mxu0 0
    %3524 = vmatpush1.bf16.msra.mxu0 0
    %3525 = vmatprep.subr.bf16.mxu0 0
    %3526 = vmatpush1.bf16.msra.mxu0 0
    %3527 = vmatprep.subr.bf16.mxu0 0
    %3528 = vmatpush1.bf16.msra.mxu0 0
    %3529 = vmatprep.subr.bf16.mxu0 0
    %3530 = vmatpush1.bf16.msra.mxu0 0
    %3531 = vmatprep.subr.bf16.mxu0 0
    %3532 = vmatpush1.bf16.msra.mxu0 0
    %3533 = vmatprep.subr.bf16.mxu0 0
    %3534 = vmatpush1.bf16.msra.mxu0 0
    %3535 = vmatprep.subr.bf16.mxu0 0
    %3536 = vmatpush1.bf16.msra.mxu0 0
    %3537 = vmatprep.subr.bf16.mxu0 0
    %3538 = vmatpush1.bf16.msra.mxu0 0
    %3539 = vmatprep.subr.bf16.mxu0 0
    %3540 = vmatpush1.bf16.msra.mxu0 0
    %3541 = vmatprep.subr.bf16.mxu0 0
    %3542 = vmatpush1.bf16.msra.mxu0 0
    %3543 = vmatprep.subr.bf16.mxu0 0
    %3544 = vmatpush1.bf16.msra.mxu0 0
    %3545 = vmatprep.mubr.bf16.mxu0 0
    %3546 = vmatmul.mubr.bf16.gmra.mrb[0].mxu0 %v3457
    %v3547 = vpop.f32.mrb[0].mxu0
    %v3548 = vadd.f32 0.0, %v3547
    %v3549 = vpop.f32.mrb[0].mxu0
    %v3550 = vadd.f32 0.0, %v3549
    %v3551 = vpop.f32.mrb[0].mxu0
    %v3552 = vpop.f32.mrb[0].mxu0
    %3553 = vdwg.mxu0
    %v3554 = vadd.f32 %v1173, %v3507
    %v3555 = vadd.f32 %v1174, %v3509
    %v3556 = vadd.f32 %v1175, %v3548
    %v3557 = vadd.f32 %v1176, %v3550
    %v3558 = vld [vmem:[%s13] sm:$0xff]
    %v3559 = vld [vmem:[%s13 + $0x8] sm:$0xff]
    %v3560 = vld [vmem:[%s13 + $0x10] sm:$0xff]
    %v3561 = vld [vmem:[%s13 + $0x18] sm:$0xff]
    %v3562 = vld [vmem:[%s13 + $0x20] sm:$0xff]
    %v3563 = vld [vmem:[%s13 + $0x28] sm:$0xff]
    %v3564 = vld [vmem:[%s13 + $0x30] sm:$0xff]
    %v3565 = vld [vmem:[%s13 + $0x38] sm:$0xff]
    %v3566 = vld [vmem:[%s13 + $0x40] sm:$0xff]
    %v3567 = vld [vmem:[%s13 + $0x48] sm:$0xff]
    %v3568 = vld [vmem:[%s13 + $0x50] sm:$0xff]
    %v3569 = vld [vmem:[%s13 + $0x58] sm:$0xff]
    %v3570 = vld [vmem:[%s13 + $0x60] sm:$0xff]
    %v3571 = vld [vmem:[%s13 + $0x68] sm:$0xff]
    %v3572 = vld [vmem:[%s13 + $0x70] sm:$0xff]
    %v3573 = vld [vmem:[%s13 + $0x78] sm:$0xff]
    %v3574 = vld [vmem:[%s13 + $0x80] sm:$0xff]
    %v3575 = vld [vmem:[%s13 + $0x88] sm:$0xff]
    %v3576 = vld [vmem:[%s13 + $0x90] sm:$0xff]
    %v3577 = vld [vmem:[%s13 + $0x98] sm:$0xff]
    %v3578 = vld [vmem:[%s13 + $0xa0] sm:$0xff]
    %v3579 = vld [vmem:[%s13 + $0xa8] sm:$0xff]
    %v3580 = vld [vmem:[%s13 + $0xb0] sm:$0xff]
    %v3581 = vld [vmem:[%s13 + $0xb8] sm:$0xff]
    %v3582 = vld [vmem:[%s13 + $0xc0] sm:$0xff]
    %v3583 = vld [vmem:[%s13 + $0xc8] sm:$0xff]
    %v3584 = vld [vmem:[%s13 + $0xd0] sm:$0xff]
    %v3585 = vld [vmem:[%s13 + $0xd8] sm:$0xff]
    %v3586 = vld [vmem:[%s13 + $0xe0] sm:$0xff]
    %v3587 = vld [vmem:[%s13 + $0xe8] sm:$0xff]
    %v3588 = vld [vmem:[%s13 + $0xf0] sm:$0xff]
    %v3589 = vld [vmem:[%s13 + $0xf8] sm:$0xff]
    %v3590 = vld [vmem:[%s13 + $0x100] sm:$0xff]
    %v3591 = vld [vmem:[%s13 + $0x108] sm:$0xff]
    %v3592 = vld [vmem:[%s13 + $0x110] sm:$0xff]
    %v3593 = vld [vmem:[%s13 + $0x118] sm:$0xff]
    %v3594 = vld [vmem:[%s13 + $0x120] sm:$0xff]
    %v3595 = vld [vmem:[%s13 + $0x128] sm:$0xff]
    %v3596 = vld [vmem:[%s13 + $0x130] sm:$0xff]
    %v3597 = vld [vmem:[%s13 + $0x138] sm:$0xff]
    %v3598 = vld [vmem:[%s13 + $0x140] sm:$0xff]
    %v3599 = vld [vmem:[%s13 + $0x148] sm:$0xff]
    %v3600 = vld [vmem:[%s13 + $0x150] sm:$0xff]
    %v3601 = vld [vmem:[%s13 + $0x158] sm:$0xff]
    %v3602 = vld [vmem:[%s13 + $0x160] sm:$0xff]
    %v3603 = vld [vmem:[%s13 + $0x168] sm:$0xff]
    %v3604 = vld [vmem:[%s13 + $0x170] sm:$0xff]
    %v3605 = vld [vmem:[%s13 + $0x178] sm:$0xff]
    %v3606 = vld [vmem:[%s13 + $0x180] sm:$0xff]
    %v3607 = vld [vmem:[%s13 + $0x188] sm:$0xff]
    %v3608 = vld [vmem:[%s13 + $0x190] sm:$0xff]
    %v3609 = vld [vmem:[%s13 + $0x198] sm:$0xff]
    %v3610 = vld [vmem:[%s13 + $0x1a0] sm:$0xff]
    %v3611 = vld [vmem:[%s13 + $0x1a8] sm:$0xff]
    %v3612 = vld [vmem:[%s13 + $0x1b0] sm:$0xff]
    %v3613 = vld [vmem:[%s13 + $0x1b8] sm:$0xff]
    %v3614 = vld [vmem:[%s13 + $0x1c0] sm:$0xff]
    %v3615 = vld [vmem:[%s13 + $0x1c8] sm:$0xff]
    %v3616 = vld [vmem:[%s13 + $0x1d0] sm:$0xff]
    %v3617 = vld [vmem:[%s13 + $0x1d8] sm:$0xff]
    %v3618 = vld [vmem:[%s13 + $0x1e0] sm:$0xff]
    %v3619 = vld [vmem:[%s13 + $0x1e8] sm:$0xff]
    %v3620 = vld [vmem:[%s13 + $0x1f0] sm:$0xff]
    %v3621 = vld [vmem:[%s13 + $0x1f8] sm:$0xff]
    %v3622 = vld [vmem:[%s14] sm:$0x3]
    %v3624 = vlaneseq
    %v3625 = vshrl.u32 %v3624, 7
    %v3626 = vsub.s32 0, %v3625
    %v3627 = vrot.slane %v3622, %v3626
    %v3628 = vlaneseq
    %v3629 = vshrl.u32 %v3628, 7
    %v3630 = vsub.s32 1, %v3629
    %v3631 = vrot.slane %v3622, %v3630
    %v3698 = vunpack.c.l.b16 %v3558
    %v3699 = vunpack.c.h.b16 %v3558
    %v3700 = vunpack.c.l.b16 %v3559
    %v3701 = vunpack.c.h.b16 %v3559
    %v3702 = vunpack.c.l.b16 %v3560
    %v3703 = vunpack.c.h.b16 %v3560
    %v3704 = vunpack.c.l.b16 %v3561
    %v3705 = vunpack.c.h.b16 %v3561
    %v3706 = vunpack.c.l.b16 %v3562
    %v3707 = vunpack.c.h.b16 %v3562
    %v3708 = vunpack.c.l.b16 %v3563
    %v3709 = vunpack.c.h.b16 %v3563
    %v3710 = vunpack.c.l.b16 %v3564
    %v3711 = vunpack.c.h.b16 %v3564
    %v3712 = vunpack.c.l.b16 %v3565
    %v3713 = vunpack.c.h.b16 %v3565
    %v3714 = vunpack.c.l.b16 %v3566
    %v3715 = vunpack.c.h.b16 %v3566
    %v3716 = vunpack.c.l.b16 %v3567
    %v3717 = vunpack.c.h.b16 %v3567
    %v3718 = vunpack.c.l.b16 %v3568
    %v3719 = vunpack.c.h.b16 %v3568
    %v3720 = vunpack.c.l.b16 %v3569
    %v3721 = vunpack.c.h.b16 %v3569
    %v3722 = vunpack.c.l.b16 %v3570
    %v3723 = vunpack.c.h.b16 %v3570
    %v3724 = vunpack.c.l.b16 %v3571
    %v3725 = vunpack.c.h.b16 %v3571
    %v3726 = vunpack.c.l.b16 %v3572
    %v3727 = vunpack.c.h.b16 %v3572
    %v3728 = vunpack.c.l.b16 %v3573
    %v3729 = vunpack.c.h.b16 %v3573
    %v3730 = vunpack.c.l.b16 %v3574
    %v3731 = vunpack.c.h.b16 %v3574
    %v3732 = vunpack.c.l.b16 %v3575
    %v3733 = vunpack.c.h.b16 %v3575
    %v3734 = vunpack.c.l.b16 %v3576
    %v3735 = vunpack.c.h.b16 %v3576
    %v3736 = vunpack.c.l.b16 %v3577
    %v3737 = vunpack.c.h.b16 %v3577
    %v3738 = vunpack.c.l.b16 %v3578
    %v3739 = vunpack.c.h.b16 %v3578
    %v3740 = vunpack.c.l.b16 %v3579
    %v3741 = vunpack.c.h.b16 %v3579
    %v3742 = vunpack.c.l.b16 %v3580
    %v3743 = vunpack.c.h.b16 %v3580
    %v3744 = vunpack.c.l.b16 %v3581
    %v3745 = vunpack.c.h.b16 %v3581
    %v3746 = vunpack.c.l.b16 %v3582
    %v3747 = vunpack.c.h.b16 %v3582
    %v3748 = vunpack.c.l.b16 %v3583
    %v3749 = vunpack.c.h.b16 %v3583
    %v3750 = vunpack.c.l.b16 %v3584
    %v3751 = vunpack.c.h.b16 %v3584
    %v3752 = vunpack.c.l.b16 %v3585
    %v3753 = vunpack.c.h.b16 %v3585
    %v3754 = vunpack.c.l.b16 %v3586
    %v3755 = vunpack.c.h.b16 %v3586
    %v3756 = vunpack.c.l.b16 %v3587
    %v3757 = vunpack.c.h.b16 %v3587
    %v3758 = vunpack.c.l.b16 %v3588
    %v3759 = vunpack.c.h.b16 %v3588
    %v3760 = vunpack.c.l.b16 %v3589
    %v3761 = vunpack.c.h.b16 %v3589
    %v3762 = vunpack.c.l.b16 %v3590
    %v3763 = vunpack.c.h.b16 %v3590
    %v3764 = vunpack.c.l.b16 %v3591
    %v3765 = vunpack.c.h.b16 %v3591
    %v3766 = vunpack.c.l.b16 %v3592
    %v3767 = vunpack.c.h.b16 %v3592
    %v3768 = vunpack.c.l.b16 %v3593
    %v3769 = vunpack.c.h.b16 %v3593
    %v3770 = vunpack.c.l.b16 %v3594
    %v3771 = vunpack.c.h.b16 %v3594
    %v3772 = vunpack.c.l.b16 %v3595
    %v3773 = vunpack.c.h.b16 %v3595
    %v3774 = vunpack.c.l.b16 %v3596
    %v3775 = vunpack.c.h.b16 %v3596
    %v3776 = vunpack.c.l.b16 %v3597
    %v3777 = vunpack.c.h.b16 %v3597
    %v3778 = vunpack.c.l.b16 %v3598
    %v3779 = vunpack.c.h.b16 %v3598
    %v3780 = vunpack.c.l.b16 %v3599
    %v3781 = vunpack.c.h.b16 %v3599
    %v3782 = vunpack.c.l.b16 %v3600
    %v3783 = vunpack.c.h.b16 %v3600
    %v3784 = vunpack.c.l.b16 %v3601
    %v3785 = vunpack.c.h.b16 %v3601
    %v3786 = vunpack.c.l.b16 %v3602
    %v3787 = vunpack.c.h.b16 %v3602
    %v3788 = vunpack.c.l.b16 %v3603
    %v3789 = vunpack.c.h.b16 %v3603
    %v3790 = vunpack.c.l.b16 %v3604
    %v3791 = vunpack.c.h.b16 %v3604
    %v3792 = vunpack.c.l.b16 %v3605
    %v3793 = vunpack.c.h.b16 %v3605
    %v3794 = vunpack.c.l.b16 %v3606
    %v3795 = vunpack.c.h.b16 %v3606
    %v3796 = vunpack.c.l.b16 %v3607
    %v3797 = vunpack.c.h.b16 %v3607
    %v3798 = vunpack.c.l.b16 %v3608
    %v3799 = vunpack.c.h.b16 %v3608
    %v3800 = vunpack.c.l.b16 %v3609
    %v3801 = vunpack.c.h.b16 %v3609
    %v3802 = vunpack.c.l.b16 %v3610
    %v3803 = vunpack.c.h.b16 %v3610
    %v3804 = vunpack.c.l.b16 %v3611
    %v3805 = vunpack.c.h.b16 %v3611
    %v3806 = vunpack.c.l.b16 %v3612
    %v3807 = vunpack.c.h.b16 %v3612
    %v3808 = vunpack.c.l.b16 %v3613
    %v3809 = vunpack.c.h.b16 %v3613
    %v3810 = vunpack.c.l.b16 %v3614
    %v3811 = vunpack.c.h.b16 %v3614
    %v3812 = vunpack.c.l.b16 %v3615
    %v3813 = vunpack.c.h.b16 %v3615
    %v3814 = vunpack.c.l.b16 %v3616
    %v3815 = vunpack.c.h.b16 %v3616
    %v3816 = vunpack.c.l.b16 %v3617
    %v3817 = vunpack.c.h.b16 %v3617
    %v3818 = vunpack.c.l.b16 %v3618
    %v3819 = vunpack.c.h.b16 %v3618
    %v3820 = vunpack.c.l.b16 %v3619
    %v3821 = vunpack.c.h.b16 %v3619
    %v3822 = vunpack.c.l.b16 %v3620
    %v3823 = vunpack.c.h.b16 %v3620
    %v3824 = vunpack.c.l.b16 %v3621
    %v3825 = vunpack.c.h.b16 %v3621
    %v3826 = vpack.c.b16 %v3700, %v3698
    %v3827 = vpack.c.b16 %v3701, %v3699
    %v3828 = vpack.c.b16 %v3704, %v3702
    %v3829 = vpack.c.b16 %v3705, %v3703
    %v3830 = vpack.c.b16 %v3708, %v3706
    %v3831 = vpack.c.b16 %v3709, %v3707
    %v3832 = vpack.c.b16 %v3712, %v3710
    %v3833 = vpack.c.b16 %v3713, %v3711
    %v3834 = vpack.c.b16 %v3716, %v3714
    %v3835 = vpack.c.b16 %v3717, %v3715
    %v3836 = vpack.c.b16 %v3720, %v3718
    %v3837 = vpack.c.b16 %v3721, %v3719
    %v3838 = vpack.c.b16 %v3724, %v3722
    %v3839 = vpack.c.b16 %v3725, %v3723
    %v3840 = vpack.c.b16 %v3728, %v3726
    %v3841 = vpack.c.b16 %v3729, %v3727
    %v3842 = vpack.c.b16 %v3732, %v3730
    %v3843 = vpack.c.b16 %v3733, %v3731
    %v3844 = vpack.c.b16 %v3736, %v3734
    %v3845 = vpack.c.b16 %v3737, %v3735
    %v3846 = vpack.c.b16 %v3740, %v3738
    %v3847 = vpack.c.b16 %v3741, %v3739
    %v3848 = vpack.c.b16 %v3744, %v3742
    %v3849 = vpack.c.b16 %v3745, %v3743
    %v3850 = vpack.c.b16 %v3748, %v3746
    %v3851 = vpack.c.b16 %v3749, %v3747
    %v3852 = vpack.c.b16 %v3752, %v3750
    %v3853 = vpack.c.b16 %v3753, %v3751
    %v3854 = vpack.c.b16 %v3756, %v3754
    %v3855 = vpack.c.b16 %v3757, %v3755
    %v3856 = vpack.c.b16 %v3760, %v3758
    %v3857 = vpack.c.b16 %v3761, %v3759
    %v3858 = vpack.c.b16 %v3764, %v3762
    %v3859 = vpack.c.b16 %v3765, %v3763
    %v3860 = vpack.c.b16 %v3768, %v3766
    %v3861 = vpack.c.b16 %v3769, %v3767
    %v3862 = vpack.c.b16 %v3772, %v3770
    %v3863 = vpack.c.b16 %v3773, %v3771
    %v3864 = vpack.c.b16 %v3776, %v3774
    %v3865 = vpack.c.b16 %v3777, %v3775
    %v3866 = vpack.c.b16 %v3780, %v3778
    %v3867 = vpack.c.b16 %v3781, %v3779
    %v3868 = vpack.c.b16 %v3784, %v3782
    %v3869 = vpack.c.b16 %v3785, %v3783
    %v3870 = vpack.c.b16 %v3788, %v3786
    %v3871 = vpack.c.b16 %v3789, %v3787
    %v3872 = vpack.c.b16 %v3792, %v3790
    %v3873 = vpack.c.b16 %v3793, %v3791
    %v3874 = vpack.c.b16 %v3796, %v3794
    %v3875 = vpack.c.b16 %v3797, %v3795
    %v3876 = vpack.c.b16 %v3800, %v3798
    %v3877 = vpack.c.b16 %v3801, %v3799
    %v3878 = vpack.c.b16 %v3804, %v3802
    %v3879 = vpack.c.b16 %v3805, %v3803
    %v3880 = vpack.c.b16 %v3808, %v3806
    %v3881 = vpack.c.b16 %v3809, %v3807
    %v3882 = vpack.c.b16 %v3812, %v3810
    %v3883 = vpack.c.b16 %v3813, %v3811
    %v3884 = vpack.c.b16 %v3816, %v3814
    %v3885 = vpack.c.b16 %v3817, %v3815
    %v3886 = vpack.c.b16 %v3820, %v3818
    %v3887 = vpack.c.b16 %v3821, %v3819
    %v3888 = vpack.c.b16 %v3824, %v3822
    %v3889 = vpack.c.b16 %v3825, %v3823
    %3954 = vmatprep.subr.bf16.mxu0 %v3827
    %3955 = vmatpush1.bf16.msra.mxu0 %v3826
    %3956 = vmatprep.subr.bf16.mxu0 %v3829
    %3957 = vmatpush1.bf16.msra.mxu0 %v3828
    %3958 = vmatprep.subr.bf16.mxu0 %v3831
    %3959 = vmatpush1.bf16.msra.mxu0 %v3830
    %3960 = vmatprep.subr.bf16.mxu0 %v3833
    %3961 = vmatpush1.bf16.msra.mxu0 %v3832
    %3962 = vmatprep.subr.bf16.mxu0 %v3835
    %3963 = vmatpush1.bf16.msra.mxu0 %v3834
    %3964 = vmatprep.subr.bf16.mxu0 %v3837
    %3965 = vmatpush1.bf16.msra.mxu0 %v3836
    %3966 = vmatprep.subr.bf16.mxu0 %v3839
    %3967 = vmatpush1.bf16.msra.mxu0 %v3838
    %3968 = vmatprep.subr.bf16.mxu0 %v3841
    %3969 = vmatpush1.bf16.msra.mxu0 %v3840
    %3970 = vmatprep.subr.bf16.mxu0 %v3843
    %3971 = vmatpush1.bf16.msra.mxu0 %v3842
    %3972 = vmatprep.subr.bf16.mxu0 %v3845
    %3973 = vmatpush1.bf16.msra.mxu0 %v3844
    %3974 = vmatprep.subr.bf16.mxu0 %v3847
    %3975 = vmatpush1.bf16.msra.mxu0 %v3846
    %3976 = vmatprep.subr.bf16.mxu0 %v3849
    %3977 = vmatpush1.bf16.msra.mxu0 %v3848
    %3978 = vmatprep.subr.bf16.mxu0 %v3851
    %3979 = vmatpush1.bf16.msra.mxu0 %v3850
    %3980 = vmatprep.subr.bf16.mxu0 %v3853
    %3981 = vmatpush1.bf16.msra.mxu0 %v3852
    %3982 = vmatprep.subr.bf16.mxu0 %v3855
    %3983 = vmatpush1.bf16.msra.mxu0 %v3854
    %3984 = vmatprep.subr.bf16.mxu0 %v3857
    %3985 = vmatpush1.bf16.msra.mxu0 %v3856
    %3986 = vmatprep.mubr.bf16.mxu0 %v3096
    %3987 = vmatmul.mubr.bf16.gmra.mrb[0].mxu0 %v3095
    %v3988 = vpop.f32.mrb[0].mxu0
    %v3989 = vadd.f32 %v3627, %v3988
    %v3990 = vpop.f32.mrb[0].mxu0
    %v3991 = vadd.f32 %v3631, %v3990
    %v3992 = vpop.f32.mrb[0].mxu0
    %v3993 = vpop.f32.mrb[0].mxu0
    %3994 = vdwg.mxu0
    %3995 = vmatprep.subr.bf16.mxu0 %v3859
    %3996 = vmatpush1.bf16.msra.mxu0 %v3858
    %3997 = vmatprep.subr.bf16.mxu0 %v3861
    %3998 = vmatpush1.bf16.msra.mxu0 %v3860
    %3999 = vmatprep.subr.bf16.mxu0 %v3863
    %4000 = vmatpush1.bf16.msra.mxu0 %v3862
    %4001 = vmatprep.subr.bf16.mxu0 %v3865
    %4002 = vmatpush1.bf16.msra.mxu0 %v3864
    %4003 = vmatprep.subr.bf16.mxu0 %v3867
    %4004 = vmatpush1.bf16.msra.mxu0 %v3866
    %4005 = vmatprep.subr.bf16.mxu0 %v3869
    %4006 = vmatpush1.bf16.msra.mxu0 %v3868
    %4007 = vmatprep.subr.bf16.mxu0 %v3871
    %4008 = vmatpush1.bf16.msra.mxu0 %v3870
    %4009 = vmatprep.subr.bf16.mxu0 %v3873
    %4010 = vmatpush1.bf16.msra.mxu0 %v3872
    %4011 = vmatprep.subr.bf16.mxu0 %v3875
    %4012 = vmatpush1.bf16.msra.mxu0 %v3874
    %4013 = vmatprep.subr.bf16.mxu0 %v3877
    %4014 = vmatpush1.bf16.msra.mxu0 %v3876
    %4015 = vmatprep.subr.bf16.mxu0 %v3879
    %4016 = vmatpush1.bf16.msra.mxu0 %v3878
    %4017 = vmatprep.subr.bf16.mxu0 %v3881
    %4018 = vmatpush1.bf16.msra.mxu0 %v3880
    %4019 = vmatprep.subr.bf16.mxu0 %v3883
    %4020 = vmatpush1.bf16.msra.mxu0 %v3882
    %4021 = vmatprep.subr.bf16.mxu0 %v3885
    %4022 = vmatpush1.bf16.msra.mxu0 %v3884
    %4023 = vmatprep.subr.bf16.mxu0 %v3887
    %4024 = vmatpush1.bf16.msra.mxu0 %v3886
    %4025 = vmatprep.subr.bf16.mxu0 %v3889
    %4026 = vmatpush1.bf16.msra.mxu0 %v3888
    %4027 = vmatprep.mubr.bf16.mxu0 %v3098
    %4028 = vmatmul.mubr.bf16.gmra.mrb[0].mxu0 %v3097
    %v4029 = vpop.f32.mrb[0].mxu0
    %v4030 = vadd.f32 %v3989, %v4029
    %v4031 = vpop.f32.mrb[0].mxu0
    %v4032 = vadd.f32 %v3991, %v4031
    %v4033 = vpop.f32.mrb[0].mxu0
    %v4034 = vpop.f32.mrb[0].mxu0
    %4035 = vdwg.mxu0
    %vm4036 = vcmp.gt.f32.partialorder %v4030, 0.0
    %vm4037 = vcmp.gt.f32.partialorder %v4032, 0.0
    %v4038 = vmin.f32 %v4030, 0.0
    %v4039 = vmin.f32 %v4032, 0.0
    %v4040 = vmul.f32 %v4038, 1.442695
    %v4041 = vpow.pop %v4040
    %v4042 = vmul.f32 %v4039, 1.442695
    %v4043 = vpow.pop %v4042
    %v4044 = vsub.f32 %v4041, 1.0
    %v4045 = vsub.f32 %v4043, 1.0
    %v4046 = vmul.f32 %v4044, 1.6732632
    %v4047 = vmul.f32 %v4045, 1.6732632
    %v4048 = vsel %vm4036, %v4030, %v4046
    %v4049 = vsel %vm4037, %v4032, %v4047
    %v4050 = vmul.f32 %v4048, 1.050701
    %v4051 = vmul.f32 %v4049, 1.050701
    %v4052 = vpack.c.bf16 %v4050, %v4050
    %v4053 = vpack.c.bf16 %v4051, %v4051
    %v4054 = vld [vmem:[%s15] sm:$0xf]
    %v4055 = vld [vmem:[%s15 + $0x4] sm:$0xf]
    %v4056 = vld [vmem:[%s15 + $0x8] sm:$0xf]
    %v4057 = vld [vmem:[%s15 + $0xc] sm:$0xf]
    %v4058 = vld [vmem:[%s15 + $0x10] sm:$0xf]
    %v4059 = vld [vmem:[%s15 + $0x14] sm:$0xf]
    %v4060 = vld [vmem:[%s15 + $0x18] sm:$0xf]
    %v4061 = vld [vmem:[%s15 + $0x1c] sm:$0xf]
    %v4062 = vld [vmem:[%s15 + $0x20] sm:$0xf]
    %v4063 = vld [vmem:[%s15 + $0x24] sm:$0xf]
    %v4064 = vld [vmem:[%s15 + $0x28] sm:$0xf]
    %v4065 = vld [vmem:[%s15 + $0x2c] sm:$0xf]
    %v4066 = vld [vmem:[%s15 + $0x30] sm:$0xf]
    %v4067 = vld [vmem:[%s15 + $0x34] sm:$0xf]
    %v4068 = vld [vmem:[%s15 + $0x38] sm:$0xf]
    %v4069 = vld [vmem:[%s15 + $0x3c] sm:$0xf]
    %v4070 = vld [vmem:[%s15 + $0x40] sm:$0xf]
    %v4071 = vld [vmem:[%s15 + $0x44] sm:$0xf]
    %v4072 = vld [vmem:[%s15 + $0x48] sm:$0xf]
    %v4073 = vld [vmem:[%s15 + $0x4c] sm:$0xf]
    %v4074 = vld [vmem:[%s15 + $0x50] sm:$0xf]
    %v4075 = vld [vmem:[%s15 + $0x54] sm:$0xf]
    %v4076 = vld [vmem:[%s15 + $0x58] sm:$0xf]
    %v4077 = vld [vmem:[%s15 + $0x5c] sm:$0xf]
    %v4078 = vld [vmem:[%s15 + $0x60] sm:$0xf]
    %v4079 = vld [vmem:[%s15 + $0x64] sm:$0xf]
    %v4080 = vld [vmem:[%s15 + $0x68] sm:$0xf]
    %v4081 = vld [vmem:[%s15 + $0x6c] sm:$0xf]
    %v4082 = vld [vmem:[%s15 + $0x70] sm:$0xf]
    %v4083 = vld [vmem:[%s15 + $0x74] sm:$0xf]
    %v4084 = vld [vmem:[%s15 + $0x78] sm:$0xf]
    %v4085 = vld [vmem:[%s15 + $0x7c] sm:$0xf]
    %v4086 = vld [vmem:[%s16] sm:$0x1]
    %v4088 = vlaneseq
    %v4089 = vshrl.u32 %v4088, 7
    %v4090 = vsub.s32 0, %v4089
    %v4091 = vrot.slane %v4086, %v4090
    %v4125 = vunpack.c.l.b16 %v4054
    %v4126 = vunpack.c.l.b16 %v4055
    %v4127 = vunpack.c.l.b16 %v4056
    %v4128 = vunpack.c.l.b16 %v4057
    %v4129 = vunpack.c.l.b16 %v4058
    %v4130 = vunpack.c.l.b16 %v4059
    %v4131 = vunpack.c.l.b16 %v4060
    %v4132 = vunpack.c.l.b16 %v4061
    %v4133 = vunpack.c.l.b16 %v4062
    %v4134 = vunpack.c.l.b16 %v4063
    %v4135 = vunpack.c.l.b16 %v4064
    %v4136 = vunpack.c.l.b16 %v4065
    %v4137 = vunpack.c.l.b16 %v4066
    %v4138 = vunpack.c.l.b16 %v4067
    %v4139 = vunpack.c.l.b16 %v4068
    %v4140 = vunpack.c.l.b16 %v4069
    %v4141 = vunpack.c.l.b16 %v4070
    %v4142 = vunpack.c.l.b16 %v4071
    %v4143 = vunpack.c.l.b16 %v4072
    %v4144 = vunpack.c.l.b16 %v4073
    %v4145 = vunpack.c.l.b16 %v4074
    %v4146 = vunpack.c.l.b16 %v4075
    %v4147 = vunpack.c.l.b16 %v4076
    %v4148 = vunpack.c.l.b16 %v4077
    %v4149 = vunpack.c.l.b16 %v4078
    %v4150 = vunpack.c.l.b16 %v4079
    %v4151 = vunpack.c.l.b16 %v4080
    %v4152 = vunpack.c.l.b16 %v4081
    %v4153 = vunpack.c.l.b16 %v4082
    %v4154 = vunpack.c.l.b16 %v4083
    %v4155 = vunpack.c.l.b16 %v4084
    %v4156 = vunpack.c.l.b16 %v4085
    %v4157 = vpack.c.b16 %v4126, %v4125
    %v4158 = vpack.c.b16 %v4128, %v4127
    %v4159 = vpack.c.b16 %v4130, %v4129
    %v4160 = vpack.c.b16 %v4132, %v4131
    %v4161 = vpack.c.b16 %v4134, %v4133
    %v4162 = vpack.c.b16 %v4136, %v4135
    %v4163 = vpack.c.b16 %v4138, %v4137
    %v4164 = vpack.c.b16 %v4140, %v4139
    %v4165 = vpack.c.b16 %v4142, %v4141
    %v4166 = vpack.c.b16 %v4144, %v4143
    %v4167 = vpack.c.b16 %v4146, %v4145
    %v4168 = vpack.c.b16 %v4148, %v4147
    %v4169 = vpack.c.b16 %v4150, %v4149
    %v4170 = vpack.c.b16 %v4152, %v4151
    %v4171 = vpack.c.b16 %v4154, %v4153
    %v4172 = vpack.c.b16 %v4156, %v4155
    %4189 = vmatprep.subr.bf16.mxu0 0
    %4190 = vmatpush1.bf16.msra.mxu0 %v4157
    %4191 = vmatprep.subr.bf16.mxu0 0
    %4192 = vmatpush1.bf16.msra.mxu0 %v4158
    %4193 = vmatprep.subr.bf16.mxu0 0
    %4194 = vmatpush1.bf16.msra.mxu0 %v4159
    %4195 = vmatprep.subr.bf16.mxu0 0
    %4196 = vmatpush1.bf16.msra.mxu0 %v4160
    %4197 = vmatprep.subr.bf16.mxu0 0
    %4198 = vmatpush1.bf16.msra.mxu0 %v4161
    %4199 = vmatprep.subr.bf16.mxu0 0
    %4200 = vmatpush1.bf16.msra.mxu0 %v4162
    %4201 = vmatprep.subr.bf16.mxu0 0
    %4202 = vmatpush1.bf16.msra.mxu0 %v4163
    %4203 = vmatprep.subr.bf16.mxu0 0
    %4204 = vmatpush1.bf16.msra.mxu0 %v4164
    %4205 = vmatprep.subr.bf16.mxu0 0
    %4206 = vmatpush1.bf16.msra.mxu0 %v4165
    %4207 = vmatprep.subr.bf16.mxu0 0
    %4208 = vmatpush1.bf16.msra.mxu0 %v4166
    %4209 = vmatprep.subr.bf16.mxu0 0
    %4210 = vmatpush1.bf16.msra.mxu0 %v4167
    %4211 = vmatprep.subr.bf16.mxu0 0
    %4212 = vmatpush1.bf16.msra.mxu0 %v4168
    %4213 = vmatprep.subr.bf16.mxu0 0
    %4214 = vmatpush1.bf16.msra.mxu0 %v4169
    %4215 = vmatprep.subr.bf16.mxu0 0
    %4216 = vmatpush1.bf16.msra.mxu0 %v4170
    %4217 = vmatprep.subr.bf16.mxu0 0
    %4218 = vmatpush1.bf16.msra.mxu0 %v4171
    %4219 = vmatprep.subr.bf16.mxu0 0
    %4220 = vmatpush1.bf16.msra.mxu0 %v4172
    %4221 = vmatprep.mubr.bf16.mxu0 %v4053
    %4222 = vmatmul.mubr.bf16.gmra.mrb[0].mxu0 %v4052
    %v4223 = vpop.f32.mrb[0].mxu0
    %v4224 = vadd.f32 %v4091, %v4223
    %v4225 = vpop.f32.mrb[0].mxu0
    %v4226 = vpop.f32.mrb[0].mxu0
    %v4227 = vpop.f32.mrb[0].mxu0
    %4228 = vdwg.mxu0
    %v4229 = vpack.c.bf16 %v4224, %v4224
    %v4230 = vld [vmem:[%s17] sm:$0xff]
    %v4231 = vld [vmem:[%s17 + $0x8] sm:$0xff]
    %v4232 = vld [vmem:[%s17 + $0x10] sm:$0xff]
    %v4233 = vld [vmem:[%s17 + $0x18] sm:$0xff]
    %v4238 = vunpack.c.l.b16 %v4230
    %v4239 = vunpack.c.h.b16 %v4230
    %v4240 = vunpack.c.l.b16 %v4231
    %v4241 = vunpack.c.h.b16 %v4231
    %v4242 = vunpack.c.l.b16 %v4232
    %v4243 = vunpack.c.h.b16 %v4232
    %v4244 = vunpack.c.l.b16 %v4233
    %v4245 = vunpack.c.h.b16 %v4233
    %v4246 = vpack.c.b16 %v4242, %v4238
    %v4247 = vpack.c.b16 %v4243, %v4239
    %v4248 = vpack.c.b16 %v4244, %v4240
    %v4249 = vpack.c.b16 %v4245, %v4241
    %vm4254 = vcmask 130048
    %v4256 = vsel %vm4254, %v4229, 0
    %4258 = vmatprep.subr.bf16.mxu0 %v4247
    %4259 = vmatpush1.bf16.msra.mxu0 %v4246
    %4260 = vmatprep.subr.bf16.mxu0 0
    %4261 = vmatpush1.bf16.msra.mxu0 0
    %4262 = vmatprep.subr.bf16.mxu0 0
    %4263 = vmatpush1.bf16.msra.mxu0 0
    %4264 = vmatprep.subr.bf16.mxu0 0
    %4265 = vmatpush1.bf16.msra.mxu0 0
    %4266 = vmatprep.subr.bf16.mxu0 0
    %4267 = vmatpush1.bf16.msra.mxu0 0
    %4268 = vmatprep.subr.bf16.mxu0 0
    %4269 = vmatpush1.bf16.msra.mxu0 0
    %4270 = vmatprep.subr.bf16.mxu0 0
    %4271 = vmatpush1.bf16.msra.mxu0 0
    %4272 = vmatprep.subr.bf16.mxu0 0
    %4273 = vmatpush1.bf16.msra.mxu0 0
    %4274 = vmatprep.subr.bf16.mxu0 0
    %4275 = vmatpush1.bf16.msra.mxu0 0
    %4276 = vmatprep.subr.bf16.mxu0 0
    %4277 = vmatpush1.bf16.msra.mxu0 0
    %4278 = vmatprep.subr.bf16.mxu0 0
    %4279 = vmatpush1.bf16.msra.mxu0 0
    %4280 = vmatprep.subr.bf16.mxu0 0
    %4281 = vmatpush1.bf16.msra.mxu0 0
    %4282 = vmatprep.subr.bf16.mxu0 0
    %4283 = vmatpush1.bf16.msra.mxu0 0
    %4284 = vmatprep.subr.bf16.mxu0 0
    %4285 = vmatpush1.bf16.msra.mxu0 0
    %4286 = vmatprep.subr.bf16.mxu0 0
    %4287 = vmatpush1.bf16.msra.mxu0 0
    %4288 = vmatprep.subr.bf16.mxu0 0
    %4289 = vmatpush1.bf16.msra.mxu0 0
    %4290 = vmatprep.mubr.bf16.mxu0 0
    %4291 = vmatmul.mubr.bf16.gmra.mrb[0].mxu0 %v4256
    %v4292 = vpop.f32.mrb[0].mxu0
    %v4293 = vadd.f32 0.0, %v4292
    %v4294 = vpop.f32.mrb[0].mxu0
    %v4295 = vadd.f32 0.0, %v4294
    %v4296 = vpop.f32.mrb[0].mxu0
    %v4297 = vpop.f32.mrb[0].mxu0
    %4298 = vdwg.mxu0
    %4299 = vmatprep.subr.bf16.mxu0 %v4249
    %4300 = vmatpush1.bf16.msra.mxu0 %v4248
    %4301 = vmatprep.subr.bf16.mxu0 0
    %4302 = vmatpush1.bf16.msra.mxu0 0
    %4303 = vmatprep.subr.bf16.mxu0 0
    %4304 = vmatpush1.bf16.msra.mxu0 0
    %4305 = vmatprep.subr.bf16.mxu0 0
    %4306 = vmatpush1.bf16.msra.mxu0 0
    %4307 = vmatprep.subr.bf16.mxu0 0
    %4308 = vmatpush1.bf16.msra.mxu0 0
    %4309 = vmatprep.subr.bf16.mxu0 0
    %4310 = vmatpush1.bf16.msra.mxu0 0
    %4311 = vmatprep.subr.bf16.mxu0 0
    %4312 = vmatpush1.bf16.msra.mxu0 0
    %4313 = vmatprep.subr.bf16.mxu0 0
    %4314 = vmatpush1.bf16.msra.mxu0 0
    %4315 = vmatprep.subr.bf16.mxu0 0
    %4316 = vmatpush1.bf16.msra.mxu0 0
    %4317 = vmatprep.subr.bf16.mxu0 0
    %4318 = vmatpush1.bf16.msra.mxu0 0
    %4319 = vmatprep.subr.bf16.mxu0 0
    %4320 = vmatpush1.bf16.msra.mxu0 0
    %4321 = vmatprep.subr.bf16.mxu0 0
    %4322 = vmatpush1.bf16.msra.mxu0 0
    %4323 = vmatprep.subr.bf16.mxu0 0
    %4324 = vmatpush1.bf16.msra.mxu0 0
    %4325 = vmatprep.subr.bf16.mxu0 0
    %4326 = vmatpush1.bf16.msra.mxu0 0
    %4327 = vmatprep.subr.bf16.mxu0 0
    %4328 = vmatpush1.bf16.msra.mxu0 0
    %4329 = vmatprep.subr.bf16.mxu0 0
    %4330 = vmatpush1.bf16.msra.mxu0 0
    %4331 = vmatprep.mubr.bf16.mxu0 0
    %4332 = vmatmul.mubr.bf16.gmra.mrb[0].mxu0 %v4256
    %v4333 = vpop.f32.mrb[0].mxu0
    %v4334 = vadd.f32 0.0, %v4333
    %v4335 = vpop.f32.mrb[0].mxu0
    %v4336 = vadd.f32 0.0, %v4335
    %v4337 = vpop.f32.mrb[0].mxu0
    %v4338 = vpop.f32.mrb[0].mxu0
    %4339 = vdwg.mxu0
    %v4340 = vadd.f32 %v3554, %v4293
    %v4341 = vadd.f32 %v3555, %v4295
    %v4342 = vadd.f32 %v3556, %v4334
    %v4343 = vadd.f32 %v3557, %v4336
    %v4344 = vld [vmem:[%s18] sm:$0xf]
    %v4345 = vld [vmem:[%s18 + $0x4] sm:$0xf]
    %v4346 = vld [vmem:[%s18 + $0x8] sm:$0xf]
    %v4347 = vld [vmem:[%s18 + $0xc] sm:$0xf]
    %v4348 = vld [vmem:[%s18 + $0x10] sm:$0xf]
    %v4349 = vld [vmem:[%s18 + $0x14] sm:$0xf]
    %v4350 = vld [vmem:[%s18 + $0x18] sm:$0xf]
    %v4351 = vld [vmem:[%s18 + $0x1c] sm:$0xf]
    %v4352 = vld [vmem:[%s18 + $0x20] sm:$0xf]
    %v4353 = vld [vmem:[%s18 + $0x24] sm:$0xf]
    %v4354 = vld [vmem:[%s18 + $0x28] sm:$0xf]
    %v4355 = vld [vmem:[%s18 + $0x2c] sm:$0xf]
    %v4356 = vld [vmem:[%s18 + $0x30] sm:$0xf]
    %v4357 = vld [vmem:[%s18 + $0x34] sm:$0xf]
    %v4358 = vld [vmem:[%s18 + $0x38] sm:$0xf]
    %v4359 = vld [vmem:[%s18 + $0x3c] sm:$0xf]
    %v4360 = vld [vmem:[%s18 + $0x40] sm:$0xf]
    %v4361 = vld [vmem:[%s18 + $0x44] sm:$0xf]
    %v4362 = vld [vmem:[%s18 + $0x48] sm:$0xf]
    %v4363 = vld [vmem:[%s18 + $0x4c] sm:$0xf]
    %v4364 = vld [vmem:[%s18 + $0x50] sm:$0xf]
    %v4365 = vld [vmem:[%s18 + $0x54] sm:$0xf]
    %v4366 = vld [vmem:[%s18 + $0x58] sm:$0xf]
    %v4367 = vld [vmem:[%s18 + $0x5c] sm:$0xf]
    %v4368 = vld [vmem:[%s18 + $0x60] sm:$0xf]
    %v4369 = vld [vmem:[%s18 + $0x64] sm:$0xf]
    %v4370 = vld [vmem:[%s18 + $0x68] sm:$0xf]
    %v4371 = vld [vmem:[%s18 + $0x6c] sm:$0xf]
    %v4372 = vld [vmem:[%s18 + $0x70] sm:$0xf]
    %v4373 = vld [vmem:[%s18 + $0x74] sm:$0xf]
    %v4374 = vld [vmem:[%s18 + $0x78] sm:$0xf]
    %v4375 = vld [vmem:[%s18 + $0x7c] sm:$0xf]
    %v4376 = vld [vmem:[%s19] sm:$0x1]
    %v4378 = vlaneseq
    %v4379 = vshrl.u32 %v4378, 7
    %v4380 = vsub.s32 0, %v4379
    %v4381 = vrot.slane %v4376, %v4380
    %v4415 = vunpack.c.l.b16 %v4344
    %v4416 = vunpack.c.l.b16 %v4345
    %v4417 = vunpack.c.l.b16 %v4346
    %v4418 = vunpack.c.l.b16 %v4347
    %v4419 = vunpack.c.l.b16 %v4348
    %v4420 = vunpack.c.l.b16 %v4349
    %v4421 = vunpack.c.l.b16 %v4350
    %v4422 = vunpack.c.l.b16 %v4351
    %v4423 = vunpack.c.l.b16 %v4352
    %v4424 = vunpack.c.l.b16 %v4353
    %v4425 = vunpack.c.l.b16 %v4354
    %v4426 = vunpack.c.l.b16 %v4355
    %v4427 = vunpack.c.l.b16 %v4356
    %v4428 = vunpack.c.l.b16 %v4357
    %v4429 = vunpack.c.l.b16 %v4358
    %v4430 = vunpack.c.l.b16 %v4359
    %v4431 = vunpack.c.l.b16 %v4360
    %v4432 = vunpack.c.l.b16 %v4361
    %v4433 = vunpack.c.l.b16 %v4362
    %v4434 = vunpack.c.l.b16 %v4363
    %v4435 = vunpack.c.l.b16 %v4364
    %v4436 = vunpack.c.l.b16 %v4365
    %v4437 = vunpack.c.l.b16 %v4366
    %v4438 = vunpack.c.l.b16 %v4367
    %v4439 = vunpack.c.l.b16 %v4368
    %v4440 = vunpack.c.l.b16 %v4369
    %v4441 = vunpack.c.l.b16 %v4370
    %v4442 = vunpack.c.l.b16 %v4371
    %v4443 = vunpack.c.l.b16 %v4372
    %v4444 = vunpack.c.l.b16 %v4373
    %v4445 = vunpack.c.l.b16 %v4374
    %v4446 = vunpack.c.l.b16 %v4375
    %v4447 = vpack.c.b16 %v4416, %v4415
    %v4448 = vpack.c.b16 %v4418, %v4417
    %v4449 = vpack.c.b16 %v4420, %v4419
    %v4450 = vpack.c.b16 %v4422, %v4421
    %v4451 = vpack.c.b16 %v4424, %v4423
    %v4452 = vpack.c.b16 %v4426, %v4425
    %v4453 = vpack.c.b16 %v4428, %v4427
    %v4454 = vpack.c.b16 %v4430, %v4429
    %v4455 = vpack.c.b16 %v4432, %v4431
    %v4456 = vpack.c.b16 %v4434, %v4433
    %v4457 = vpack.c.b16 %v4436, %v4435
    %v4458 = vpack.c.b16 %v4438, %v4437
    %v4459 = vpack.c.b16 %v4440, %v4439
    %v4460 = vpack.c.b16 %v4442, %v4441
    %v4461 = vpack.c.b16 %v4444, %v4443
    %v4462 = vpack.c.b16 %v4446, %v4445
    %4479 = vmatprep.subr.bf16.mxu0 0
    %4480 = vmatpush1.bf16.msra.mxu0 %v4447
    %4481 = vmatprep.subr.bf16.mxu0 0
    %4482 = vmatpush1.bf16.msra.mxu0 %v4448
    %4483 = vmatprep.subr.bf16.mxu0 0
    %4484 = vmatpush1.bf16.msra.mxu0 %v4449
    %4485 = vmatprep.subr.bf16.mxu0 0
    %4486 = vmatpush1.bf16.msra.mxu0 %v4450
    %4487 = vmatprep.subr.bf16.mxu0 0
    %4488 = vmatpush1.bf16.msra.mxu0 %v4451
    %4489 = vmatprep.subr.bf16.mxu0 0
    %4490 = vmatpush1.bf16.msra.mxu0 %v4452
    %4491 = vmatprep.subr.bf16.mxu0 0
    %4492 = vmatpush1.bf16.msra.mxu0 %v4453
    %4493 = vmatprep.subr.bf16.mxu0 0
    %4494 = vmatpush1.bf16.msra.mxu0 %v4454
    %4495 = vmatprep.subr.bf16.mxu0 0
    %4496 = vmatpush1.bf16.msra.mxu0 %v4455
    %4497 = vmatprep.subr.bf16.mxu0 0
    %4498 = vmatpush1.bf16.msra.mxu0 %v4456
    %4499 = vmatprep.subr.bf16.mxu0 0
    %4500 = vmatpush1.bf16.msra.mxu0 %v4457
    %4501 = vmatprep.subr.bf16.mxu0 0
    %4502 = vmatpush1.bf16.msra.mxu0 %v4458
    %4503 = vmatprep.subr.bf16.mxu0 0
    %4504 = vmatpush1.bf16.msra.mxu0 %v4459
    %4505 = vmatprep.subr.bf16.mxu0 0
    %4506 = vmatpush1.bf16.msra.mxu0 %v4460
    %4507 = vmatprep.subr.bf16.mxu0 0
    %4508 = vmatpush1.bf16.msra.mxu0 %v4461
    %4509 = vmatprep.subr.bf16.mxu0 0
    %4510 = vmatpush1.bf16.msra.mxu0 %v4462
    %4511 = vmatprep.mubr.bf16.mxu0 %v4053
    %4512 = vmatmul.mubr.bf16.gmra.mrb[0].mxu0 %v4052
    %v4513 = vpop.f32.mrb[0].mxu0
    %v4514 = vadd.f32 %v4381, %v4513
    %v4515 = vpop.f32.mrb[0].mxu0
    %v4516 = vpop.f32.mrb[0].mxu0
    %v4517 = vpop.f32.mrb[0].mxu0
    %4518 = vdwg.mxu0
    %vm4519 = vcmp.gt.f32.partialorder %v4514, 0.0
    %v4520 = vmin.f32 %v4514, 0.0
    %v4521 = vmul.f32 %v4520, 1.442695
    %v4522 = vpow.pop %v4521
    %v4523 = vsub.f32 %v4522, 1.0
    %v4524 = vmul.f32 %v4523, 1.6732632
    %v4525 = vsel %vm4519, %v4514, %v4524
    %v4526 = vmul.f32 %v4525, 1.050701
    %v4527 = vpack.c.bf16 %v4526, %v4526
    %v4528 = vld [vmem:[%s20] sm:$0xf]
    %v4529 = vld [vmem:[%s20 + $0x4] sm:$0xf]
    %v4530 = vld [vmem:[%s20 + $0x8] sm:$0xf]
    %v4531 = vld [vmem:[%s20 + $0xc] sm:$0xf]
    %v4532 = vld [vmem:[%s20 + $0x10] sm:$0xf]
    %v4533 = vld [vmem:[%s20 + $0x14] sm:$0xf]
    %v4534 = vld [vmem:[%s20 + $0x18] sm:$0xf]
    %v4535 = vld [vmem:[%s20 + $0x1c] sm:$0xf]
    %v4536 = vld [vmem:[%s20 + $0x20] sm:$0xf]
    %v4537 = vld [vmem:[%s20 + $0x24] sm:$0xf]
    %v4538 = vld [vmem:[%s20 + $0x28] sm:$0xf]
    %v4539 = vld [vmem:[%s20 + $0x2c] sm:$0xf]
    %v4540 = vld [vmem:[%s20 + $0x30] sm:$0xf]
    %v4541 = vld [vmem:[%s20 + $0x34] sm:$0xf]
    %v4542 = vld [vmem:[%s20 + $0x38] sm:$0xf]
    %v4543 = vld [vmem:[%s20 + $0x3c] sm:$0xf]
    %v4544 = vld [vmem:[%s21] sm:$0x1]
    %v4546 = vlaneseq
    %v4547 = vshrl.u32 %v4546, 7
    %v4548 = vsub.s32 0, %v4547
    %v4549 = vrot.slane %v4544, %v4548
    %v4567 = vunpack.c.l.b16 %v4528
    %v4568 = vunpack.c.l.b16 %v4529
    %v4569 = vunpack.c.l.b16 %v4530
    %v4570 = vunpack.c.l.b16 %v4531
    %v4571 = vunpack.c.l.b16 %v4532
    %v4572 = vunpack.c.l.b16 %v4533
    %v4573 = vunpack.c.l.b16 %v4534
    %v4574 = vunpack.c.l.b16 %v4535
    %v4575 = vunpack.c.l.b16 %v4536
    %v4576 = vunpack.c.l.b16 %v4537
    %v4577 = vunpack.c.l.b16 %v4538
    %v4578 = vunpack.c.l.b16 %v4539
    %v4579 = vunpack.c.l.b16 %v4540
    %v4580 = vunpack.c.l.b16 %v4541
    %v4581 = vunpack.c.l.b16 %v4542
    %v4582 = vunpack.c.l.b16 %v4543
    %v4583 = vpack.c.b16 %v4568, %v4567
    %v4584 = vpack.c.b16 %v4570, %v4569
    %v4585 = vpack.c.b16 %v4572, %v4571
    %v4586 = vpack.c.b16 %v4574, %v4573
    %v4587 = vpack.c.b16 %v4576, %v4575
    %v4588 = vpack.c.b16 %v4578, %v4577
    %v4589 = vpack.c.b16 %v4580, %v4579
    %v4590 = vpack.c.b16 %v4582, %v4581
    %4599 = vmatprep.subr.bf16.mxu0 0
    %4600 = vmatpush1.bf16.msra.mxu0 %v4583
    %4601 = vmatprep.subr.bf16.mxu0 0
    %4602 = vmatpush1.bf16.msra.mxu0 %v4584
    %4603 = vmatprep.subr.bf16.mxu0 0
    %4604 = vmatpush1.bf16.msra.mxu0 %v4585
    %4605 = vmatprep.subr.bf16.mxu0 0
    %4606 = vmatpush1.bf16.msra.mxu0 %v4586
    %4607 = vmatprep.subr.bf16.mxu0 0
    %4608 = vmatpush1.bf16.msra.mxu0 %v4587
    %4609 = vmatprep.subr.bf16.mxu0 0
    %4610 = vmatpush1.bf16.msra.mxu0 %v4588
    %4611 = vmatprep.subr.bf16.mxu0 0
    %4612 = vmatpush1.bf16.msra.mxu0 %v4589
    %4613 = vmatprep.subr.bf16.mxu0 0
    %4614 = vmatpush1.bf16.msra.mxu0 %v4590
    %4615 = vmatprep.subr.bf16.mxu0 0
    %4616 = vmatpush1.bf16.msra.mxu0 0
    %4617 = vmatprep.subr.bf16.mxu0 0
    %4618 = vmatpush1.bf16.msra.mxu0 0
    %4619 = vmatprep.subr.bf16.mxu0 0
    %4620 = vmatpush1.bf16.msra.mxu0 0
    %4621 = vmatprep.subr.bf16.mxu0 0
    %4622 = vmatpush1.bf16.msra.mxu0 0
    %4623 = vmatprep.subr.bf16.mxu0 0
    %4624 = vmatpush1.bf16.msra.mxu0 0
    %4625 = vmatprep.subr.bf16.mxu0 0
    %4626 = vmatpush1.bf16.msra.mxu0 0
    %4627 = vmatprep.subr.bf16.mxu0 0
    %4628 = vmatpush1.bf16.msra.mxu0 0
    %4629 = vmatprep.subr.bf16.mxu0 0
    %4630 = vmatpush1.bf16.msra.mxu0 0
    %4631 = vmatprep.mubr.bf16.mxu0 0
    %4632 = vmatmul.mubr.bf16.gmra.mrb[0].mxu0 %v4527
    %v4633 = vpop.f32.mrb[0].mxu0
    %v4634 = vadd.f32 %v4549, %v4633
    %v4635 = vpop.f32.mrb[0].mxu0
    %v4636 = vpop.f32.mrb[0].mxu0
    %v4637 = vpop.f32.mrb[0].mxu0
    %4638 = vdwg.mxu0
    %v4639 = vpack.c.bf16 %v4634, %v4634
    %v4640 = vld [vmem:[%s22] sm:$0xff]
    %v4641 = vld [vmem:[%s22 + $0x8] sm:$0xff]
    %v4642 = vld [vmem:[%s22 + $0x10] sm:$0xff]
    %v4643 = vld [vmem:[%s22 + $0x18] sm:$0xff]
    %v4644 = vld [vmem:[%s22 + $0x20] sm:$0xff]
    %v4645 = vld [vmem:[%s22 + $0x28] sm:$0xff]
    %v4646 = vld [vmem:[%s22 + $0x30] sm:$0xff]
    %v4647 = vld [vmem:[%s22 + $0x38] sm:$0xff]
    %v4656 = vunpack.c.l.b16 %v4640
    %v4657 = vunpack.c.h.b16 %v4640
    %v4658 = vunpack.c.l.b16 %v4641
    %v4659 = vunpack.c.h.b16 %v4641
    %v4660 = vunpack.c.l.b16 %v4642
    %v4661 = vunpack.c.h.b16 %v4642
    %v4662 = vunpack.c.l.b16 %v4643
    %v4663 = vunpack.c.h.b16 %v4643
    %v4664 = vunpack.c.l.b16 %v4644
    %v4665 = vunpack.c.h.b16 %v4644
    %v4666 = vunpack.c.l.b16 %v4645
    %v4667 = vunpack.c.h.b16 %v4645
    %v4668 = vunpack.c.l.b16 %v4646
    %v4669 = vunpack.c.h.b16 %v4646
    %v4670 = vunpack.c.l.b16 %v4647
    %v4671 = vunpack.c.h.b16 %v4647
    %v4672 = vpack.c.b16 %v4660, %v4656
    %v4673 = vpack.c.b16 %v4661, %v4657
    %v4674 = vpack.c.b16 %v4662, %v4658
    %v4675 = vpack.c.b16 %v4663, %v4659
    %v4676 = vpack.c.b16 %v4668, %v4664
    %v4677 = vpack.c.b16 %v4669, %v4665
    %v4678 = vpack.c.b16 %v4670, %v4666
    %v4679 = vpack.c.b16 %v4671, %v4667
    %vm4688 = vcmask 261120
    %v4690 = vsel %vm4688, %v4639, 0
    %4692 = vmatprep.subr.bf16.mxu0 %v4673
    %4693 = vmatpush1.bf16.msra.mxu0 %v4672
    %4694 = vmatprep.subr.bf16.mxu0 %v4677
    %4695 = vmatpush1.bf16.msra.mxu0 %v4676
    %4696 = vmatprep.subr.bf16.mxu0 0
    %4697 = vmatpush1.bf16.msra.mxu0 0
    %4698 = vmatprep.subr.bf16.mxu0 0
    %4699 = vmatpush1.bf16.msra.mxu0 0
    %4700 = vmatprep.subr.bf16.mxu0 0
    %4701 = vmatpush1.bf16.msra.mxu0 0
    %4702 = vmatprep.subr.bf16.mxu0 0
    %4703 = vmatpush1.bf16.msra.mxu0 0
    %4704 = vmatprep.subr.bf16.mxu0 0
    %4705 = vmatpush1.bf16.msra.mxu0 0
    %4706 = vmatprep.subr.bf16.mxu0 0
    %4707 = vmatpush1.bf16.msra.mxu0 0
    %4708 = vmatprep.subr.bf16.mxu0 0
    %4709 = vmatpush1.bf16.msra.mxu0 0
    %4710 = vmatprep.subr.bf16.mxu0 0
    %4711 = vmatpush1.bf16.msra.mxu0 0
    %4712 = vmatprep.subr.bf16.mxu0 0
    %4713 = vmatpush1.bf16.msra.mxu0 0
    %4714 = vmatprep.subr.bf16.mxu0 0
    %4715 = vmatpush1.bf16.msra.mxu0 0
    %4716 = vmatprep.subr.bf16.mxu0 0
    %4717 = vmatpush1.bf16.msra.mxu0 0
    %4718 = vmatprep.subr.bf16.mxu0 0
    %4719 = vmatpush1.bf16.msra.mxu0 0
    %4720 = vmatprep.subr.bf16.mxu0 0
    %4721 = vmatpush1.bf16.msra.mxu0 0
    %4722 = vmatprep.subr.bf16.mxu0 0
    %4723 = vmatpush1.bf16.msra.mxu0 0
    %4724 = vmatprep.mubr.bf16.mxu0 0
    %4725 = vmatmul.mubr.bf16.gmra.mrb[0].mxu0 %v4690
    %v4726 = vpop.f32.mrb[0].mxu0
    %v4727 = vadd.f32 0.0, %v4726
    %v4728 = vpop.f32.mrb[0].mxu0
    %v4729 = vadd.f32 0.0, %v4728
    %v4730 = vpop.f32.mrb[0].mxu0
    %v4731 = vpop.f32.mrb[0].mxu0
    %4732 = vdwg.mxu0
    %4733 = vmatprep.subr.bf16.mxu0 %v4675
    %4734 = vmatpush1.bf16.msra.mxu0 %v4674
    %4735 = vmatprep.subr.bf16.mxu0 %v4679
    %4736 = vmatpush1.bf16.msra.mxu0 %v4678
    %4737 = vmatprep.subr.bf16.mxu0 0
    %4738 = vmatpush1.bf16.msra.mxu0 0
    %4739 = vmatprep.subr.bf16.mxu0 0
    %4740 = vmatpush1.bf16.msra.mxu0 0
    %4741 = vmatprep.subr.bf16.mxu0 0
    %4742 = vmatpush1.bf16.msra.mxu0 0
    %4743 = vmatprep.subr.bf16.mxu0 0
    %4744 = vmatpush1.bf16.msra.mxu0 0
    %4745 = vmatprep.subr.bf16.mxu0 0
    %4746 = vmatpush1.bf16.msra.mxu0 0
    %4747 = vmatprep.subr.bf16.mxu0 0
    %4748 = vmatpush1.bf16.msra.mxu0 0
    %4749 = vmatprep.subr.bf16.mxu0 0
    %4750 = vmatpush1.bf16.msra.mxu0 0
    %4751 = vmatprep.subr.bf16.mxu0 0
    %4752 = vmatpush1.bf16.msra.mxu0 0
    %4753 = vmatprep.subr.bf16.mxu0 0
    %4754 = vmatpush1.bf16.msra.mxu0 0
    %4755 = vmatprep.subr.bf16.mxu0 0
    %4756 = vmatpush1.bf16.msra.mxu0 0
    %4757 = vmatprep.subr.bf16.mxu0 0
    %4758 = vmatpush1.bf16.msra.mxu0 0
    %4759 = vmatprep.subr.bf16.mxu0 0
    %4760 = vmatpush1.bf16.msra.mxu0 0
    %4761 = vmatprep.subr.bf16.mxu0 0
    %4762 = vmatpush1.bf16.msra.mxu0 0
    %4763 = vmatprep.subr.bf16.mxu0 0
    %4764 = vmatpush1.bf16.msra.mxu0 0
    %4765 = vmatprep.mubr.bf16.mxu0 0
    %4766 = vmatmul.mubr.bf16.gmra.mrb[0].mxu0 %v4690
    %v4767 = vpop.f32.mrb[0].mxu0
    %v4768 = vadd.f32 0.0, %v4767
    %v4769 = vpop.f32.mrb[0].mxu0
    %v4770 = vadd.f32 0.0, %v4769
    %v4771 = vpop.f32.mrb[0].mxu0
    %v4772 = vpop.f32.mrb[0].mxu0
    %4773 = vdwg.mxu0
    %v4774 = vadd.f32 %v4340, %v4727
    %v4775 = vadd.f32 %v4341, %v4729
    %v4776 = vadd.f32 %v4342, %v4768
    %v4777 = vadd.f32 %v4343, %v4770
    %v4778 = vld [vmem:[%s23] sm:$0xf]
    %v4779 = vld [vmem:[%s23 + $0x4] sm:$0xf]
    %v4780 = vld [vmem:[%s23 + $0x8] sm:$0xf]
    %v4781 = vld [vmem:[%s23 + $0xc] sm:$0xf]
    %v4782 = vld [vmem:[%s23 + $0x10] sm:$0xf]
    %v4783 = vld [vmem:[%s23 + $0x14] sm:$0xf]
    %v4784 = vld [vmem:[%s23 + $0x18] sm:$0xf]
    %v4785 = vld [vmem:[%s23 + $0x1c] sm:$0xf]
    %v4786 = vld [vmem:[%s23 + $0x20] sm:$0xf]
    %v4787 = vld [vmem:[%s23 + $0x24] sm:$0xf]
    %v4788 = vld [vmem:[%s23 + $0x28] sm:$0xf]
    %v4789 = vld [vmem:[%s23 + $0x2c] sm:$0xf]
    %v4790 = vld [vmem:[%s23 + $0x30] sm:$0xf]
    %v4791 = vld [vmem:[%s23 + $0x34] sm:$0xf]
    %v4792 = vld [vmem:[%s23 + $0x38] sm:$0xf]
    %v4793 = vld [vmem:[%s23 + $0x3c] sm:$0xf]
    %v4794 = vld [vmem:[%s24] sm:$0x1]
    %v4796 = vlaneseq
    %v4797 = vshrl.u32 %v4796, 7
    %v4798 = vsub.s32 0, %v4797
    %v4799 = vrot.slane %v4794, %v4798
    %v4817 = vunpack.c.l.b16 %v4778
    %v4818 = vunpack.c.l.b16 %v4779
    %v4819 = vunpack.c.l.b16 %v4780
    %v4820 = vunpack.c.l.b16 %v4781
    %v4821 = vunpack.c.l.b16 %v4782
    %v4822 = vunpack.c.l.b16 %v4783
    %v4823 = vunpack.c.l.b16 %v4784
    %v4824 = vunpack.c.l.b16 %v4785
    %v4825 = vunpack.c.l.b16 %v4786
    %v4826 = vunpack.c.l.b16 %v4787
    %v4827 = vunpack.c.l.b16 %v4788
    %v4828 = vunpack.c.l.b16 %v4789
    %v4829 = vunpack.c.l.b16 %v4790
    %v4830 = vunpack.c.l.b16 %v4791
    %v4831 = vunpack.c.l.b16 %v4792
    %v4832 = vunpack.c.l.b16 %v4793
    %v4833 = vpack.c.b16 %v4818, %v4817
    %v4834 = vpack.c.b16 %v4820, %v4819
    %v4835 = vpack.c.b16 %v4822, %v4821
    %v4836 = vpack.c.b16 %v4824, %v4823
    %v4837 = vpack.c.b16 %v4826, %v4825
    %v4838 = vpack.c.b16 %v4828, %v4827
    %v4839 = vpack.c.b16 %v4830, %v4829
    %v4840 = vpack.c.b16 %v4832, %v4831
    %4849 = vmatprep.subr.bf16.mxu0 0
    %4850 = vmatpush1.bf16.msra.mxu0 %v4833
    %4851 = vmatprep.subr.bf16.mxu0 0
    %4852 = vmatpush1.bf16.msra.mxu0 %v4834
    %4853 = vmatprep.subr.bf16.mxu0 0
    %4854 = vmatpush1.bf16.msra.mxu0 %v4835
    %4855 = vmatprep.subr.bf16.mxu0 0
    %4856 = vmatpush1.bf16.msra.mxu0 %v4836
    %4857 = vmatprep.subr.bf16.mxu0 0
    %4858 = vmatpush1.bf16.msra.mxu0 %v4837
    %4859 = vmatprep.subr.bf16.mxu0 0
    %4860 = vmatpush1.bf16.msra.mxu0 %v4838
    %4861 = vmatprep.subr.bf16.mxu0 0
    %4862 = vmatpush1.bf16.msra.mxu0 %v4839
    %4863 = vmatprep.subr.bf16.mxu0 0
    %4864 = vmatpush1.bf16.msra.mxu0 %v4840
    %4865 = vmatprep.subr.bf16.mxu0 0
    %4866 = vmatpush1.bf16.msra.mxu0 0
    %4867 = vmatprep.subr.bf16.mxu0 0
    %4868 = vmatpush1.bf16.msra.mxu0 0
    %4869 = vmatprep.subr.bf16.mxu0 0
    %4870 = vmatpush1.bf16.msra.mxu0 0
    %4871 = vmatprep.subr.bf16.mxu0 0
    %4872 = vmatpush1.bf16.msra.mxu0 0
    %4873 = vmatprep.subr.bf16.mxu0 0
    %4874 = vmatpush1.bf16.msra.mxu0 0
    %4875 = vmatprep.subr.bf16.mxu0 0
    %4876 = vmatpush1.bf16.msra.mxu0 0
    %4877 = vmatprep.subr.bf16.mxu0 0
    %4878 = vmatpush1.bf16.msra.mxu0 0
    %4879 = vmatprep.subr.bf16.mxu0 0
    %4880 = vmatpush1.bf16.msra.mxu0 0
    %4881 = vmatprep.mubr.bf16.mxu0 0
    %4882 = vmatmul.mubr.bf16.gmra.mrb[0].mxu0 %v4527
    %v4883 = vpop.f32.mrb[0].mxu0
    %v4884 = vadd.f32 %v4799, %v4883
    %v4885 = vpop.f32.mrb[0].mxu0
    %v4886 = vpop.f32.mrb[0].mxu0
    %v4887 = vpop.f32.mrb[0].mxu0
    %4888 = vdwg.mxu0
    %vm4889 = vcmp.gt.f32.partialorder %v4884, 0.0
    %v4890 = vmin.f32 %v4884, 0.0
    %v4891 = vmul.f32 %v4890, 1.442695
    %v4892 = vpow.pop %v4891
    %v4893 = vsub.f32 %v4892, 1.0
    %v4894 = vmul.f32 %v4893, 1.6732632
    %v4895 = vsel %vm4889, %v4884, %v4894
    %v4896 = vmul.f32 %v4895, 1.050701
    %v4897 = vpack.c.bf16 %v4896, %v4896
    %v4898 = vld [vmem:[%s25] sm:$0xf]
    %v4899 = vld [vmem:[%s25 + $0x4] sm:$0xf]
    %v4900 = vld [vmem:[%s25 + $0x8] sm:$0xf]
    %v4901 = vld [vmem:[%s25 + $0xc] sm:$0xf]
    %v4902 = vld [vmem:[%s25 + $0x10] sm:$0xf]
    %v4903 = vld [vmem:[%s25 + $0x14] sm:$0xf]
    %v4904 = vld [vmem:[%s25 + $0x18] sm:$0xf]
    %v4905 = vld [vmem:[%s25 + $0x1c] sm:$0xf]
    %v4906 = vld [vmem:[%s25 + $0x20] sm:$0xf]
    %v4907 = vld [vmem:[%s25 + $0x24] sm:$0xf]
    %v4908 = vld [vmem:[%s25 + $0x28] sm:$0xf]
    %v4909 = vld [vmem:[%s25 + $0x2c] sm:$0xf]
    %v4910 = vld [vmem:[%s25 + $0x30] sm:$0xf]
    %v4911 = vld [vmem:[%s25 + $0x34] sm:$0xf]
    %v4912 = vld [vmem:[%s25 + $0x38] sm:$0xf]
    %v4913 = vld [vmem:[%s25 + $0x3c] sm:$0xf]
    %v4914 = vld [vmem:[%s26] sm:$0x1]
    %v4916 = vlaneseq
    %v4917 = vshrl.u32 %v4916, 7
    %v4918 = vsub.s32 0, %v4917
    %v4919 = vrot.slane %v4914, %v4918
    %v4937 = vunpack.c.l.b16 %v4898
    %v4938 = vunpack.c.l.b16 %v4899
    %v4939 = vunpack.c.l.b16 %v4900
    %v4940 = vunpack.c.l.b16 %v4901
    %v4941 = vunpack.c.l.b16 %v4902
    %v4942 = vunpack.c.l.b16 %v4903
    %v4943 = vunpack.c.l.b16 %v4904
    %v4944 = vunpack.c.l.b16 %v4905
    %v4945 = vunpack.c.l.b16 %v4906
    %v4946 = vunpack.c.l.b16 %v4907
    %v4947 = vunpack.c.l.b16 %v4908
    %v4948 = vunpack.c.l.b16 %v4909
    %v4949 = vunpack.c.l.b16 %v4910
    %v4950 = vunpack.c.l.b16 %v4911
    %v4951 = vunpack.c.l.b16 %v4912
    %v4952 = vunpack.c.l.b16 %v4913
    %v4953 = vpack.c.b16 %v4938, %v4937
    %v4954 = vpack.c.b16 %v4940, %v4939
    %v4955 = vpack.c.b16 %v4942, %v4941
    %v4956 = vpack.c.b16 %v4944, %v4943
    %v4957 = vpack.c.b16 %v4946, %v4945
    %v4958 = vpack.c.b16 %v4948, %v4947
    %v4959 = vpack.c.b16 %v4950, %v4949
    %v4960 = vpack.c.b16 %v4952, %v4951
    %4969 = vmatprep.subr.bf16.mxu0 0
    %4970 = vmatpush1.bf16.msra.mxu0 %v4953
    %4971 = vmatprep.subr.bf16.mxu0 0
    %4972 = vmatpush1.bf16.msra.mxu0 %v4954
    %4973 = vmatprep.subr.bf16.mxu0 0
    %4974 = vmatpush1.bf16.msra.mxu0 %v4955
    %4975 = vmatprep.subr.bf16.mxu0 0
    %4976 = vmatpush1.bf16.msra.mxu0 %v4956
    %4977 = vmatprep.subr.bf16.mxu0 0
    %4978 = vmatpush1.bf16.msra.mxu0 %v4957
    %4979 = vmatprep.subr.bf16.mxu0 0
    %4980 = vmatpush1.bf16.msra.mxu0 %v4958
    %4981 = vmatprep.subr.bf16.mxu0 0
    %4982 = vmatpush1.bf16.msra.mxu0 %v4959
    %4983 = vmatprep.subr.bf16.mxu0 0
    %4984 = vmatpush1.bf16.msra.mxu0 %v4960
    %4985 = vmatprep.subr.bf16.mxu0 0
    %4986 = vmatpush1.bf16.msra.mxu0 0
    %4987 = vmatprep.subr.bf16.mxu0 0
    %4988 = vmatpush1.bf16.msra.mxu0 0
    %4989 = vmatprep.subr.bf16.mxu0 0
    %4990 = vmatpush1.bf16.msra.mxu0 0
    %4991 = vmatprep.subr.bf16.mxu0 0
    %4992 = vmatpush1.bf16.msra.mxu0 0
    %4993 = vmatprep.subr.bf16.mxu0 0
    %4994 = vmatpush1.bf16.msra.mxu0 0
    %4995 = vmatprep.subr.bf16.mxu0 0
    %4996 = vmatpush1.bf16.msra.mxu0 0
    %4997 = vmatprep.subr.bf16.mxu0 0
    %4998 = vmatpush1.bf16.msra.mxu0 0
    %4999 = vmatprep.subr.bf16.mxu0 0
    %5000 = vmatpush1.bf16.msra.mxu0 0
    %5001 = vmatprep.mubr.bf16.mxu0 0
    %5002 = vmatmul.mubr.bf16.gmra.mrb[0].mxu0 %v4897
    %v5003 = vpop.f32.mrb[0].mxu0
    %v5004 = vadd.f32 %v4919, %v5003
    %v5005 = vpop.f32.mrb[0].mxu0
    %v5006 = vpop.f32.mrb[0].mxu0
    %v5007 = vpop.f32.mrb[0].mxu0
    %5008 = vdwg.mxu0
    %v5009 = vpack.c.bf16 %v5004, %v5004
    %v5010 = vld [vmem:[%s27] sm:$0xff]
    %v5011 = vld [vmem:[%s27 + $0x8] sm:$0xff]
    %v5012 = vld [vmem:[%s27 + $0x10] sm:$0xff]
    %v5013 = vld [vmem:[%s27 + $0x18] sm:$0xff]
    %v5014 = vld [vmem:[%s27 + $0x20] sm:$0xff]
    %v5015 = vld [vmem:[%s27 + $0x28] sm:$0xff]
    %v5016 = vld [vmem:[%s27 + $0x30] sm:$0xff]
    %v5017 = vld [vmem:[%s27 + $0x38] sm:$0xff]
    %v5018 = vld [vmem:[%s27 + $0x40] sm:$0xff]
    %v5019 = vld [vmem:[%s27 + $0x48] sm:$0xff]
    %v5020 = vld [vmem:[%s27 + $0x50] sm:$0xff]
    %v5021 = vld [vmem:[%s27 + $0x58] sm:$0xff]
    %v5022 = vld [vmem:[%s27 + $0x60] sm:$0xff]
    %v5023 = vld [vmem:[%s27 + $0x68] sm:$0xff]
    %v5024 = vld [vmem:[%s27 + $0x70] sm:$0xff]
    %v5025 = vld [vmem:[%s27 + $0x78] sm:$0xff]
    %v5042 = vunpack.c.l.b16 %v5010
    %v5043 = vunpack.c.h.b16 %v5010
    %v5044 = vunpack.c.l.b16 %v5011
    %v5045 = vunpack.c.h.b16 %v5011
    %v5046 = vunpack.c.l.b16 %v5012
    %v5047 = vunpack.c.h.b16 %v5012
    %v5048 = vunpack.c.l.b16 %v5013
    %v5049 = vunpack.c.h.b16 %v5013
    %v5050 = vunpack.c.l.b16 %v5014
    %v5051 = vunpack.c.h.b16 %v5014
    %v5052 = vunpack.c.l.b16 %v5015
    %v5053 = vunpack.c.h.b16 %v5015
    %v5054 = vunpack.c.l.b16 %v5016
    %v5055 = vunpack.c.h.b16 %v5016
    %v5056 = vunpack.c.l.b16 %v5017
    %v5057 = vunpack.c.h.b16 %v5017
    %v5058 = vunpack.c.l.b16 %v5018
    %v5059 = vunpack.c.h.b16 %v5018
    %v5060 = vunpack.c.l.b16 %v5019
    %v5061 = vunpack.c.h.b16 %v5019
    %v5062 = vunpack.c.l.b16 %v5020
    %v5063 = vunpack.c.h.b16 %v5020
    %v5064 = vunpack.c.l.b16 %v5021
    %v5065 = vunpack.c.h.b16 %v5021
    %v5066 = vunpack.c.l.b16 %v5022
    %v5067 = vunpack.c.h.b16 %v5022
    %v5068 = vunpack.c.l.b16 %v5023
    %v5069 = vunpack.c.h.b16 %v5023
    %v5070 = vunpack.c.l.b16 %v5024
    %v5071 = vunpack.c.h.b16 %v5024
    %v5072 = vunpack.c.l.b16 %v5025
    %v5073 = vunpack.c.h.b16 %v5025
    %v5074 = vpack.c.b16 %v5046, %v5042
    %v5075 = vpack.c.b16 %v5047, %v5043
    %v5076 = vpack.c.b16 %v5048, %v5044
    %v5077 = vpack.c.b16 %v5049, %v5045
    %v5078 = vpack.c.b16 %v5054, %v5050
    %v5079 = vpack.c.b16 %v5055, %v5051
    %v5080 = vpack.c.b16 %v5056, %v5052
    %v5081 = vpack.c.b16 %v5057, %v5053
    %v5082 = vpack.c.b16 %v5062, %v5058
    %v5083 = vpack.c.b16 %v5063, %v5059
    %v5084 = vpack.c.b16 %v5064, %v5060
    %v5085 = vpack.c.b16 %v5065, %v5061
    %v5086 = vpack.c.b16 %v5070, %v5066
    %v5087 = vpack.c.b16 %v5071, %v5067
    %v5088 = vpack.c.b16 %v5072, %v5068
    %v5089 = vpack.c.b16 %v5073, %v5069
    %vm5106 = vcmask 523264
    %v5108 = vsel %vm5106, %v5009, 0
    %5110 = vmatprep.subr.bf16.mxu0 %v5075
    %5111 = vmatpush1.bf16.msra.mxu0 %v5074
    %5112 = vmatprep.subr.bf16.mxu0 %v5079
    %5113 = vmatpush1.bf16.msra.mxu0 %v5078
    %5114 = vmatprep.subr.bf16.mxu0 %v5083
    %5115 = vmatpush1.bf16.msra.mxu0 %v5082
    %5116 = vmatprep.subr.bf16.mxu0 %v5087
    %5117 = vmatpush1.bf16.msra.mxu0 %v5086
    %5118 = vmatprep.subr.bf16.mxu0 0
    %5119 = vmatpush1.bf16.msra.mxu0 0
    %5120 = vmatprep.subr.bf16.mxu0 0
    %5121 = vmatpush1.bf16.msra.mxu0 0
    %5122 = vmatprep.subr.bf16.mxu0 0
    %5123 = vmatpush1.bf16.msra.mxu0 0
    %5124 = vmatprep.subr.bf16.mxu0 0
    %5125 = vmatpush1.bf16.msra.mxu0 0
    %5126 = vmatprep.subr.bf16.mxu0 0
    %5127 = vmatpush1.bf16.msra.mxu0 0
    %5128 = vmatprep.subr.bf16.mxu0 0
    %5129 = vmatpush1.bf16.msra.mxu0 0
    %5130 = vmatprep.subr.bf16.mxu0 0
    %5131 = vmatpush1.bf16.msra.mxu0 0
    %5132 = vmatprep.subr.bf16.mxu0 0
    %5133 = vmatpush1.bf16.msra.mxu0 0
    %5134 = vmatprep.subr.bf16.mxu0 0
    %5135 = vmatpush1.bf16.msra.mxu0 0
    %5136 = vmatprep.subr.bf16.mxu0 0
    %5137 = vmatpush1.bf16.msra.mxu0 0
    %5138 = vmatprep.subr.bf16.mxu0 0
    %5139 = vmatpush1.bf16.msra.mxu0 0
    %5140 = vmatprep.subr.bf16.mxu0 0
    %5141 = vmatpush1.bf16.msra.mxu0 0
    %5142 = vmatprep.mubr.bf16.mxu0 0
    %5143 = vmatmul.mubr.bf16.gmra.mrb[0].mxu0 %v5108
    %v5144 = vpop.f32.mrb[0].mxu0
    %v5145 = vadd.f32 0.0, %v5144
    %v5146 = vpop.f32.mrb[0].mxu0
    %v5147 = vadd.f32 0.0, %v5146
    %v5148 = vpop.f32.mrb[0].mxu0
    %v5149 = vpop.f32.mrb[0].mxu0
    %5150 = vdwg.mxu0
    %5151 = vmatprep.subr.bf16.mxu0 %v5077
    %5152 = vmatpush1.bf16.msra.mxu0 %v5076
    %5153 = vmatprep.subr.bf16.mxu0 %v5081
    %5154 = vmatpush1.bf16.msra.mxu0 %v5080
    %5155 = vmatprep.subr.bf16.mxu0 %v5085
    %5156 = vmatpush1.bf16.msra.mxu0 %v5084
    %5157 = vmatprep.subr.bf16.mxu0 %v5089
    %5158 = vmatpush1.bf16.msra.mxu0 %v5088
    %5159 = vmatprep.subr.bf16.mxu0 0
    %5160 = vmatpush1.bf16.msra.mxu0 0
    %5161 = vmatprep.subr.bf16.mxu0 0
    %5162 = vmatpush1.bf16.msra.mxu0 0
    %5163 = vmatprep.subr.bf16.mxu0 0
    %5164 = vmatpush1.bf16.msra.mxu0 0
    %5165 = vmatprep.subr.bf16.mxu0 0
    %5166 = vmatpush1.bf16.msra.mxu0 0
    %5167 = vmatprep.subr.bf16.mxu0 0
    %5168 = vmatpush1.bf16.msra.mxu0 0
    %5169 = vmatprep.subr.bf16.mxu0 0
    %5170 = vmatpush1.bf16.msra.mxu0 0
    %5171 = vmatprep.subr.bf16.mxu0 0
    %5172 = vmatpush1.bf16.msra.mxu0 0
    %5173 = vmatprep.subr.bf16.mxu0 0
    %5174 = vmatpush1.bf16.msra.mxu0 0
    %5175 = vmatprep.subr.bf16.mxu0 0
    %5176 = vmatpush1.bf16.msra.mxu0 0
    %5177 = vmatprep.subr.bf16.mxu0 0
    %5178 = vmatpush1.bf16.msra.mxu0 0
    %5179 = vmatprep.subr.bf16.mxu0 0
    %5180 = vmatpush1.bf16.msra.mxu0 0
    %5181 = vmatprep.subr.bf16.mxu0 0
    %5182 = vmatpush1.bf16.msra.mxu0 0
    %5183 = vmatprep.mubr.bf16.mxu0 0
    %5184 = vmatmul.mubr.bf16.gmra.mrb[0].mxu0 %v5108
    %v5185 = vpop.f32.mrb[0].mxu0
    %v5186 = vadd.f32 0.0, %v5185
    %v5187 = vpop.f32.mrb[0].mxu0
    %v5188 = vadd.f32 0.0, %v5187
    %v5189 = vpop.f32.mrb[0].mxu0
    %v5190 = vpop.f32.mrb[0].mxu0
    %5191 = vdwg.mxu0
    %v5192 = vadd.f32 %v4774, %v5145
    %v5193 = vadd.f32 %v4775, %v5147
    %v5194 = vadd.f32 %v4776, %v5186
    %v5195 = vadd.f32 %v4777, %v5188
    %5197 = vset.pattern.permute.xlu0 0
    %5198 = vperm.xlu0 %5197, %v118
    %v5199 = vpop.permute.xlu0 %5198
    %v5201 = vmul.f32 %v5199, %v5192
    %5202 = vset.pattern.permute.xlu0 1
    %5203 = vperm.xlu0 %5202, %v118
    %v5204 = vpop.permute.xlu0 %5203
    %v5206 = vmul.f32 %v5204, %v5193
    %v5207 = vadd.f32 %v5201, %v5206
    %5208 = vset.pattern.permute.xlu0 2
    %5209 = vperm.xlu0 %5208, %v118
    %v5210 = vpop.permute.xlu0 %5209
    %v5212 = vmul.f32 %v5210, %v5194
    %v5213 = vadd.f32 %v5207, %v5212
    %5214 = vset.pattern.permute.xlu0 3
    %5215 = vperm.xlu0 %5214, %v118
    %v5216 = vpop.permute.xlu0 %5215
    %v5218 = vmul.f32 %v5216, %v5195
    %v5219 = vadd.f32 %v5213, %v5218
    %5220 = vst [vmem:[#allocation7] sm:$0x3] %v5219
    // Predicated region
    $region122: #{tpu_custom_call.1} parent=1 // pred_check
      _
    $region123: #{tpu_custom_call.1} parent=1 // pred_check_branch
      %5222 = sbr.rel (0) target = $region125
    $region124: #{tpu_custom_call.1} parent=1 // pred_region
      %s5224 = ssub.s32 32, 32
      %5225 = vsyncadd [#allocation4], %s5224
      %s5227 = sshll.u32 [#allocation7], 4
      %s5228 = int_to_ptr.vmem [resolvable:$true] %s5227
      %5230 = dma.vmem_to_hbm [thread:$0]  %s5228, 32, %s28, [#allocation4]
    $region125: #{tpu_custom_call.1} parent=1 // pred_fallthru
      _
    // Predicated region
    $region126: #{tpu_custom_call.1} parent=1 // pred_check
      _
    $region127: #{tpu_custom_call.1} parent=1 // pred_check_branch
      %5232 = sbr.rel (0) target = $region129
    $region128: #{tpu_custom_call.1} parent=1 // pred_region
      %5233 = dma.done [#allocation4], 32
    $region129: #{tpu_custom_call.1} parent=1 // pred_fallthru
      _
    %5234 = vsyncpa [#allocation3], 1
    %5235 = vsyncpa [#allocation4], 1
    %5236 = vsyncpa [#allocation5], 1

</llo_original>
